<compile_context>
chip_gen: v7x
topology: tpu7x:2x2x1
jax: 0.10.0
libtpu: 0.0.40
codegen_flags: <defaults>
</compile_context>

<pallas_src>
import functools
import math

import jax
import jax.numpy as jnp
from jax.experimental import pallas as pl
from jax.experimental.pallas import tpu as pltpu

COMPUTE_DTYPE = jnp.bfloat16           # storage / MXU dtype for activations + weights
VMEM_LIMIT_BYTES = 32 * 1024 * 1024    # explicit scoped-VMEM cap; safe on v5e/v6e/v7x

# Tile targets: multiples of (8, 128, 128) so they are MXU/vreg aligned on every
# generation; small enough that double-buffered tiles stay far below 32 MiB (and
# therefore also fit v7x's 64 MiB physical VMEM).
_TM, _TN, _TK = 256, 256, 512


def _pick_tile(dim, target, align):
    """Largest tile <= target that divides dim and is align-aligned; else the full dim."""
    if dim <= target:
        return dim
    if dim % align == 0:
        t = (target // align) * align
        while t >= align:
            if dim % t == 0:
                return t
            t -= align
    return dim


# ----------------------------- fused dense kernel ---------------------------- #

def _dense_kernel(*refs, ln, act, res):
    # refs: x, w, b, [gamma, beta], [residual], out, acc_scratch
    x_ref, w_ref, b_ref = refs[0], refs[1], refs[2]
    i = 3
    if ln:
        g_ref, be_ref = refs[i], refs[i + 1]
        i += 2
    if res:
        r_ref = refs[i]
        i += 1
    o_ref, acc_ref = refs[i], refs[i + 1]

    k = pl.program_id(2)

    @pl.when(k == 0)
    def _():
        acc_ref[...] = jnp.zeros_like(acc_ref)

    x = x_ref[...]
    if ln:  # fused pre-LayerNorm (tk == K for these calls), stats in f32
        xf = x.astype(jnp.float32)
        mu = jnp.mean(xf, axis=-1, keepdims=True)
        xc = xf - mu
        var = jnp.mean(xc * xc, axis=-1, keepdims=True)
        x = (xc * jax.lax.rsqrt(var + 1e-5) * g_ref[...] + be_ref[...]).astype(x_ref.dtype)

    acc_ref[...] += jnp.dot(x, w_ref[...], preferred_element_type=jnp.float32)

    @pl.when(k == pl.num_programs(2) - 1)
    def _():
        out = acc_ref[...] + b_ref[...]                      # bias only in the epilogue
        if act == "gelu_new":                                # GPT2 tanh-approx GELU, f32
            c = 0.7978845608028654                           # sqrt(2/pi)
            out = 0.5 * out * (1.0 + jnp.tanh(c * (out + 0.044715 * out * out * out)))
        if res:
            out = out + r_ref[...].astype(jnp.float32)       # fused residual add
        o_ref[...] = out.astype(o_ref.dtype)


def dense(x, w, b, *, ln=None, activation=None, residual=None, out_dtype=None):
    """out = [residual +] act( [LN(x)] @ w + b );  x:(M,K), w:(K,N), b:(N,)."""
    M, K = x.shape
    N = w.shape[1]
    out_dtype = out_dtype if out_dtype is not None else x.dtype

    tm = _pick_tile(M, _TM, 8)
    tn = _pick_tile(N, _TN, 128)
    tk = K if ln is not None else _pick_tile(K, _TK, 128)    # LN needs the whole row
    grid = (M // tm, N // tn, K // tk)

    in_specs = [
        pl.BlockSpec((tm, tk), lambda i, j, k: (i, k)),
        pl.BlockSpec((tk, tn), lambda i, j, k: (k, j)),
        pl.BlockSpec((1, tn), lambda i, j, k: (0, j)),        # bias, constant over k
    ]
    args = [x, w, b.reshape(1, N).astype(jnp.float32)]
    if ln is not None:
        gamma, beta = ln
        in_specs += [pl.BlockSpec((1, tk), lambda i, j, k: (0, k)),
                     pl.BlockSpec((1, tk), lambda i, j, k: (0, k))]
        args += [gamma.reshape(1, K).astype(jnp.float32),
                 beta.reshape(1, K).astype(jnp.float32)]
    if residual is not None:
        in_specs.append(pl.BlockSpec((tm, tn), lambda i, j, k: (i, j)))
        args.append(residual)

    kern = functools.partial(_dense_kernel, ln=ln is not None, act=activation,
                             res=residual is not None)
    return pl.pallas_call(
        kern,
        grid=grid,
        in_specs=in_specs,
        out_specs=pl.BlockSpec((tm, tn), lambda i, j, k: (i, j)),
        out_shape=jax.ShapeDtypeStruct((M, N), out_dtype),
        scratch_shapes=[pltpu.VMEM((tm, tn), jnp.float32)],
        compiler_params=pltpu.CompilerParams(
            dimension_semantics=("parallel", "parallel", "arbitrary"),
            vmem_limit_bytes=VMEM_LIMIT_BYTES,
        ),
    )(*args)


# ------------------------------ attention kernel ----------------------------- #

def _attn_kernel(qkv_ref, o_ref, *, n_head, scale):
    # One batch row: qkv_ref block is (1, T, 3E) with q|k|v packed along the lane axis.
    qkv = qkv_ref[0]                              # (T, 3E)
    t = qkv.shape[0]
    e = qkv.shape[1] // 3
    dh = e // n_head

    row = jax.lax.broadcasted_iota(jnp.int32, (t, t), 0)
    col = jax.lax.broadcasted_iota(jnp.int32, (t, t), 1)
    causal = col <= row

    # TODO(synk): flash-style kv-tiled online softmax for long sequences; the dense
    # (T,T) score matrix is fine at T = 2*n_positions scales used by this model.
    outs = []
    for h in range(n_head):
        qh = qkv[:, h * dh:(h + 1) * dh] * scale              # scale folded into q
        kh = qkv[:, e + h * dh:e + (h + 1) * dh]
        vh = qkv[:, 2 * e + h * dh:2 * e + (h + 1) * dh]
        s = jnp.dot(qh, kh.T, preferred_element_type=jnp.float32)   # (T, T) f32
        s = jnp.where(causal, s, -1e30)
        m = jnp.max(s, axis=-1, keepdims=True)
        p = jnp.exp(s - m)
        denom = jnp.sum(p, axis=-1, keepdims=True)
        p = p * pl.reciprocal(denom, approx=True)             # EUP, not VPU divide
        outs.append(jnp.dot(p.astype(vh.dtype), vh, preferred_element_type=jnp.float32))
    # single lane-dense (T, E) store, already in (B, T, E) layout -> no HBM transpose
    o_ref[0] = jnp.concatenate(outs, axis=-1).astype(o_ref.dtype)


def causal_attention(qkv, n_head):
    """qkv: (B, T, 3E) packed q|k|v -> (B, T, E) causal multi-head attention."""
    B, T, threeE = qkv.shape
    E = threeE // 3
    scale = 1.0 / math.sqrt(E // n_head)
    return pl.pallas_call(
        functools.partial(_attn_kernel, n_head=n_head, scale=scale),
        grid=(B,),
        in_specs=[pl.BlockSpec((1, T, threeE), lambda b: (b, 0, 0))],
        out_specs=pl.BlockSpec((1, T, E), lambda b: (b, 0, 0)),
        out_shape=jax.ShapeDtypeStruct((B, T, E), qkv.dtype),
        compiler_params=pltpu.CompilerParams(
            dimension_semantics=("parallel",),
            vmem_limit_bytes=VMEM_LIMIT_BYTES,
        ),
    )(qkv)


# ------------------------------- model (glue) -------------------------------- #

def combine(xs, ys):
    """Interleave xs (B,P,D) and ys (B,P) into (B, 2P, D)."""
    B, P, D = xs.shape
    ys_wide = jnp.concatenate(
        [ys[..., None], jnp.zeros((B, P, D - 1), dtype=xs.dtype)], axis=2)
    return jnp.stack([xs, ys_wide], axis=2).reshape(B, 2 * P, D)


def init_params(key, n_dims, n_positions, n_embd, n_layer, n_head):
    """Deterministic synthetic GPT2-style init (normal std=0.02, zero biases)."""
    std = 0.02
    keys = iter(jax.random.split(key, 4 + 8 * n_layer))

    def w(shape):  # matmul weights stored in bf16 (converted once, per perf review)
        return (std * jax.random.normal(next(keys), shape)).astype(COMPUTE_DTYPE)

    def zeros(shape):
        return jnp.zeros(shape, jnp.float32)

    params = {
        "read_in_w": w((n_dims, n_embd)),
        "read_in_b": zeros((n_embd,)),
        "wpe": w((2 * n_positions, n_embd)),
        "read_out_w": w((n_embd, 1)),
        "read_out_b": zeros((1,)),
        "ln_f_g": jnp.ones((n_embd,), jnp.float32),
        "ln_f_b": zeros((n_embd,)),
        "blocks": [],
    }
    for _ in range(n_layer):
        params["blocks"].append({
            "ln1_g": jnp.ones((n_embd,), jnp.float32),
            "ln1_b": zeros((n_embd,)),
            "c_attn_w": w((n_embd, 3 * n_embd)),
            "c_attn_b": zeros((3 * n_embd,)),
            "attn_proj_w": w((n_embd, n_embd)),
            "attn_proj_b": zeros((n_embd,)),
            "ln2_g": jnp.ones((n_embd,), jnp.float32),
            "ln2_b": zeros((n_embd,)),
            "c_fc_w": w((n_embd, 4 * n_embd)),
            "c_fc_b": zeros((4 * n_embd,)),
            "mlp_proj_w": w((4 * n_embd, n_embd)),
            "mlp_proj_b": zeros((n_embd,)),
        })
    return params


def transformer_forward(params, xs, ys, n_head):
    """Equivalent of TransformerModel.forward with inds=None."""
    zs = combine(xs, ys).astype(COMPUTE_DTYPE)               # (B, 2P, D)
    B, T, D = zs.shape
    E = params["read_in_w"].shape[1]

    # read_in, with the GPT2 positional-embedding add fused into the epilogue
    wpe = jnp.broadcast_to(params["wpe"][:T][None], (B, T, E)).reshape(B * T, E)
    h = dense(zs.reshape(B * T, D), params["read_in_w"], params["read_in_b"],
              residual=wpe)                                  # (B*T, E)

    for blk in params["blocks"]:
        # --- attention sub-block (pre-LN), 3 pallas_calls total ---
        qkv = dense(h, blk["c_attn_w"], blk["c_attn_b"],
                    ln=(blk["ln1_g"], blk["ln1_b"]))          # LN1 + qkv projection
        a = causal_attention(qkv.reshape(B, T, 3 * E), n_head).reshape(B * T, E)
        h = dense(a, blk["attn_proj_w"], blk["attn_proj_b"], residual=h)

        # --- MLP sub-block (pre-LN), 2 pallas_calls total ---
        m = dense(h, blk["c_fc_w"], blk["c_fc_b"],
                  ln=(blk["ln2_g"], blk["ln2_b"]), activation="gelu_new")
        h = dense(m, blk["mlp_proj_w"], blk["mlp_proj_b"], residual=h)

    # final LayerNorm + read_out fused, f32 prediction
    pred = dense(h, params["read_out_w"], params["read_out_b"],
                 ln=(params["ln_f_g"], params["ln_f_b"]),
                 out_dtype=jnp.float32).reshape(B, T)

    # prediction[:, ::2, 0][:, inds] with inds = arange(P)
    return pred[:, ::2]


# ----------------------------------- main ------------------------------------ #

if __name__ == "__main__":
    # Small, module-consistent shapes.
    B = 2           # batch
    P = 8           # n_positions; sequence fed to the GPT2 backbone is 2*P = 16
    n_dims = 4
    n_embd = 32
    n_layer = 2
    n_head = 4

    key = jax.random.PRNGKey(0)
    k_x, k_y, k_p = jax.random.split(key, 3)
    xs = jax.random.normal(k_x, (B, P, n_dims), dtype=jnp.float32)
    ys = jax.random.normal(k_y, (B, P), dtype=jnp.float32)

    params = init_params(k_p, n_dims, P, n_embd, n_layer, n_head)

    fwd = jax.jit(functools.partial(transformer_forward, n_head=n_head))
    out = fwd(params, xs, ys)                                # (B, P)
    out = jax.block_until_ready(out)

    assert out.shape == (B, P) and out.dtype == jnp.float32
    print("KERNEL_OK")
</pallas_src>

<mosaic_0001>
module attributes {stable_mosaic.version = 11 : i64} {
  func.func @_dense_kernel(%arg0: i32, %arg1: i32, %arg2: i32, %arg3: memref<32x32xbf16, #tpu.memory_space<vmem>>, %arg4: memref<32x32xbf16, #tpu.memory_space<vmem>>, %arg5: memref<1x32xf32, #tpu.memory_space<vmem>>, %arg6: memref<32x32xbf16, #tpu.memory_space<vmem>>, %arg7: memref<32x32xbf16, #tpu.memory_space<vmem>>, %arg8: memref<32x32xf32, #tpu.memory_space<vmem>>) attributes {dimension_semantics = [#tpu.dimension_semantics<parallel>, #tpu.dimension_semantics<parallel>, #tpu.dimension_semantics<arbitrary>], iteration_bounds = array<i64: 1, 1, 1>, scalar_prefetch = 0 : i64, scratch_operands = 1 : i64, tpu.core_type = #tpu.core_type<tc>, window_params = [{transform_indices = @transform_0, window_bounds = array<i64: 32, 32>}, {transform_indices = @transform_1, window_bounds = array<i64: 32, 32>}, {transform_indices = @transform_2, window_bounds = array<i64: 1, 32>}, {transform_indices = @transform_3, window_bounds = array<i64: 32, 32>}, {transform_indices = @transform_4, window_bounds = array<i64: 32, 32>}]} {
    %c0_i32 = arith.constant 0 : i32
    %0 = arith.cmpi eq, %arg2, %c0_i32 : i32
    %1 = arith.extui %0 : i1 to i32
    %c0_i32_0 = arith.constant 0 : i32
    %2 = arith.cmpi ne, %1, %c0_i32_0 : i32
    scf.if %2 {
      %cst_10 = arith.constant 0.000000e+00 : f32
      %12 = vector.broadcast %cst_10 : f32 to vector<32x32xf32>
      %c0_11 = arith.constant 0 : index
      %c0_12 = arith.constant 0 : index
      %13 = vector.load %arg8[%c0_11, %c0_12] : memref<32x32xf32, #tpu.memory_space<vmem>>, vector<32x32xf32>
      tpu.vector_store %arg8[%c0_11, %c0_12], %12 {strides = array<i32>} : memref<32x32xf32, #tpu.memory_space<vmem>>, vector<32x32xf32>,
    } else {
    }
    %c0 = arith.constant 0 : index
    %c0_1 = arith.constant 0 : index
    %3 = vector.load %arg3[%c0, %c0_1] : memref<32x32xbf16, #tpu.memory_space<vmem>>, vector<32x32xbf16>
    %c0_2 = arith.constant 0 : index
    %c0_3 = arith.constant 0 : index
    %4 = vector.load %arg8[%c0_2, %c0_3] : memref<32x32xf32, #tpu.memory_space<vmem>>, vector<32x32xf32>
    %c0_4 = arith.constant 0 : index
    %c0_5 = arith.constant 0 : index
    %5 = vector.load %arg4[%c0_4, %c0_5] : memref<32x32xbf16, #tpu.memory_space<vmem>>, vector<32x32xbf16>
    %cst = arith.constant dense<0.000000e+00> : vector<32x32xf32>
    %6 = tpu.matmul %3, %5, %cst {dimension_numbers = #tpu.dot_dimension_numbers<[1], [0], [0], [1], [0, 0, 1, 1], [], []>} : vector<32x32xbf16>, vector<32x32xbf16>, vector<32x32xf32> -> vector<32x32xf32>
    %7 = arith.addf %4, %6 : vector<32x32xf32>
    %c0_6 = arith.constant 0 : index
    %c0_7 = arith.constant 0 : index
    %8 = vector.load %arg8[%c0_6, %c0_7] : memref<32x32xf32, #tpu.memory_space<vmem>>, vector<32x32xf32>
    tpu.vector_store %arg8[%c0_6, %c0_7], %7 {strides = array<i32>} : memref<32x32xf32, #tpu.memory_space<vmem>>, vector<32x32xf32>,
    %c0_i32_8 = arith.constant 0 : i32
    %9 = arith.cmpi eq, %arg2, %c0_i32_8 : i32
    %10 = arith.extui %9 : i1 to i32
    %c0_i32_9 = arith.constant 0 : i32
    %11 = arith.cmpi ne, %10, %c0_i32_9 : i32
    scf.if %11 {
      %c0_10 = arith.constant 0 : index
      %c0_11 = arith.constant 0 : index
      %12 = vector.load %arg8[%c0_10, %c0_11] : memref<32x32xf32, #tpu.memory_space<vmem>>, vector<32x32xf32>
      %c0_12 = arith.constant 0 : index
      %c0_13 = arith.constant 0 : index
      %13 = vector.load %arg5[%c0_12, %c0_13] : memref<1x32xf32, #tpu.memory_space<vmem>>, vector<1x32xf32>
      %14 = vector.broadcast %13 : vector<1x32xf32> to vector<32x32xf32>
      %15 = arith.addf %12, %14 : vector<32x32xf32>
      %c0_14 = arith.constant 0 : index
      %c0_15 = arith.constant 0 : index
      %16 = vector.load %arg6[%c0_14, %c0_15] : memref<32x32xbf16, #tpu.memory_space<vmem>>, vector<32x32xbf16>
      %17 = arith.extf %16 : vector<32x32xbf16> to vector<32x32xf32>
      %18 = arith.addf %15, %17 : vector<32x32xf32>
      %19 = arith.truncf %18 : vector<32x32xf32> to vector<32x32xbf16>
      %c0_16 = arith.constant 0 : index
      %c0_17 = arith.constant 0 : index
      %20 = vector.load %arg7[%c0_16, %c0_17] : memref<32x32xbf16, #tpu.memory_space<vmem>>, vector<32x32xbf16>
      tpu.vector_store %arg7[%c0_16, %c0_17], %19 {strides = array<i32>} : memref<32x32xbf16, #tpu.memory_space<vmem>>, vector<32x32xbf16>,
    } else {
    }
    return
  }
  func.func @transform_0(%arg0: i32, %arg1: i32, %arg2: i32) -> (i32, i32) {
    %c0_i32 = arith.constant 0 : i32
    return %arg0, %arg2 : i32, i32
  }
  func.func @transform_1(%arg0: i32, %arg1: i32, %arg2: i32) -> (i32, i32) {
    %c0_i32 = arith.constant 0 : i32
    return %arg2, %arg1 : i32, i32
  }
  func.func @transform_2(%arg0: i32, %arg1: i32, %arg2: i32) -> (i32, i32) {
    %c0_i32 = arith.constant 0 : i32
    %c0_i32_0 = arith.constant 0 : i32
    return %c0_i32, %arg1 : i32, i32
  }
  func.func @transform_3(%arg0: i32, %arg1: i32, %arg2: i32) -> (i32, i32) {
    %c0_i32 = arith.constant 0 : i32
    return %arg0, %arg1 : i32, i32
  }
  func.func @transform_4(%arg0: i32, %arg1: i32, %arg2: i32) -> (i32, i32) {
    %c0_i32 = arith.constant 0 : i32
    return %arg0, %arg1 : i32, i32
  }
}

module attributes {stable_mosaic.version = 11 : i64} {
  func.func @_dense_kernel(%arg0: i32, %arg1: i32, %arg2: i32, %arg3: memref<32x32xbf16, #tpu.memory_space<vmem>>, %arg4: memref<32x96xbf16, #tpu.memory_space<vmem>>, %arg5: memref<1x96xf32, #tpu.memory_space<vmem>>, %arg6: memref<1x32xf32, #tpu.memory_space<vmem>>, %arg7: memref<1x32xf32, #tpu.memory_space<vmem>>, %arg8: memref<32x96xbf16, #tpu.memory_space<vmem>>, %arg9: memref<32x96xf32, #tpu.memory_space<vmem>>) attributes {dimension_semantics = [#tpu.dimension_semantics<parallel>, #tpu.dimension_semantics<parallel>, #tpu.dimension_semantics<arbitrary>], iteration_bounds = array<i64: 1, 1, 1>, scalar_prefetch = 0 : i64, scratch_operands = 1 : i64, tpu.core_type = #tpu.core_type<tc>, window_params = [{transform_indices = @transform_0, window_bounds = array<i64: 32, 32>}, {transform_indices = @transform_1, window_bounds = array<i64: 32, 96>}, {transform_indices = @transform_2, window_bounds = array<i64: 1, 96>}, {transform_indices = @transform_3, window_bounds = array<i64: 1, 32>}, {transform_indices = @transform_4, window_bounds = array<i64: 1, 32>}, {transform_indices = @transform_5, window_bounds = array<i64: 32, 96>}]} {
    %c0_i32 = arith.constant 0 : i32
    %0 = arith.cmpi eq, %arg2, %c0_i32 : i32
    %1 = arith.extui %0 : i1 to i32
    %c0_i32_0 = arith.constant 0 : i32
    %2 = arith.cmpi ne, %1, %c0_i32_0 : i32
    scf.if %2 {
      %cst_19 = arith.constant 0.000000e+00 : f32
      %36 = vector.broadcast %cst_19 : f32 to vector<32x96xf32>
      %c0_20 = arith.constant 0 : index
      %c0_21 = arith.constant 0 : index
      %37 = vector.load %arg9[%c0_20, %c0_21] : memref<32x96xf32, #tpu.memory_space<vmem>>, vector<32x96xf32>
      tpu.vector_store %arg9[%c0_20, %c0_21], %36 {strides = array<i32>} : memref<32x96xf32, #tpu.memory_space<vmem>>, vector<32x96xf32>,
    } else {
    }
    %c0 = arith.constant 0 : index
    %c0_1 = arith.constant 0 : index
    %3 = vector.load %arg3[%c0, %c0_1] : memref<32x32xbf16, #tpu.memory_space<vmem>>, vector<32x32xbf16>
    %4 = arith.extf %3 : vector<32x32xbf16> to vector<32x32xf32>
    %cst = arith.constant dense<0.000000e+00> : vector<32xf32>
    %5 = vector.multi_reduction <add>, %4, %cst [1] : vector<32x32xf32> to vector<32xf32>
    %6 = vector.shape_cast %5 : vector<32xf32> to vector<32x1xf32>
    %cst_2 = arith.constant 3.200000e+01 : f32
    %7 = vector.broadcast %cst_2 : f32 to vector<32x1xf32>
    %8 = arith.divf %6, %7 : vector<32x1xf32>
    %9 = vector.broadcast %8 : vector<32x1xf32> to vector<32x32xf32>
    %10 = arith.subf %4, %9 : vector<32x32xf32>
    %11 = arith.mulf %10, %10 : vector<32x32xf32>
    %cst_3 = arith.constant dense<0.000000e+00> : vector<32xf32>
    %12 = vector.multi_reduction <add>, %11, %cst_3 [1] : vector<32x32xf32> to vector<32xf32>
    %13 = vector.shape_cast %12 : vector<32xf32> to vector<32x1xf32>
    %cst_4 = arith.constant 3.200000e+01 : f32
    %14 = vector.broadcast %cst_4 : f32 to vector<32x1xf32>
    %15 = arith.divf %13, %14 : vector<32x1xf32>
    %cst_5 = arith.constant 9.99999974E-6 : f32
    %16 = vector.broadcast %cst_5 : f32 to vector<32x1xf32>
    %17 = arith.addf %15, %16 : vector<32x1xf32>
    %18 = math.rsqrt %17 : vector<32x1xf32>
    %19 = vector.broadcast %18 : vector<32x1xf32> to vector<32x32xf32>
    %20 = arith.mulf %10, %19 : vector<32x32xf32>
    %c0_6 = arith.constant 0 : index
    %c0_7 = arith.constant 0 : index
    %21 = vector.load %arg6[%c0_6, %c0_7] : memref<1x32xf32, #tpu.memory_space<vmem>>, vector<1x32xf32>
    %22 = vector.broadcast %21 : vector<1x32xf32> to vector<32x32xf32>
    %23 = arith.mulf %20, %22 : vector<32x32xf32>
    %c0_8 = arith.constant 0 : index
    %c0_9 = arith.constant 0 : index
    %24 = vector.load %arg7[%c0_8, %c0_9] : memref<1x32xf32, #tpu.memory_space<vmem>>, vector<1x32xf32>
    %25 = vector.broadcast %24 : vector<1x32xf32> to vector<32x32xf32>
    %26 = arith.addf %23, %25 : vector<32x32xf32>
    %27 = arith.truncf %26 : vector<32x32xf32> to vector<32x32xbf16>
    %c0_10 = arith.constant 0 : index
    %c0_11 = arith.constant 0 : index
    %28 = vector.load %arg9[%c0_10, %c0_11] : memref<32x96xf32, #tpu.memory_space<vmem>>, vector<32x96xf32>
    %c0_12 = arith.constant 0 : index
    %c0_13 = arith.constant 0 : index
    %29 = vector.load %arg4[%c0_12, %c0_13] : memref<32x96xbf16, #tpu.memory_space<vmem>>, vector<32x96xbf16>
    %cst_14 = arith.constant dense<0.000000e+00> : vector<32x96xf32>
    %30 = tpu.matmul %27, %29, %cst_14 {dimension_numbers = #tpu.dot_dimension_numbers<[1], [0], [0], [1], [0, 0, 1, 1], [], []>} : vector<32x32xbf16>, vector<32x96xbf16>, vector<32x96xf32> -> vector<32x96xf32>
    %31 = arith.addf %28, %30 : vector<32x96xf32>
    %c0_15 = arith.constant 0 : index
    %c0_16 = arith.constant 0 : index
    %32 = vector.load %arg9[%c0_15, %c0_16] : memref<32x96xf32, #tpu.memory_space<vmem>>, vector<32x96xf32>
    tpu.vector_store %arg9[%c0_15, %c0_16], %31 {strides = array<i32>} : memref<32x96xf32, #tpu.memory_space<vmem>>, vector<32x96xf32>,
    %c0_i32_17 = arith.constant 0 : i32
    %33 = arith.cmpi eq, %arg2, %c0_i32_17 : i32
    %34 = arith.extui %33 : i1 to i32
    %c0_i32_18 = arith.constant 0 : i32
    %35 = arith.cmpi ne, %34, %c0_i32_18 : i32
    scf.if %35 {
      %c0_19 = arith.constant 0 : index
      %c0_20 = arith.constant 0 : index
      %36 = vector.load %arg9[%c0_19, %c0_20] : memref<32x96xf32, #tpu.memory_space<vmem>>, vector<32x96xf32>
      %c0_21 = arith.constant 0 : index
      %c0_22 = arith.constant 0 : index
      %37 = vector.load %arg5[%c0_21, %c0_22] : memref<1x96xf32, #tpu.memory_space<vmem>>, vector<1x96xf32>
      %38 = vector.broadcast %37 : vector<1x96xf32> to vector<32x96xf32>
      %39 = arith.addf %36, %38 : vector<32x96xf32>
      %40 = arith.truncf %39 : vector<32x96xf32> to vector<32x96xbf16>
      %c0_23 = arith.constant 0 : index
      %c0_24 = arith.constant 0 : index
      %41 = vector.load %arg8[%c0_23, %c0_24] : memref<32x96xbf16, #tpu.memory_space<vmem>>, vector<32x96xbf16>
      tpu.vector_store %arg8[%c0_23, %c0_24], %40 {strides = array<i32>} : memref<32x96xbf16, #tpu.memory_space<vmem>>, vector<32x96xbf16>,
    } else {
    }
    return
  }
  func.func @transform_0(%arg0: i32, %arg1: i32, %arg2: i32) -> (i32, i32) {
    %c0_i32 = arith.constant 0 : i32
    return %arg0, %arg2 : i32, i32
  }
  func.func @transform_1(%arg0: i32, %arg1: i32, %arg2: i32) -> (i32, i32) {
    %c0_i32 = arith.constant 0 : i32
    return %arg2, %arg1 : i32, i32
  }
  func.func @transform_2(%arg0: i32, %arg1: i32, %arg2: i32) -> (i32, i32) {
    %c0_i32 = arith.constant 0 : i32
    %c0_i32_0 = arith.constant 0 : i32
    return %c0_i32, %arg1 : i32, i32
  }
  func.func @transform_3(%arg0: i32, %arg1: i32, %arg2: i32) -> (i32, i32) {
    %c0_i32 = arith.constant 0 : i32
    %c0_i32_0 = arith.constant 0 : i32
    return %c0_i32, %arg2 : i32, i32
  }
  func.func @transform_4(%arg0: i32, %arg1: i32, %arg2: i32) -> (i32, i32) {
    %c0_i32 = arith.constant 0 : i32
    %c0_i32_0 = arith.constant 0 : i32
    return %c0_i32, %arg2 : i32, i32
  }
  func.func @transform_5(%arg0: i32, %arg1: i32, %arg2: i32) -> (i32, i32) {
    %c0_i32 = arith.constant 0 : i32
    return %arg0, %arg1 : i32, i32
  }
}

module attributes {stable_mosaic.version = 11 : i64} {
  func.func @_dense_kernel(%arg0: i32, %arg1: i32, %arg2: i32, %arg3: memref<32x4xbf16, #tpu.memory_space<vmem>>, %arg4: memref<4x32xbf16, #tpu.memory_space<vmem>>, %arg5: memref<1x32xf32, #tpu.memory_space<vmem>>, %arg6: memref<32x32xbf16, #tpu.memory_space<vmem>>, %arg7: memref<32x32xbf16, #tpu.memory_space<vmem>>, %arg8: memref<32x32xf32, #tpu.memory_space<vmem>>) attributes {dimension_semantics = [#tpu.dimension_semantics<parallel>, #tpu.dimension_semantics<parallel>, #tpu.dimension_semantics<arbitrary>], iteration_bounds = array<i64: 1, 1, 1>, scalar_prefetch = 0 : i64, scratch_operands = 1 : i64, tpu.core_type = #tpu.core_type<tc>, window_params = [{transform_indices = @transform_0, window_bounds = array<i64: 32, 4>}, {transform_indices = @transform_1, window_bounds = array<i64: 4, 32>}, {transform_indices = @transform_2, window_bounds = array<i64: 1, 32>}, {transform_indices = @transform_3, window_bounds = array<i64: 32, 32>}, {transform_indices = @transform_4, window_bounds = array<i64: 32, 32>}]} {
    %c0_i32 = arith.constant 0 : i32
    %0 = arith.cmpi eq, %arg2, %c0_i32 : i32
    %1 = arith.extui %0 : i1 to i32
    %c0_i32_0 = arith.constant 0 : i32
    %2 = arith.cmpi ne, %1, %c0_i32_0 : i32
    scf.if %2 {
      %cst_10 = arith.constant 0.000000e+00 : f32
      %12 = vector.broadcast %cst_10 : f32 to vector<32x32xf32>
      %c0_11 = arith.constant 0 : index
      %c0_12 = arith.constant 0 : index
      %13 = vector.load %arg8[%c0_11, %c0_12] : memref<32x32xf32, #tpu.memory_space<vmem>>, vector<32x32xf32>
      tpu.vector_store %arg8[%c0_11, %c0_12], %12 {strides = array<i32>} : memref<32x32xf32, #tpu.memory_space<vmem>>, vector<32x32xf32>,
    } else {
    }
    %c0 = arith.constant 0 : index
    %c0_1 = arith.constant 0 : index
    %3 = vector.load %arg3[%c0, %c0_1] : memref<32x4xbf16, #tpu.memory_space<vmem>>, vector<32x4xbf16>
    %c0_2 = arith.constant 0 : index
    %c0_3 = arith.constant 0 : index
    %4 = vector.load %arg8[%c0_2, %c0_3] : memref<32x32xf32, #tpu.memory_space<vmem>>, vector<32x32xf32>
    %c0_4 = arith.constant 0 : index
    %c0_5 = arith.constant 0 : index
    %5 = vector.load %arg4[%c0_4, %c0_5] : memref<4x32xbf16, #tpu.memory_space<vmem>>, vector<4x32xbf16>
    %cst = arith.constant dense<0.000000e+00> : vector<32x32xf32>
    %6 = tpu.matmul %3, %5, %cst {dimension_numbers = #tpu.dot_dimension_numbers<[1], [0], [0], [1], [0, 0, 1, 1], [], []>} : vector<32x4xbf16>, vector<4x32xbf16>, vector<32x32xf32> -> vector<32x32xf32>
    %7 = arith.addf %4, %6 : vector<32x32xf32>
    %c0_6 = arith.constant 0 : index
    %c0_7 = arith.constant 0 : index
    %8 = vector.load %arg8[%c0_6, %c0_7] : memref<32x32xf32, #tpu.memory_space<vmem>>, vector<32x32xf32>
    tpu.vector_store %arg8[%c0_6, %c0_7], %7 {strides = array<i32>} : memref<32x32xf32, #tpu.memory_space<vmem>>, vector<32x32xf32>,
    %c0_i32_8 = arith.constant 0 : i32
    %9 = arith.cmpi eq, %arg2, %c0_i32_8 : i32
    %10 = arith.extui %9 : i1 to i32
    %c0_i32_9 = arith.constant 0 : i32
    %11 = arith.cmpi ne, %10, %c0_i32_9 : i32
    scf.if %11 {
      %c0_10 = arith.constant 0 : index
      %c0_11 = arith.constant 0 : index
      %12 = vector.load %arg8[%c0_10, %c0_11] : memref<32x32xf32, #tpu.memory_space<vmem>>, vector<32x32xf32>
      %c0_12 = arith.constant 0 : index
      %c0_13 = arith.constant 0 : index
      %13 = vector.load %arg5[%c0_12, %c0_13] : memref<1x32xf32, #tpu.memory_space<vmem>>, vector<1x32xf32>
      %14 = vector.broadcast %13 : vector<1x32xf32> to vector<32x32xf32>
      %15 = arith.addf %12, %14 : vector<32x32xf32>
      %c0_14 = arith.constant 0 : index
      %c0_15 = arith.constant 0 : index
      %16 = vector.load %arg6[%c0_14, %c0_15] : memref<32x32xbf16, #tpu.memory_space<vmem>>, vector<32x32xbf16>
      %17 = arith.extf %16 : vector<32x32xbf16> to vector<32x32xf32>
      %18 = arith.addf %15, %17 : vector<32x32xf32>
      %19 = arith.truncf %18 : vector<32x32xf32> to vector<32x32xbf16>
      %c0_16 = arith.constant 0 : index
      %c0_17 = arith.constant 0 : index
      %20 = vector.load %arg7[%c0_16, %c0_17] : memref<32x32xbf16, #tpu.memory_space<vmem>>, vector<32x32xbf16>
      tpu.vector_store %arg7[%c0_16, %c0_17], %19 {strides = array<i32>} : memref<32x32xbf16, #tpu.memory_space<vmem>>, vector<32x32xbf16>,
    } else {
    }
    return
  }
  func.func @transform_0(%arg0: i32, %arg1: i32, %arg2: i32) -> (i32, i32) {
    %c0_i32 = arith.constant 0 : i32
    return %arg0, %arg2 : i32, i32
  }
  func.func @transform_1(%arg0: i32, %arg1: i32, %arg2: i32) -> (i32, i32) {
    %c0_i32 = arith.constant 0 : i32
    return %arg2, %arg1 : i32, i32
  }
  func.func @transform_2(%arg0: i32, %arg1: i32, %arg2: i32) -> (i32, i32) {
    %c0_i32 = arith.constant 0 : i32
    %c0_i32_0 = arith.constant 0 : i32
    return %c0_i32, %arg1 : i32, i32
  }
  func.func @transform_3(%arg0: i32, %arg1: i32, %arg2: i32) -> (i32, i32) {
    %c0_i32 = arith.constant 0 : i32
    return %arg0, %arg1 : i32, i32
  }
  func.func @transform_4(%arg0: i32, %arg1: i32, %arg2: i32) -> (i32, i32) {
    %c0_i32 = arith.constant 0 : i32
    return %arg0, %arg1 : i32, i32
  }
}

module attributes {stable_mosaic.version = 11 : i64} {
  func.func @_attn_kernel(%arg0: i32, %arg1: memref<1x16x96xbf16, #tpu.memory_space<vmem>>, %arg2: memref<1x16x32xbf16, #tpu.memory_space<vmem>>) attributes {dimension_semantics = [#tpu.dimension_semantics<parallel>], iteration_bounds = array<i64: 2>, scalar_prefetch = 0 : i64, scratch_operands = 0 : i64, tpu.core_type = #tpu.core_type<tc>, window_params = [{transform_indices = @transform_0, window_bounds = array<i64: 1, 16, 96>}, {transform_indices = @transform_1, window_bounds = array<i64: 1, 16, 32>}]} {
    %c0 = arith.constant 0 : index
    %c0_0 = arith.constant 0 : index
    %c0_1 = arith.constant 0 : index
    %0 = vector.load %arg1[%c0, %c0_0, %c0_1] : memref<1x16x96xbf16, #tpu.memory_space<vmem>>, vector<1x16x96xbf16>
    %1 = vector.shape_cast %0 : vector<1x16x96xbf16> to vector<16x96xbf16>
    %2 = tpu.iota {dimensions = array<i32: 0>} : vector<16x16xi32>
    %3 = tpu.iota {dimensions = array<i32: 1>} : vector<16x16xi32>
    %4 = arith.cmpi sle, %3, %2 : vector<16x16xi32>
    %5 = vector.extract_strided_slice %1 {offsets = [0, 0], sizes = [16, 8], strides = [1, 1]} : vector<16x96xbf16> to vector<16x8xbf16>
    %cst = arith.constant 3.535160e-01 : bf16
    %6 = vector.broadcast %cst : bf16 to vector<16x8xbf16>
    %7 = arith.mulf %5, %6 : vector<16x8xbf16>
    %8 = vector.extract_strided_slice %1 {offsets = [0, 32], sizes = [16, 8], strides = [1, 1]} : vector<16x96xbf16> to vector<16x8xbf16>
    %9 = vector.extract_strided_slice %1 {offsets = [0, 64], sizes = [16, 8], strides = [1, 1]} : vector<16x96xbf16> to vector<16x8xbf16>
    %10 = tpu.transpose %8, [1, 0] : vector<16x8xbf16> -> vector<8x16xbf16>
    %cst_2 = arith.constant dense<0.000000e+00> : vector<16x16xf32>
    %11 = tpu.matmul %7, %10, %cst_2 {dimension_numbers = #tpu.dot_dimension_numbers<[1], [0], [0], [1], [0, 0, 1, 1], [], []>} : vector<16x8xbf16>, vector<8x16xbf16>, vector<16x16xf32> -> vector<16x16xf32>
    %cst_3 = arith.constant -1.000000e+30 : f32
    %12 = vector.broadcast %cst_3 : f32 to vector<16x16xf32>
    %13 = arith.select %4, %11, %12 : vector<16x16xi1>, vector<16x16xf32>
    %cst_4 = arith.constant dense<0xFF800000> : vector<16xf32>
    %14 = vector.multi_reduction <maximumf>, %13, %cst_4 [1] : vector<16x16xf32> to vector<16xf32>
    %15 = vector.shape_cast %14 : vector<16xf32> to vector<16x1xf32>
    %16 = vector.broadcast %15 : vector<16x1xf32> to vector<16x16xf32>
    %17 = arith.subf %13, %16 : vector<16x16xf32>
    %18 = math.exp %17 : vector<16x16xf32>
    %cst_5 = arith.constant dense<0.000000e+00> : vector<16xf32>
    %19 = vector.multi_reduction <add>, %18, %cst_5 [1] : vector<16x16xf32> to vector<16xf32>
    %20 = vector.shape_cast %19 : vector<16xf32> to vector<16x1xf32>
    %21 = tpu.reciprocal %20 {approx = true} : vector<16x1xf32> -> vector<16x1xf32>
    %22 = vector.broadcast %21 : vector<16x1xf32> to vector<16x16xf32>
    %23 = arith.mulf %18, %22 : vector<16x16xf32>
    %24 = arith.truncf %23 : vector<16x16xf32> to vector<16x16xbf16>
    %cst_6 = arith.constant dense<0.000000e+00> : vector<16x8xf32>
    %25 = tpu.matmul %24, %9, %cst_6 {dimension_numbers = #tpu.dot_dimension_numbers<[1], [0], [0], [1], [0, 0, 1, 1], [], []>} : vector<16x16xbf16>, vector<16x8xbf16>, vector<16x8xf32> -> vector<16x8xf32>
    %26 = vector.extract_strided_slice %1 {offsets = [0, 8], sizes = [16, 8], strides = [1, 1]} : vector<16x96xbf16> to vector<16x8xbf16>
    %cst_7 = arith.constant 3.535160e-01 : bf16
    %27 = vector.broadcast %cst_7 : bf16 to vector<16x8xbf16>
    %28 = arith.mulf %26, %27 : vector<16x8xbf16>
    %29 = vector.extract_strided_slice %1 {offsets = [0, 40], sizes = [16, 8], strides = [1, 1]} : vector<16x96xbf16> to vector<16x8xbf16>
    %30 = vector.extract_strided_slice %1 {offsets = [0, 72], sizes = [16, 8], strides = [1, 1]} : vector<16x96xbf16> to vector<16x8xbf16>
    %31 = tpu.transpose %29, [1, 0] : vector<16x8xbf16> -> vector<8x16xbf16>
    %cst_8 = arith.constant dense<0.000000e+00> : vector<16x16xf32>
    %32 = tpu.matmul %28, %31, %cst_8 {dimension_numbers = #tpu.dot_dimension_numbers<[1], [0], [0], [1], [0, 0, 1, 1], [], []>} : vector<16x8xbf16>, vector<8x16xbf16>, vector<16x16xf32> -> vector<16x16xf32>
    %cst_9 = arith.constant -1.000000e+30 : f32
    %33 = vector.broadcast %cst_9 : f32 to vector<16x16xf32>
    %34 = arith.select %4, %32, %33 : vector<16x16xi1>, vector<16x16xf32>
    %cst_10 = arith.constant dense<0xFF800000> : vector<16xf32>
    %35 = vector.multi_reduction <maximumf>, %34, %cst_10 [1] : vector<16x16xf32> to vector<16xf32>
    %36 = vector.shape_cast %35 : vector<16xf32> to vector<16x1xf32>
    %37 = vector.broadcast %36 : vector<16x1xf32> to vector<16x16xf32>
    %38 = arith.subf %34, %37 : vector<16x16xf32>
    %39 = math.exp %38 : vector<16x16xf32>
    %cst_11 = arith.constant dense<0.000000e+00> : vector<16xf32>
    %40 = vector.multi_reduction <add>, %39, %cst_11 [1] : vector<16x16xf32> to vector<16xf32>
    %41 = vector.shape_cast %40 : vector<16xf32> to vector<16x1xf32>
    %42 = tpu.reciprocal %41 {approx = true} : vector<16x1xf32> -> vector<16x1xf32>
    %43 = vector.broadcast %42 : vector<16x1xf32> to vector<16x16xf32>
    %44 = arith.mulf %39, %43 : vector<16x16xf32>
    %45 = arith.truncf %44 : vector<16x16xf32> to vector<16x16xbf16>
    %cst_12 = arith.constant dense<0.000000e+00> : vector<16x8xf32>
    %46 = tpu.matmul %45, %30, %cst_12 {dimension_numbers = #tpu.dot_dimension_numbers<[1], [0], [0], [1], [0, 0, 1, 1], [], []>} : vector<16x16xbf16>, vector<16x8xbf16>, vector<16x8xf32> -> vector<16x8xf32>
    %47 = vector.extract_strided_slice %1 {offsets = [0, 16], sizes = [16, 8], strides = [1, 1]} : vector<16x96xbf16> to vector<16x8xbf16>
    %cst_13 = arith.constant 3.535160e-01 : bf16
    %48 = vector.broadcast %cst_13 : bf16 to vector<16x8xbf16>
    %49 = arith.mulf %47, %48 : vector<16x8xbf16>
    %50 = vector.extract_strided_slice %1 {offsets = [0, 48], sizes = [16, 8], strides = [1, 1]} : vector<16x96xbf16> to vector<16x8xbf16>
    %51 = vector.extract_strided_slice %1 {offsets = [0, 80], sizes = [16, 8], strides = [1, 1]} : vector<16x96xbf16> to vector<16x8xbf16>
    %52 = tpu.transpose %50, [1, 0] : vector<16x8xbf16> -> vector<8x16xbf16>
    %cst_14 = arith.constant dense<0.000000e+00> : vector<16x16xf32>
    %53 = tpu.matmul %49, %52, %cst_14 {dimension_numbers = #tpu.dot_dimension_numbers<[1], [0], [0], [1], [0, 0, 1, 1], [], []>} : vector<16x8xbf16>, vector<8x16xbf16>, vector<16x16xf32> -> vector<16x16xf32>
    %cst_15 = arith.constant -1.000000e+30 : f32
    %54 = vector.broadcast %cst_15 : f32 to vector<16x16xf32>
    %55 = arith.select %4, %53, %54 : vector<16x16xi1>, vector<16x16xf32>
    %cst_16 = arith.constant dense<0xFF800000> : vector<16xf32>
    %56 = vector.multi_reduction <maximumf>, %55, %cst_16 [1] : vector<16x16xf32> to vector<16xf32>
    %57 = vector.shape_cast %56 : vector<16xf32> to vector<16x1xf32>
    %58 = vector.broadcast %57 : vector<16x1xf32> to vector<16x16xf32>
    %59 = arith.subf %55, %58 : vector<16x16xf32>
    %60 = math.exp %59 : vector<16x16xf32>
    %cst_17 = arith.constant dense<0.000000e+00> : vector<16xf32>
    %61 = vector.multi_reduction <add>, %60, %cst_17 [1] : vector<16x16xf32> to vector<16xf32>
    %62 = vector.shape_cast %61 : vector<16xf32> to vector<16x1xf32>
    %63 = tpu.reciprocal %62 {approx = true} : vector<16x1xf32> -> vector<16x1xf32>
    %64 = vector.broadcast %63 : vector<16x1xf32> to vector<16x16xf32>
    %65 = arith.mulf %60, %64 : vector<16x16xf32>
    %66 = arith.truncf %65 : vector<16x16xf32> to vector<16x16xbf16>
    %cst_18 = arith.constant dense<0.000000e+00> : vector<16x8xf32>
    %67 = tpu.matmul %66, %51, %cst_18 {dimension_numbers = #tpu.dot_dimension_numbers<[1], [0], [0], [1], [0, 0, 1, 1], [], []>} : vector<16x16xbf16>, vector<16x8xbf16>, vector<16x8xf32> -> vector<16x8xf32>
    %68 = vector.extract_strided_slice %1 {offsets = [0, 24], sizes = [16, 8], strides = [1, 1]} : vector<16x96xbf16> to vector<16x8xbf16>
    %cst_19 = arith.constant 3.535160e-01 : bf16
    %69 = vector.broadcast %cst_19 : bf16 to vector<16x8xbf16>
    %70 = arith.mulf %68, %69 : vector<16x8xbf16>
    %71 = vector.extract_strided_slice %1 {offsets = [0, 56], sizes = [16, 8], strides = [1, 1]} : vector<16x96xbf16> to vector<16x8xbf16>
    %72 = vector.extract_strided_slice %1 {offsets = [0, 88], sizes = [16, 8], strides = [1, 1]} : vector<16x96xbf16> to vector<16x8xbf16>
    %73 = tpu.transpose %71, [1, 0] : vector<16x8xbf16> -> vector<8x16xbf16>
    %cst_20 = arith.constant dense<0.000000e+00> : vector<16x16xf32>
    %74 = tpu.matmul %70, %73, %cst_20 {dimension_numbers = #tpu.dot_dimension_numbers<[1], [0], [0], [1], [0, 0, 1, 1], [], []>} : vector<16x8xbf16>, vector<8x16xbf16>, vector<16x16xf32> -> vector<16x16xf32>
    %cst_21 = arith.constant -1.000000e+30 : f32
    %75 = vector.broadcast %cst_21 : f32 to vector<16x16xf32>
    %76 = arith.select %4, %74, %75 : vector<16x16xi1>, vector<16x16xf32>
    %cst_22 = arith.constant dense<0xFF800000> : vector<16xf32>
    %77 = vector.multi_reduction <maximumf>, %76, %cst_22 [1] : vector<16x16xf32> to vector<16xf32>
    %78 = vector.shape_cast %77 : vector<16xf32> to vector<16x1xf32>
    %79 = vector.broadcast %78 : vector<16x1xf32> to vector<16x16xf32>
    %80 = arith.subf %76, %79 : vector<16x16xf32>
    %81 = math.exp %80 : vector<16x16xf32>
    %cst_23 = arith.constant dense<0.000000e+00> : vector<16xf32>
    %82 = vector.multi_reduction <add>, %81, %cst_23 [1] : vector<16x16xf32> to vector<16xf32>
    %83 = vector.shape_cast %82 : vector<16xf32> to vector<16x1xf32>
    %84 = tpu.reciprocal %83 {approx = true} : vector<16x1xf32> -> vector<16x1xf32>
    %85 = vector.broadcast %84 : vector<16x1xf32> to vector<16x16xf32>
    %86 = arith.mulf %81, %85 : vector<16x16xf32>
    %87 = arith.truncf %86 : vector<16x16xf32> to vector<16x16xbf16>
    %cst_24 = arith.constant dense<0.000000e+00> : vector<16x8xf32>
    %88 = tpu.matmul %87, %72, %cst_24 {dimension_numbers = #tpu.dot_dimension_numbers<[1], [0], [0], [1], [0, 0, 1, 1], [], []>} : vector<16x16xbf16>, vector<16x8xbf16>, vector<16x8xf32> -> vector<16x8xf32>
    %89 = tpu.concatenate %25, %46, %67, %88 in 1 : vector<16x8xf32>, vector<16x8xf32>, vector<16x8xf32>, vector<16x8xf32> -> vector<16x32xf32>
    %90 = arith.truncf %89 : vector<16x32xf32> to vector<16x32xbf16>
    %c0_25 = arith.constant 0 : index
    %c0_26 = arith.constant 0 : index
    %c0_27 = arith.constant 0 : index
    %91 = vector.load %arg2[%c0_25, %c0_26, %c0_27] : memref<1x16x32xbf16, #tpu.memory_space<vmem>>, vector<1x16x32xbf16>
    %92 = vector.shape_cast %91 : vector<1x16x32xbf16> to vector<16x32xbf16>
    %93 = vector.shape_cast %90 : vector<16x32xbf16> to vector<1x16x32xbf16>
    tpu.vector_store %arg2[%c0_25, %c0_26, %c0_27], %93 {strides = array<i32>} : memref<1x16x32xbf16, #tpu.memory_space<vmem>>, vector<1x16x32xbf16>,
    return
  }
  func.func @transform_0(%arg0: i32) -> (i32, i32, i32) {
    %c0_i32 = arith.constant 0 : i32
    %c0_i32_0 = arith.constant 0 : i32
    %c0_i32_1 = arith.constant 0 : i32
    return %arg0, %c0_i32, %c0_i32_0 : i32, i32, i32
  }
  func.func @transform_1(%arg0: i32) -> (i32, i32, i32) {
    %c0_i32 = arith.constant 0 : i32
    %c0_i32_0 = arith.constant 0 : i32
    %c0_i32_1 = arith.constant 0 : i32
    return %arg0, %c0_i32, %c0_i32_0 : i32, i32, i32
  }
}

module attributes {stable_mosaic.version = 11 : i64} {
  func.func @_dense_kernel(%arg0: i32, %arg1: i32, %arg2: i32, %arg3: memref<32x32xbf16, #tpu.memory_space<vmem>>, %arg4: memref<32x128xbf16, #tpu.memory_space<vmem>>, %arg5: memref<1x128xf32, #tpu.memory_space<vmem>>, %arg6: memref<1x32xf32, #tpu.memory_space<vmem>>, %arg7: memref<1x32xf32, #tpu.memory_space<vmem>>, %arg8: memref<32x128xbf16, #tpu.memory_space<vmem>>, %arg9: memref<32x128xf32, #tpu.memory_space<vmem>>) attributes {dimension_semantics = [#tpu.dimension_semantics<parallel>, #tpu.dimension_semantics<parallel>, #tpu.dimension_semantics<arbitrary>], iteration_bounds = array<i64: 1, 1, 1>, scalar_prefetch = 0 : i64, scratch_operands = 1 : i64, tpu.core_type = #tpu.core_type<tc>, window_params = [{transform_indices = @transform_0, window_bounds = array<i64: 32, 32>}, {transform_indices = @transform_1, window_bounds = array<i64: 32, 128>}, {transform_indices = @transform_2, window_bounds = array<i64: 1, 128>}, {transform_indices = @transform_3, window_bounds = array<i64: 1, 32>}, {transform_indices = @transform_4, window_bounds = array<i64: 1, 32>}, {transform_indices = @transform_5, window_bounds = array<i64: 32, 128>}]} {
    %c0_i32 = arith.constant 0 : i32
    %0 = arith.cmpi eq, %arg2, %c0_i32 : i32
    %1 = arith.extui %0 : i1 to i32
    %c0_i32_0 = arith.constant 0 : i32
    %2 = arith.cmpi ne, %1, %c0_i32_0 : i32
    scf.if %2 {
      %cst_19 = arith.constant 0.000000e+00 : f32
      %36 = vector.broadcast %cst_19 : f32 to vector<32x128xf32>
      %c0_20 = arith.constant 0 : index
      %c0_21 = arith.constant 0 : index
      %37 = vector.load %arg9[%c0_20, %c0_21] : memref<32x128xf32, #tpu.memory_space<vmem>>, vector<32x128xf32>
      tpu.vector_store %arg9[%c0_20, %c0_21], %36 {strides = array<i32>} : memref<32x128xf32, #tpu.memory_space<vmem>>, vector<32x128xf32>,
    } else {
    }
    %c0 = arith.constant 0 : index
    %c0_1 = arith.constant 0 : index
    %3 = vector.load %arg3[%c0, %c0_1] : memref<32x32xbf16, #tpu.memory_space<vmem>>, vector<32x32xbf16>
    %4 = arith.extf %3 : vector<32x32xbf16> to vector<32x32xf32>
    %cst = arith.constant dense<0.000000e+00> : vector<32xf32>
    %5 = vector.multi_reduction <add>, %4, %cst [1] : vector<32x32xf32> to vector<32xf32>
    %6 = vector.shape_cast %5 : vector<32xf32> to vector<32x1xf32>
    %cst_2 = arith.constant 3.200000e+01 : f32
    %7 = vector.broadcast %cst_2 : f32 to vector<32x1xf32>
    %8 = arith.divf %6, %7 : vector<32x1xf32>
    %9 = vector.broadcast %8 : vector<32x1xf32> to vector<32x32xf32>
    %10 = arith.subf %4, %9 : vector<32x32xf32>
    %11 = arith.mulf %10, %10 : vector<32x32xf32>
    %cst_3 = arith.constant dense<0.000000e+00> : vector<32xf32>
    %12 = vector.multi_reduction <add>, %11, %cst_3 [1] : vector<32x32xf32> to vector<32xf32>
    %13 = vector.shape_cast %12 : vector<32xf32> to vector<32x1xf32>
    %cst_4 = arith.constant 3.200000e+01 : f32
    %14 = vector.broadcast %cst_4 : f32 to vector<32x1xf32>
    %15 = arith.divf %13, %14 : vector<32x1xf32>
    %cst_5 = arith.constant 9.99999974E-6 : f32
    %16 = vector.broadcast %cst_5 : f32 to vector<32x1xf32>
    %17 = arith.addf %15, %16 : vector<32x1xf32>
    %18 = math.rsqrt %17 : vector<32x1xf32>
    %19 = vector.broadcast %18 : vector<32x1xf32> to vector<32x32xf32>
    %20 = arith.mulf %10, %19 : vector<32x32xf32>
    %c0_6 = arith.constant 0 : index
    %c0_7 = arith.constant 0 : index
    %21 = vector.load %arg6[%c0_6, %c0_7] : memref<1x32xf32, #tpu.memory_space<vmem>>, vector<1x32xf32>
    %22 = vector.broadcast %21 : vector<1x32xf32> to vector<32x32xf32>
    %23 = arith.mulf %20, %22 : vector<32x32xf32>
    %c0_8 = arith.constant 0 : index
    %c0_9 = arith.constant 0 : index
    %24 = vector.load %arg7[%c0_8, %c0_9] : memref<1x32xf32, #tpu.memory_space<vmem>>, vector<1x32xf32>
    %25 = vector.broadcast %24 : vector<1x32xf32> to vector<32x32xf32>
    %26 = arith.addf %23, %25 : vector<32x32xf32>
    %27 = arith.truncf %26 : vector<32x32xf32> to vector<32x32xbf16>
    %c0_10 = arith.constant 0 : index
    %c0_11 = arith.constant 0 : index
    %28 = vector.load %arg9[%c0_10, %c0_11] : memref<32x128xf32, #tpu.memory_space<vmem>>, vector<32x128xf32>
    %c0_12 = arith.constant 0 : index
    %c0_13 = arith.constant 0 : index
    %29 = vector.load %arg4[%c0_12, %c0_13] : memref<32x128xbf16, #tpu.memory_space<vmem>>, vector<32x128xbf16>
    %cst_14 = arith.constant dense<0.000000e+00> : vector<32x128xf32>
    %30 = tpu.matmul %27, %29, %cst_14 {dimension_numbers = #tpu.dot_dimension_numbers<[1], [0], [0], [1], [0, 0, 1, 1], [], []>} : vector<32x32xbf16>, vector<32x128xbf16>, vector<32x128xf32> -> vector<32x128xf32>
    %31 = arith.addf %28, %30 : vector<32x128xf32>
    %c0_15 = arith.constant 0 : index
    %c0_16 = arith.constant 0 : index
    %32 = vector.load %arg9[%c0_15, %c0_16] : memref<32x128xf32, #tpu.memory_space<vmem>>, vector<32x128xf32>
    tpu.vector_store %arg9[%c0_15, %c0_16], %31 {strides = array<i32>} : memref<32x128xf32, #tpu.memory_space<vmem>>, vector<32x128xf32>,
    %c0_i32_17 = arith.constant 0 : i32
    %33 = arith.cmpi eq, %arg2, %c0_i32_17 : i32
    %34 = arith.extui %33 : i1 to i32
    %c0_i32_18 = arith.constant 0 : i32
    %35 = arith.cmpi ne, %34, %c0_i32_18 : i32
    scf.if %35 {
      %c0_19 = arith.constant 0 : index
      %c0_20 = arith.constant 0 : index
      %36 = vector.load %arg9[%c0_19, %c0_20] : memref<32x128xf32, #tpu.memory_space<vmem>>, vector<32x128xf32>
      %c0_21 = arith.constant 0 : index
      %c0_22 = arith.constant 0 : index
      %37 = vector.load %arg5[%c0_21, %c0_22] : memref<1x128xf32, #tpu.memory_space<vmem>>, vector<1x128xf32>
      %38 = vector.broadcast %37 : vector<1x128xf32> to vector<32x128xf32>
      %39 = arith.addf %36, %38 : vector<32x128xf32>
      %cst_23 = arith.constant 5.000000e-01 : f32
      %40 = vector.broadcast %cst_23 : f32 to vector<32x128xf32>
      %41 = arith.mulf %40, %39 : vector<32x128xf32>
      %cst_24 = arith.constant 4.471500e-02 : f32
      %42 = vector.broadcast %cst_24 : f32 to vector<32x128xf32>
      %43 = arith.mulf %42, %39 : vector<32x128xf32>
      %44 = arith.mulf %43, %39 : vector<32x128xf32>
      %45 = arith.mulf %44, %39 : vector<32x128xf32>
      %46 = arith.addf %39, %45 : vector<32x128xf32>
      %cst_25 = arith.constant 0.797884583 : f32
      %47 = vector.broadcast %cst_25 : f32 to vector<32x128xf32>
      %48 = arith.mulf %47, %46 : vector<32x128xf32>
      %49 = math.tanh %48 : vector<32x128xf32>
      %cst_26 = arith.constant 1.000000e+00 : f32
      %50 = vector.broadcast %cst_26 : f32 to vector<32x128xf32>
      %51 = arith.addf %50, %49 : vector<32x128xf32>
      %52 = arith.mulf %41, %51 : vector<32x128xf32>
      %53 = arith.truncf %52 : vector<32x128xf32> to vector<32x128xbf16>
      %c0_27 = arith.constant 0 : index
      %c0_28 = arith.constant 0 : index
      %54 = vector.load %arg8[%c0_27, %c0_28] : memref<32x128xbf16, #tpu.memory_space<vmem>>, vector<32x128xbf16>
      tpu.vector_store %arg8[%c0_27, %c0_28], %53 {strides = array<i32>} : memref<32x128xbf16, #tpu.memory_space<vmem>>, vector<32x128xbf16>,
    } else {
    }
    return
  }
  func.func @transform_0(%arg0: i32, %arg1: i32, %arg2: i32) -> (i32, i32) {
    %c0_i32 = arith.constant 0 : i32
    return %arg0, %arg2 : i32, i32
  }
  func.func @transform_1(%arg0: i32, %arg1: i32, %arg2: i32) -> (i32, i32) {
    %c0_i32 = arith.constant 0 : i32
    return %arg2, %arg1 : i32, i32
  }
  func.func @transform_2(%arg0: i32, %arg1: i32, %arg2: i32) -> (i32, i32) {
    %c0_i32 = arith.constant 0 : i32
    %c0_i32_0 = arith.constant 0 : i32
    return %c0_i32, %arg1 : i32, i32
  }
  func.func @transform_3(%arg0: i32, %arg1: i32, %arg2: i32) -> (i32, i32) {
    %c0_i32 = arith.constant 0 : i32
    %c0_i32_0 = arith.constant 0 : i32
    return %c0_i32, %arg2 : i32, i32
  }
  func.func @transform_4(%arg0: i32, %arg1: i32, %arg2: i32) -> (i32, i32) {
    %c0_i32 = arith.constant 0 : i32
    %c0_i32_0 = arith.constant 0 : i32
    return %c0_i32, %arg2 : i32, i32
  }
  func.func @transform_5(%arg0: i32, %arg1: i32, %arg2: i32) -> (i32, i32) {
    %c0_i32 = arith.constant 0 : i32
    return %arg0, %arg1 : i32, i32
  }
}

module attributes {stable_mosaic.version = 11 : i64} {
  func.func @_dense_kernel(%arg0: i32, %arg1: i32, %arg2: i32, %arg3: memref<32x128xbf16, #tpu.memory_space<vmem>>, %arg4: memref<128x32xbf16, #tpu.memory_space<vmem>>, %arg5: memref<1x32xf32, #tpu.memory_space<vmem>>, %arg6: memref<32x32xbf16, #tpu.memory_space<vmem>>, %arg7: memref<32x32xbf16, #tpu.memory_space<vmem>>, %arg8: memref<32x32xf32, #tpu.memory_space<vmem>>) attributes {dimension_semantics = [#tpu.dimension_semantics<parallel>, #tpu.dimension_semantics<parallel>, #tpu.dimension_semantics<arbitrary>], iteration_bounds = array<i64: 1, 1, 1>, scalar_prefetch = 0 : i64, scratch_operands = 1 : i64, tpu.core_type = #tpu.core_type<tc>, window_params = [{transform_indices = @transform_0, window_bounds = array<i64: 32, 128>}, {transform_indices = @transform_1, window_bounds = array<i64: 128, 32>}, {transform_indices = @transform_2, window_bounds = array<i64: 1, 32>}, {transform_indices = @transform_3, window_bounds = array<i64: 32, 32>}, {transform_indices = @transform_4, window_bounds = array<i64: 32, 32>}]} {
    %c0_i32 = arith.constant 0 : i32
    %0 = arith.cmpi eq, %arg2, %c0_i32 : i32
    %1 = arith.extui %0 : i1 to i32
    %c0_i32_0 = arith.constant 0 : i32
    %2 = arith.cmpi ne, %1, %c0_i32_0 : i32
    scf.if %2 {
      %cst_10 = arith.constant 0.000000e+00 : f32
      %12 = vector.broadcast %cst_10 : f32 to vector<32x32xf32>
      %c0_11 = arith.constant 0 : index
      %c0_12 = arith.constant 0 : index
      %13 = vector.load %arg8[%c0_11, %c0_12] : memref<32x32xf32, #tpu.memory_space<vmem>>, vector<32x32xf32>
      tpu.vector_store %arg8[%c0_11, %c0_12], %12 {strides = array<i32>} : memref<32x32xf32, #tpu.memory_space<vmem>>, vector<32x32xf32>,
    } else {
    }
    %c0 = arith.constant 0 : index
    %c0_1 = arith.constant 0 : index
    %3 = vector.load %arg3[%c0, %c0_1] : memref<32x128xbf16, #tpu.memory_space<vmem>>, vector<32x128xbf16>
    %c0_2 = arith.constant 0 : index
    %c0_3 = arith.constant 0 : index
    %4 = vector.load %arg8[%c0_2, %c0_3] : memref<32x32xf32, #tpu.memory_space<vmem>>, vector<32x32xf32>
    %c0_4 = arith.constant 0 : index
    %c0_5 = arith.constant 0 : index
    %5 = vector.load %arg4[%c0_4, %c0_5] : memref<128x32xbf16, #tpu.memory_space<vmem>>, vector<128x32xbf16>
    %cst = arith.constant dense<0.000000e+00> : vector<32x32xf32>
    %6 = tpu.matmul %3, %5, %cst {dimension_numbers = #tpu.dot_dimension_numbers<[1], [0], [0], [1], [0, 0, 1, 1], [], []>} : vector<32x128xbf16>, vector<128x32xbf16>, vector<32x32xf32> -> vector<32x32xf32>
    %7 = arith.addf %4, %6 : vector<32x32xf32>
    %c0_6 = arith.constant 0 : index
    %c0_7 = arith.constant 0 : index
    %8 = vector.load %arg8[%c0_6, %c0_7] : memref<32x32xf32, #tpu.memory_space<vmem>>, vector<32x32xf32>
    tpu.vector_store %arg8[%c0_6, %c0_7], %7 {strides = array<i32>} : memref<32x32xf32, #tpu.memory_space<vmem>>, vector<32x32xf32>,
    %c0_i32_8 = arith.constant 0 : i32
    %9 = arith.cmpi eq, %arg2, %c0_i32_8 : i32
    %10 = arith.extui %9 : i1 to i32
    %c0_i32_9 = arith.constant 0 : i32
    %11 = arith.cmpi ne, %10, %c0_i32_9 : i32
    scf.if %11 {
      %c0_10 = arith.constant 0 : index
      %c0_11 = arith.constant 0 : index
      %12 = vector.load %arg8[%c0_10, %c0_11] : memref<32x32xf32, #tpu.memory_space<vmem>>, vector<32x32xf32>
      %c0_12 = arith.constant 0 : index
      %c0_13 = arith.constant 0 : index
      %13 = vector.load %arg5[%c0_12, %c0_13] : memref<1x32xf32, #tpu.memory_space<vmem>>, vector<1x32xf32>
      %14 = vector.broadcast %13 : vector<1x32xf32> to vector<32x32xf32>
      %15 = arith.addf %12, %14 : vector<32x32xf32>
      %c0_14 = arith.constant 0 : index
      %c0_15 = arith.constant 0 : index
      %16 = vector.load %arg6[%c0_14, %c0_15] : memref<32x32xbf16, #tpu.memory_space<vmem>>, vector<32x32xbf16>
      %17 = arith.extf %16 : vector<32x32xbf16> to vector<32x32xf32>
      %18 = arith.addf %15, %17 : vector<32x32xf32>
      %19 = arith.truncf %18 : vector<32x32xf32> to vector<32x32xbf16>
      %c0_16 = arith.constant 0 : index
      %c0_17 = arith.constant 0 : index
      %20 = vector.load %arg7[%c0_16, %c0_17] : memref<32x32xbf16, #tpu.memory_space<vmem>>, vector<32x32xbf16>
      tpu.vector_store %arg7[%c0_16, %c0_17], %19 {strides = array<i32>} : memref<32x32xbf16, #tpu.memory_space<vmem>>, vector<32x32xbf16>,
    } else {
    }
    return
  }
  func.func @transform_0(%arg0: i32, %arg1: i32, %arg2: i32) -> (i32, i32) {
    %c0_i32 = arith.constant 0 : i32
    return %arg0, %arg2 : i32, i32
  }
  func.func @transform_1(%arg0: i32, %arg1: i32, %arg2: i32) -> (i32, i32) {
    %c0_i32 = arith.constant 0 : i32
    return %arg2, %arg1 : i32, i32
  }
  func.func @transform_2(%arg0: i32, %arg1: i32, %arg2: i32) -> (i32, i32) {
    %c0_i32 = arith.constant 0 : i32
    %c0_i32_0 = arith.constant 0 : i32
    return %c0_i32, %arg1 : i32, i32
  }
  func.func @transform_3(%arg0: i32, %arg1: i32, %arg2: i32) -> (i32, i32) {
    %c0_i32 = arith.constant 0 : i32
    return %arg0, %arg1 : i32, i32
  }
  func.func @transform_4(%arg0: i32, %arg1: i32, %arg2: i32) -> (i32, i32) {
    %c0_i32 = arith.constant 0 : i32
    return %arg0, %arg1 : i32, i32
  }
}

module attributes {stable_mosaic.version = 11 : i64} {
  func.func @_dense_kernel(%arg0: i32, %arg1: i32, %arg2: i32, %arg3: memref<32x32xbf16, #tpu.memory_space<vmem>>, %arg4: memref<32x1xbf16, #tpu.memory_space<vmem>>, %arg5: memref<1x1xf32, #tpu.memory_space<vmem>>, %arg6: memref<1x32xf32, #tpu.memory_space<vmem>>, %arg7: memref<1x32xf32, #tpu.memory_space<vmem>>, %arg8: memref<32x1xf32, #tpu.memory_space<vmem>>, %arg9: memref<32x1xf32, #tpu.memory_space<vmem>>) attributes {dimension_semantics = [#tpu.dimension_semantics<parallel>, #tpu.dimension_semantics<parallel>, #tpu.dimension_semantics<arbitrary>], iteration_bounds = array<i64: 1, 1, 1>, scalar_prefetch = 0 : i64, scratch_operands = 1 : i64, tpu.core_type = #tpu.core_type<tc>, window_params = [{transform_indices = @transform_0, window_bounds = array<i64: 32, 32>}, {transform_indices = @transform_1, window_bounds = array<i64: 32, 1>}, {transform_indices = @transform_2, window_bounds = array<i64: 1, 1>}, {transform_indices = @transform_3, window_bounds = array<i64: 1, 32>}, {transform_indices = @transform_4, window_bounds = array<i64: 1, 32>}, {transform_indices = @transform_5, window_bounds = array<i64: 32, 1>}]} {
    %c0_i32 = arith.constant 0 : i32
    %0 = arith.cmpi eq, %arg2, %c0_i32 : i32
    %1 = arith.extui %0 : i1 to i32
    %c0_i32_0 = arith.constant 0 : i32
    %2 = arith.cmpi ne, %1, %c0_i32_0 : i32
    scf.if %2 {
      %cst_19 = arith.constant 0.000000e+00 : f32
      %36 = vector.broadcast %cst_19 : f32 to vector<32x1xf32>
      %c0_20 = arith.constant 0 : index
      %c0_21 = arith.constant 0 : index
      %37 = vector.load %arg9[%c0_20, %c0_21] : memref<32x1xf32, #tpu.memory_space<vmem>>, vector<32x1xf32>
      tpu.vector_store %arg9[%c0_20, %c0_21], %36 {strides = array<i32>} : memref<32x1xf32, #tpu.memory_space<vmem>>, vector<32x1xf32>,
    } else {
    }
    %c0 = arith.constant 0 : index
    %c0_1 = arith.constant 0 : index
    %3 = vector.load %arg3[%c0, %c0_1] : memref<32x32xbf16, #tpu.memory_space<vmem>>, vector<32x32xbf16>
    %4 = arith.extf %3 : vector<32x32xbf16> to vector<32x32xf32>
    %cst = arith.constant dense<0.000000e+00> : vector<32xf32>
    %5 = vector.multi_reduction <add>, %4, %cst [1] : vector<32x32xf32> to vector<32xf32>
    %6 = vector.shape_cast %5 : vector<32xf32> to vector<32x1xf32>
    %cst_2 = arith.constant 3.200000e+01 : f32
    %7 = vector.broadcast %cst_2 : f32 to vector<32x1xf32>
    %8 = arith.divf %6, %7 : vector<32x1xf32>
    %9 = vector.broadcast %8 : vector<32x1xf32> to vector<32x32xf32>
    %10 = arith.subf %4, %9 : vector<32x32xf32>
    %11 = arith.mulf %10, %10 : vector<32x32xf32>
    %cst_3 = arith.constant dense<0.000000e+00> : vector<32xf32>
    %12 = vector.multi_reduction <add>, %11, %cst_3 [1] : vector<32x32xf32> to vector<32xf32>
    %13 = vector.shape_cast %12 : vector<32xf32> to vector<32x1xf32>
    %cst_4 = arith.constant 3.200000e+01 : f32
    %14 = vector.broadcast %cst_4 : f32 to vector<32x1xf32>
    %15 = arith.divf %13, %14 : vector<32x1xf32>
    %cst_5 = arith.constant 9.99999974E-6 : f32
    %16 = vector.broadcast %cst_5 : f32 to vector<32x1xf32>
    %17 = arith.addf %15, %16 : vector<32x1xf32>
    %18 = math.rsqrt %17 : vector<32x1xf32>
    %19 = vector.broadcast %18 : vector<32x1xf32> to vector<32x32xf32>
    %20 = arith.mulf %10, %19 : vector<32x32xf32>
    %c0_6 = arith.constant 0 : index
    %c0_7 = arith.constant 0 : index
    %21 = vector.load %arg6[%c0_6, %c0_7] : memref<1x32xf32, #tpu.memory_space<vmem>>, vector<1x32xf32>
    %22 = vector.broadcast %21 : vector<1x32xf32> to vector<32x32xf32>
    %23 = arith.mulf %20, %22 : vector<32x32xf32>
    %c0_8 = arith.constant 0 : index
    %c0_9 = arith.constant 0 : index
    %24 = vector.load %arg7[%c0_8, %c0_9] : memref<1x32xf32, #tpu.memory_space<vmem>>, vector<1x32xf32>
    %25 = vector.broadcast %24 : vector<1x32xf32> to vector<32x32xf32>
    %26 = arith.addf %23, %25 : vector<32x32xf32>
    %27 = arith.truncf %26 : vector<32x32xf32> to vector<32x32xbf16>
    %c0_10 = arith.constant 0 : index
    %c0_11 = arith.constant 0 : index
    %28 = vector.load %arg9[%c0_10, %c0_11] : memref<32x1xf32, #tpu.memory_space<vmem>>, vector<32x1xf32>
    %c0_12 = arith.constant 0 : index
    %c0_13 = arith.constant 0 : index
    %29 = vector.load %arg4[%c0_12, %c0_13] : memref<32x1xbf16, #tpu.memory_space<vmem>>, vector<32x1xbf16>
    %cst_14 = arith.constant dense<0.000000e+00> : vector<32x1xf32>
    %30 = tpu.matmul %27, %29, %cst_14 {dimension_numbers = #tpu.dot_dimension_numbers<[1], [0], [0], [1], [0, 0, 1, 1], [], []>} : vector<32x32xbf16>, vector<32x1xbf16>, vector<32x1xf32> -> vector<32x1xf32>
    %31 = arith.addf %28, %30 : vector<32x1xf32>
    %c0_15 = arith.constant 0 : index
    %c0_16 = arith.constant 0 : index
    %32 = vector.load %arg9[%c0_15, %c0_16] : memref<32x1xf32, #tpu.memory_space<vmem>>, vector<32x1xf32>
    tpu.vector_store %arg9[%c0_15, %c0_16], %31 {strides = array<i32>} : memref<32x1xf32, #tpu.memory_space<vmem>>, vector<32x1xf32>,
    %c0_i32_17 = arith.constant 0 : i32
    %33 = arith.cmpi eq, %arg2, %c0_i32_17 : i32
    %34 = arith.extui %33 : i1 to i32
    %c0_i32_18 = arith.constant 0 : i32
    %35 = arith.cmpi ne, %34, %c0_i32_18 : i32
    scf.if %35 {
      %c0_19 = arith.constant 0 : index
      %c0_20 = arith.constant 0 : index
      %36 = vector.load %arg9[%c0_19, %c0_20] : memref<32x1xf32, #tpu.memory_space<vmem>>, vector<32x1xf32>
      %c0_21 = arith.constant 0 : index
      %c0_22 = arith.constant 0 : index
      %37 = vector.load %arg5[%c0_21, %c0_22] : memref<1x1xf32, #tpu.memory_space<vmem>>, vector<1x1xf32>
      %38 = vector.broadcast %37 : vector<1x1xf32> to vector<32x1xf32>
      %39 = arith.addf %36, %38 : vector<32x1xf32>
      %c0_23 = arith.constant 0 : index
      %c0_24 = arith.constant 0 : index
      %40 = vector.load %arg8[%c0_23, %c0_24] : memref<32x1xf32, #tpu.memory_space<vmem>>, vector<32x1xf32>
      tpu.vector_store %arg8[%c0_23, %c0_24], %39 {strides = array<i32>} : memref<32x1xf32, #tpu.memory_space<vmem>>, vector<32x1xf32>,
    } else {
    }
    return
  }
  func.func @transform_0(%arg0: i32, %arg1: i32, %arg2: i32) -> (i32, i32) {
    %c0_i32 = arith.constant 0 : i32
    return %arg0, %arg2 : i32, i32
  }
  func.func @transform_1(%arg0: i32, %arg1: i32, %arg2: i32) -> (i32, i32) {
    %c0_i32 = arith.constant 0 : i32
    return %arg2, %arg1 : i32, i32
  }
  func.func @transform_2(%arg0: i32, %arg1: i32, %arg2: i32) -> (i32, i32) {
    %c0_i32 = arith.constant 0 : i32
    %c0_i32_0 = arith.constant 0 : i32
    return %c0_i32, %arg1 : i32, i32
  }
  func.func @transform_3(%arg0: i32, %arg1: i32, %arg2: i32) -> (i32, i32) {
    %c0_i32 = arith.constant 0 : i32
    %c0_i32_0 = arith.constant 0 : i32
    return %c0_i32, %arg2 : i32, i32
  }
  func.func @transform_4(%arg0: i32, %arg1: i32, %arg2: i32) -> (i32, i32) {
    %c0_i32 = arith.constant 0 : i32
    %c0_i32_0 = arith.constant 0 : i32
    return %c0_i32, %arg2 : i32, i32
  }
  func.func @transform_5(%arg0: i32, %arg1: i32, %arg2: i32) -> (i32, i32) {
    %c0_i32 = arith.constant 0 : i32
    return %arg0, %arg1 : i32, i32
  }
}

</mosaic_0001>

<llo_original>
// kernel: transformer_forward.12
$region0: #{transformer_forward.12}
  #allocation0 [shape = 'u32[]', space=smem, size = 0x4, offset = 0x4, fixed_abs, tag = 'smem constant byte address 0x4 - core index']
  #allocation1 [shape = 'u32[144,128]{1,0:T(1,128)}', space=vmem, size = 0x12000, scoped, tag = 'internal scratch']
  #allocation2 [shape = 'f32[32,32]{1,0:T(8,128)}', space=vmem, size = 0x4000, scoped, tag = 'scratch operand']
  %s0 = inlined_call_operand.vmem [shape: bf16[32,4], index: 0, kind: input, shape index: {}]
  %s1 = inlined_call_operand.vmem [shape: bf16[4,32], index: 1, kind: input, shape index: {}]
  %s2 = inlined_call_operand.vmem [shape: f32[1,32], index: 2, kind: input, shape index: {}]
  %s3 = inlined_call_operand.vmem [shape: bf16[32,32], index: 3, kind: input, shape index: {}]
  %s4 = inlined_call_operand.vmem [shape: bf16[32,32], index: 4, kind: output, shape index: {}]
  %s5 = sld [smem:[#allocation0]]
  $region34: #{transformer_forward.12} parent=0
    _
  %s7 = ssub.s32 1, %s5
  %s8 = scalar_select 0, %s7, %s5
  // Predicated region
  $region2: #{transformer_forward.12} parent=0 // pred_check
    _
  $region3: #{transformer_forward.12} parent=0 // pred_check_branch
    %10 = sbr.rel (0) target = $region5
  $region4: #{transformer_forward.12} parent=0 // pred_region
    _
  $region5: #{transformer_forward.12} parent=0 // pred_fallthru
    _
  // Predicated region
  $region6: #{transformer_forward.12} parent=0 // pred_check
    _
  $region7: #{transformer_forward.12} parent=0 // pred_check_branch
    %12 = sbr.rel (0) target = $region9
  $region8: #{transformer_forward.12} parent=0 // pred_region
    _
  $region9: #{transformer_forward.12} parent=0 // pred_fallthru
    _
  // Predicated region
  $region10: #{transformer_forward.12} parent=0 // pred_check
    _
  $region11: #{transformer_forward.12} parent=0 // pred_check_branch
    %14 = sbr.rel (0) target = $region13
  $region12: #{transformer_forward.12} parent=0 // pred_region
    _
  $region13: #{transformer_forward.12} parent=0 // pred_fallthru
    _
  // Predicated region
  $region14: #{transformer_forward.12} parent=0 // pred_check
    _
  $region15: #{transformer_forward.12} parent=0 // pred_check_branch
    %16 = sbr.rel (0) target = $region17
  $region16: #{transformer_forward.12} parent=0 // pred_region
    _
  $region17: #{transformer_forward.12} parent=0 // pred_fallthru
    _
  %p18 = scmp.eq.s32.totalorder 0, 0
  // Predicated region
  $region18: #{transformer_forward.12} parent=0 // pred_check
    %p19 = pneg %p18
  $region19: #{transformer_forward.12} parent=0 // pred_check_branch
    %21 = sbr.rel (%p19) target = $region21
  $region20: #{transformer_forward.12} parent=0 // pred_region
    %vm22 = vcmask 261120
    %23 = vst.msk [vmem:[#allocation2] sm:$0xff] %vm22, 0.0
    %24 = vst.msk [vmem:[#allocation2 + $0x8] sm:$0xff] %vm22, 0.0
    %25 = vst.msk [vmem:[#allocation2 + $0x10] sm:$0xff] %vm22, 0.0
    %26 = vst.msk [vmem:[#allocation2 + $0x18] sm:$0xff] %vm22, 0.0
  $region21: #{transformer_forward.12} parent=0 // pred_fallthru
    _
  %v27 = vld [vmem:[%s0] sm:$0xf]
  %v28 = vld [vmem:[%s0 + $0x4] sm:$0xf]
  %v29 = vld [vmem:[%s0 + $0x8] sm:$0xf]
  %v30 = vld [vmem:[%s0 + $0xc] sm:$0xf]
  %v31 = vld [vmem:[#allocation2] sm:$0xff]
  %v32 = vld [vmem:[#allocation2 + $0x8] sm:$0xff]
  %v33 = vld [vmem:[#allocation2 + $0x10] sm:$0xff]
  %v34 = vld [vmem:[#allocation2 + $0x18] sm:$0xff]
  %v35 = vld [vmem:[%s1] sm:$0x3]
  %v40 = vunpack.c.l.b16 %v27
  %v41 = vunpack.c.l.b16 %v28
  %v42 = vunpack.c.l.b16 %v29
  %v43 = vunpack.c.l.b16 %v30
  %v44 = vpack.c.b16 %v41, %v40
  %v45 = vpack.c.b16 %v43, %v42
  %vm46 = vcmask 31744
  %v48 = vsel %vm46, %v44, 0
  %v51 = vsel %vm46, %v45, 0
  %vm53 = vcmask 1041408
  %v55 = vsel %vm53, %v35, 0
  %57 = vmatprep.subr.bf16.mxu0 0
  %58 = vmatpush1.bf16.msra.mxu0 %v55
  %59 = vmatprep.subr.bf16.mxu0 0
  %60 = vmatpush1.bf16.msra.mxu0 0
  %61 = vmatprep.subr.bf16.mxu0 0
  %62 = vmatpush1.bf16.msra.mxu0 0
  %63 = vmatprep.subr.bf16.mxu0 0
  %64 = vmatpush1.bf16.msra.mxu0 0
  %65 = vmatprep.subr.bf16.mxu0 0
  %66 = vmatpush1.bf16.msra.mxu0 0
  %67 = vmatprep.subr.bf16.mxu0 0
  %68 = vmatpush1.bf16.msra.mxu0 0
  %69 = vmatprep.subr.bf16.mxu0 0
  %70 = vmatpush1.bf16.msra.mxu0 0
  %71 = vmatprep.subr.bf16.mxu0 0
  %72 = vmatpush1.bf16.msra.mxu0 0
  %73 = vmatprep.subr.bf16.mxu0 0
  %74 = vmatpush1.bf16.msra.mxu0 0
  %75 = vmatprep.subr.bf16.mxu0 0
  %76 = vmatpush1.bf16.msra.mxu0 0
  %77 = vmatprep.subr.bf16.mxu0 0
  %78 = vmatpush1.bf16.msra.mxu0 0
  %79 = vmatprep.subr.bf16.mxu0 0
  %80 = vmatpush1.bf16.msra.mxu0 0
  %81 = vmatprep.subr.bf16.mxu0 0
  %82 = vmatpush1.bf16.msra.mxu0 0
  %83 = vmatprep.subr.bf16.mxu0 0
  %84 = vmatpush1.bf16.msra.mxu0 0
  %85 = vmatprep.subr.bf16.mxu0 0
  %86 = vmatpush1.bf16.msra.mxu0 0
  %87 = vmatprep.subr.bf16.mxu0 0
  %88 = vmatpush1.bf16.msra.mxu0 0
  %89 = vmatprep.mubr.bf16.mxu0 0
  %90 = vmatmul.mubr.bf16.gmra.mrb[0].mxu0 %v48
  %v91 = vpop.f32.mrb[0].mxu0
  %v92 = vadd.f32 0.0, %v91
  %v93 = vpop.f32.mrb[0].mxu0
  %v94 = vpop.f32.mrb[0].mxu0
  %v95 = vadd.f32 0.0, %v94
  %v96 = vpop.f32.mrb[0].mxu0
  %97 = vmatprep.mubr.bf16.mxu0 0
  %98 = vmatmul.mubr.bf16.gmra.mrb[0].mxu0 %v51
  %v99 = vpop.f32.mrb[0].mxu0
  %v100 = vadd.f32 0.0, %v99
  %v101 = vpop.f32.mrb[0].mxu0
  %v102 = vpop.f32.mrb[0].mxu0
  %v103 = vadd.f32 0.0, %v102
  %v104 = vpop.f32.mrb[0].mxu0
  %105 = vdwg.mxu0
  %v106 = vadd.f32 %v31, %v92
  %v107 = vadd.f32 %v32, %v95
  %v108 = vadd.f32 %v33, %v100
  %v109 = vadd.f32 %v34, %v103
  %vm110 = vcmask 261120
  %111 = vst.msk [vmem:[#allocation2] sm:$0xff] %vm110, %v106
  %112 = vst.msk [vmem:[#allocation2 + $0x8] sm:$0xff] %vm110, %v107
  %113 = vst.msk [vmem:[#allocation2 + $0x10] sm:$0xff] %vm110, %v108
  %114 = vst.msk [vmem:[#allocation2 + $0x18] sm:$0xff] %vm110, %v109
  // Predicated region
  $region22: #{transformer_forward.12} parent=0 // pred_check
    %p115 = pneg %p18
  $region23: #{transformer_forward.12} parent=0 // pred_check_branch
    %117 = sbr.rel (%p115) target = $region25
  $region24: #{transformer_forward.12} parent=0 // pred_region
    %v118 = vld [vmem:[#allocation2] sm:$0xff]
    %v119 = vld [vmem:[#allocation2 + $0x8] sm:$0xff]
    %v120 = vld [vmem:[#allocation2 + $0x10] sm:$0xff]
    %v121 = vld [vmem:[#allocation2 + $0x18] sm:$0xff]
    %v122 = vld [vmem:[%s2] sm:$0x1]
    %v124 = vlaneseq
    %v125 = vshrl.u32 %v124, 7
    %v126 = vsub.s32 0, %v125
    %v127 = vrot.slane %v122, %v126
    %v129 = vadd.f32 %v118, %v127
    %v130 = vadd.f32 %v119, %v127
    %v131 = vadd.f32 %v120, %v127
    %v132 = vadd.f32 %v121, %v127
    %v133 = vld [vmem:[%s3] sm:$0xf]
    %v134 = vld [vmem:[%s3 + $0x4] sm:$0xf]
    %v135 = vld [vmem:[%s3 + $0x8] sm:$0xf]
    %v136 = vld [vmem:[%s3 + $0xc] sm:$0xf]
    %v137 = vunpack.c.l.bf16 %v133
    %v138 = vunpack.c.l.bf16 %v134
    %v139 = vunpack.c.l.bf16 %v135
    %v140 = vunpack.c.l.bf16 %v136
    %v141 = vadd.f32 %v129, %v137
    %v142 = vadd.f32 %v130, %v138
    %v143 = vadd.f32 %v131, %v139
    %v144 = vadd.f32 %v132, %v140
    %v145 = vpack.c.bf16 %v142, %v141
    %v146 = vpack.c.bf16 %v144, %v143
    %v149 = vunpack.c.l.b16 %v145
    %v150 = vunpack.c.h.b16 %v145
    %v151 = vunpack.c.l.b16 %v146
    %v152 = vunpack.c.h.b16 %v146
    %v153 = vpack.c.b16 %v149, %v149
    %v154 = vpack.c.b16 %v150, %v150
    %v155 = vpack.c.b16 %v151, %v151
    %v156 = vpack.c.b16 %v152, %v152
    %vm161 = vcmask 257024
    %162 = vst.msk [vmem:[%s4] sm:$0xf] %vm161, %v153
    %163 = vst.msk [vmem:[%s4 + $0x4] sm:$0xf] %vm161, %v154
    %164 = vst.msk [vmem:[%s4 + $0x8] sm:$0xf] %vm161, %v155
    %165 = vst.msk [vmem:[%s4 + $0xc] sm:$0xf] %vm161, %v156
  $region25: #{transformer_forward.12} parent=0 // pred_fallthru
    _
  // Predicated region
  $region26: #{transformer_forward.12} parent=0 // pred_check
    _
  $region27: #{transformer_forward.12} parent=0 // pred_check_branch
    %167 = sbr.rel (0) target = $region29
  $region28: #{transformer_forward.12} parent=0 // pred_region
    _
  $region29: #{transformer_forward.12} parent=0 // pred_fallthru
    _
  // Predicated region
  $region30: #{transformer_forward.12} parent=0 // pred_check
    _
  $region31: #{transformer_forward.12} parent=0 // pred_check_branch
    %169 = sbr.rel (0) target = $region33
  $region32: #{transformer_forward.12} parent=0 // pred_region
    _
  $region33: #{transformer_forward.12} parent=0 // pred_fallthru
    _

// kernel: transformer_forward.15
$region0: #{transformer_forward.15}
  #allocation0 [shape = 'u32[]', space=smem, size = 0x4, offset = 0x4, fixed_abs, tag = 'smem constant byte address 0x4 - core index']
  #allocation1 [shape = 'u32[144,128]{1,0:T(1,128)}', space=vmem, size = 0x12000, scoped, tag = 'internal scratch']
  #allocation2 [shape = 'f32[32,32]{1,0:T(8,128)}', space=vmem, size = 0x4000, scoped, tag = 'scratch operand']
  %s0 = inlined_call_operand.vmem [shape: bf16[32,32], index: 0, kind: input, shape index: {}]
  %s1 = inlined_call_operand.vmem [shape: bf16[32,32], index: 1, kind: input, shape index: {}]
  %s2 = inlined_call_operand.vmem [shape: f32[1,32], index: 2, kind: input, shape index: {}]
  %s3 = inlined_call_operand.vmem [shape: bf16[32,32], index: 3, kind: input, shape index: {}]
  %s4 = inlined_call_operand.vmem [shape: bf16[32,32], index: 4, kind: output, shape index: {}]
  %s5 = sld [smem:[#allocation0]]
  $region34: #{transformer_forward.15} parent=0
    _
  %s7 = ssub.s32 1, %s5
  %s8 = scalar_select 0, %s7, %s5
  // Predicated region
  $region2: #{transformer_forward.15} parent=0 // pred_check
    _
  $region3: #{transformer_forward.15} parent=0 // pred_check_branch
    %10 = sbr.rel (0) target = $region5
  $region4: #{transformer_forward.15} parent=0 // pred_region
    _
  $region5: #{transformer_forward.15} parent=0 // pred_fallthru
    _
  // Predicated region
  $region6: #{transformer_forward.15} parent=0 // pred_check
    _
  $region7: #{transformer_forward.15} parent=0 // pred_check_branch
    %12 = sbr.rel (0) target = $region9
  $region8: #{transformer_forward.15} parent=0 // pred_region
    _
  $region9: #{transformer_forward.15} parent=0 // pred_fallthru
    _
  // Predicated region
  $region10: #{transformer_forward.15} parent=0 // pred_check
    _
  $region11: #{transformer_forward.15} parent=0 // pred_check_branch
    %14 = sbr.rel (0) target = $region13
  $region12: #{transformer_forward.15} parent=0 // pred_region
    _
  $region13: #{transformer_forward.15} parent=0 // pred_fallthru
    _
  // Predicated region
  $region14: #{transformer_forward.15} parent=0 // pred_check
    _
  $region15: #{transformer_forward.15} parent=0 // pred_check_branch
    %16 = sbr.rel (0) target = $region17
  $region16: #{transformer_forward.15} parent=0 // pred_region
    _
  $region17: #{transformer_forward.15} parent=0 // pred_fallthru
    _
  %p18 = scmp.eq.s32.totalorder 0, 0
  // Predicated region
  $region18: #{transformer_forward.15} parent=0 // pred_check
    %p19 = pneg %p18
  $region19: #{transformer_forward.15} parent=0 // pred_check_branch
    %21 = sbr.rel (%p19) target = $region21
  $region20: #{transformer_forward.15} parent=0 // pred_region
    %vm22 = vcmask 261120
    %23 = vst.msk [vmem:[#allocation2] sm:$0xff] %vm22, 0.0
    %24 = vst.msk [vmem:[#allocation2 + $0x8] sm:$0xff] %vm22, 0.0
    %25 = vst.msk [vmem:[#allocation2 + $0x10] sm:$0xff] %vm22, 0.0
    %26 = vst.msk [vmem:[#allocation2 + $0x18] sm:$0xff] %vm22, 0.0
  $region21: #{transformer_forward.15} parent=0 // pred_fallthru
    _
  %v27 = vld [vmem:[%s0] sm:$0xf]
  %v28 = vld [vmem:[%s0 + $0x4] sm:$0xf]
  %v29 = vld [vmem:[%s0 + $0x8] sm:$0xf]
  %v30 = vld [vmem:[%s0 + $0xc] sm:$0xf]
  %v31 = vld [vmem:[#allocation2] sm:$0xff]
  %v32 = vld [vmem:[#allocation2 + $0x8] sm:$0xff]
  %v33 = vld [vmem:[#allocation2 + $0x10] sm:$0xff]
  %v34 = vld [vmem:[#allocation2 + $0x18] sm:$0xff]
  %v35 = vld [vmem:[%s1] sm:$0xf]
  %v36 = vld [vmem:[%s1 + $0x4] sm:$0xf]
  %v37 = vld [vmem:[%s1 + $0x8] sm:$0xf]
  %v38 = vld [vmem:[%s1 + $0xc] sm:$0xf]
  %v43 = vunpack.c.l.b16 %v27
  %v44 = vunpack.c.l.b16 %v28
  %v45 = vunpack.c.l.b16 %v29
  %v46 = vunpack.c.l.b16 %v30
  %v47 = vpack.c.b16 %v44, %v43
  %v48 = vpack.c.b16 %v46, %v45
  %v53 = vunpack.c.l.b16 %v35
  %v54 = vunpack.c.l.b16 %v36
  %v55 = vunpack.c.l.b16 %v37
  %v56 = vunpack.c.l.b16 %v38
  %v57 = vpack.c.b16 %v54, %v53
  %v58 = vpack.c.b16 %v56, %v55
  %vm61 = vcmask 261120
  %v63 = vsel %vm61, %v47, 0
  %v66 = vsel %vm61, %v48, 0
  %68 = vmatprep.subr.bf16.mxu0 0
  %69 = vmatpush1.bf16.msra.mxu0 %v57
  %70 = vmatprep.subr.bf16.mxu0 0
  %71 = vmatpush1.bf16.msra.mxu0 %v58
  %72 = vmatprep.subr.bf16.mxu0 0
  %73 = vmatpush1.bf16.msra.mxu0 0
  %74 = vmatprep.subr.bf16.mxu0 0
  %75 = vmatpush1.bf16.msra.mxu0 0
  %76 = vmatprep.subr.bf16.mxu0 0
  %77 = vmatpush1.bf16.msra.mxu0 0
  %78 = vmatprep.subr.bf16.mxu0 0
  %79 = vmatpush1.bf16.msra.mxu0 0
  %80 = vmatprep.subr.bf16.mxu0 0
  %81 = vmatpush1.bf16.msra.mxu0 0
  %82 = vmatprep.subr.bf16.mxu0 0
  %83 = vmatpush1.bf16.msra.mxu0 0
  %84 = vmatprep.subr.bf16.mxu0 0
  %85 = vmatpush1.bf16.msra.mxu0 0
  %86 = vmatprep.subr.bf16.mxu0 0
  %87 = vmatpush1.bf16.msra.mxu0 0
  %88 = vmatprep.subr.bf16.mxu0 0
  %89 = vmatpush1.bf16.msra.mxu0 0
  %90 = vmatprep.subr.bf16.mxu0 0
  %91 = vmatpush1.bf16.msra.mxu0 0
  %92 = vmatprep.subr.bf16.mxu0 0
  %93 = vmatpush1.bf16.msra.mxu0 0
  %94 = vmatprep.subr.bf16.mxu0 0
  %95 = vmatpush1.bf16.msra.mxu0 0
  %96 = vmatprep.subr.bf16.mxu0 0
  %97 = vmatpush1.bf16.msra.mxu0 0
  %98 = vmatprep.subr.bf16.mxu0 0
  %99 = vmatpush1.bf16.msra.mxu0 0
  %100 = vmatprep.mubr.bf16.mxu0 0
  %101 = vmatmul.mubr.bf16.gmra.mrb[0].mxu0 %v63
  %v102 = vpop.f32.mrb[0].mxu0
  %v103 = vadd.f32 0.0, %v102
  %v104 = vpop.f32.mrb[0].mxu0
  %v105 = vpop.f32.mrb[0].mxu0
  %v106 = vadd.f32 0.0, %v105
  %v107 = vpop.f32.mrb[0].mxu0
  %108 = vmatprep.mubr.bf16.mxu0 0
  %109 = vmatmul.mubr.bf16.gmra.mrb[0].mxu0 %v66
  %v110 = vpop.f32.mrb[0].mxu0
  %v111 = vadd.f32 0.0, %v110
  %v112 = vpop.f32.mrb[0].mxu0
  %v113 = vpop.f32.mrb[0].mxu0
  %v114 = vadd.f32 0.0, %v113
  %v115 = vpop.f32.mrb[0].mxu0
  %116 = vdwg.mxu0
  %v117 = vadd.f32 %v31, %v103
  %v118 = vadd.f32 %v32, %v106
  %v119 = vadd.f32 %v33, %v111
  %v120 = vadd.f32 %v34, %v114
  %121 = vst.msk [vmem:[#allocation2] sm:$0xff] %vm61, %v117
  %122 = vst.msk [vmem:[#allocation2 + $0x8] sm:$0xff] %vm61, %v118
  %123 = vst.msk [vmem:[#allocation2 + $0x10] sm:$0xff] %vm61, %v119
  %124 = vst.msk [vmem:[#allocation2 + $0x18] sm:$0xff] %vm61, %v120
  // Predicated region
  $region22: #{transformer_forward.15} parent=0 // pred_check
    %p125 = pneg %p18
  $region23: #{transformer_forward.15} parent=0 // pred_check_branch
    %127 = sbr.rel (%p125) target = $region25
  $region24: #{transformer_forward.15} parent=0 // pred_region
    %v128 = vld [vmem:[#allocation2] sm:$0xff]
    %v129 = vld [vmem:[#allocation2 + $0x8] sm:$0xff]
    %v130 = vld [vmem:[#allocation2 + $0x10] sm:$0xff]
    %v131 = vld [vmem:[#allocation2 + $0x18] sm:$0xff]
    %v132 = vld [vmem:[%s2] sm:$0x1]
    %v134 = vlaneseq
    %v135 = vshrl.u32 %v134, 7
    %v136 = vsub.s32 0, %v135
    %v137 = vrot.slane %v132, %v136
    %v139 = vadd.f32 %v128, %v137
    %v140 = vadd.f32 %v129, %v137
    %v141 = vadd.f32 %v130, %v137
    %v142 = vadd.f32 %v131, %v137
    %v143 = vld [vmem:[%s3] sm:$0xf]
    %v144 = vld [vmem:[%s3 + $0x4] sm:$0xf]
    %v145 = vld [vmem:[%s3 + $0x8] sm:$0xf]
    %v146 = vld [vmem:[%s3 + $0xc] sm:$0xf]
    %v147 = vunpack.c.l.bf16 %v143
    %v148 = vunpack.c.l.bf16 %v144
    %v149 = vunpack.c.l.bf16 %v145
    %v150 = vunpack.c.l.bf16 %v146
    %v151 = vadd.f32 %v139, %v147
    %v152 = vadd.f32 %v140, %v148
    %v153 = vadd.f32 %v141, %v149
    %v154 = vadd.f32 %v142, %v150
    %v155 = vpack.c.bf16 %v152, %v151
    %v156 = vpack.c.bf16 %v154, %v153
    %v159 = vunpack.c.l.b16 %v155
    %v160 = vunpack.c.h.b16 %v155
    %v161 = vunpack.c.l.b16 %v156
    %v162 = vunpack.c.h.b16 %v156
    %v163 = vpack.c.b16 %v159, %v159
    %v164 = vpack.c.b16 %v160, %v160
    %v165 = vpack.c.b16 %v161, %v161
    %v166 = vpack.c.b16 %v162, %v162
    %vm171 = vcmask 257024
    %172 = vst.msk [vmem:[%s4] sm:$0xf] %vm171, %v163
    %173 = vst.msk [vmem:[%s4 + $0x4] sm:$0xf] %vm171, %v164
    %174 = vst.msk [vmem:[%s4 + $0x8] sm:$0xf] %vm171, %v165
    %175 = vst.msk [vmem:[%s4 + $0xc] sm:$0xf] %vm171, %v166
  $region25: #{transformer_forward.15} parent=0 // pred_fallthru
    _
  // Predicated region
  $region26: #{transformer_forward.15} parent=0 // pred_check
    _
  $region27: #{transformer_forward.15} parent=0 // pred_check_branch
    %177 = sbr.rel (0) target = $region29
  $region28: #{transformer_forward.15} parent=0 // pred_region
    _
  $region29: #{transformer_forward.15} parent=0 // pred_fallthru
    _
  // Predicated region
  $region30: #{transformer_forward.15} parent=0 // pred_check
    _
  $region31: #{transformer_forward.15} parent=0 // pred_check_branch
    %179 = sbr.rel (0) target = $region33
  $region32: #{transformer_forward.15} parent=0 // pred_region
    _
  $region33: #{transformer_forward.15} parent=0 // pred_fallthru
    _

// kernel: transformer_forward.13
$region0: #{transformer_forward.13}
  #allocation0 [shape = 'u32[]', space=smem, size = 0x4, offset = 0x4, fixed_abs, tag = 'smem constant byte address 0x4 - core index']
  #allocation1 [shape = 'u32[144,128]{1,0:T(1,128)}', space=vmem, size = 0x12000, scoped, tag = 'internal scratch']
  #allocation2 [shape = 'f32[32,96]{1,0:T(8,128)}', space=vmem, size = 0x4000, scoped, tag = 'scratch operand']
  %s0 = inlined_call_operand.vmem [shape: bf16[32,32], index: 0, kind: input, shape index: {}]
  %s1 = inlined_call_operand.vmem [shape: bf16[32,96], index: 1, kind: input, shape index: {}]
  %s2 = inlined_call_operand.vmem [shape: f32[1,96], index: 2, kind: input, shape index: {}]
  %s3 = inlined_call_operand.vmem [shape: f32[1,32], index: 3, kind: input, shape index: {}]
  %s4 = inlined_call_operand.vmem [shape: f32[1,32], index: 4, kind: input, shape index: {}]
  %s5 = inlined_call_operand.vmem [shape: bf16[32,96], index: 5, kind: output, shape index: {}]
  %s6 = sld [smem:[#allocation0]]
  $region38: #{transformer_forward.13} parent=0
    _
  %s8 = ssub.s32 1, %s6
  %s9 = scalar_select 0, %s8, %s6
  // Predicated region
  $region2: #{transformer_forward.13} parent=0 // pred_check
    _
  $region3: #{transformer_forward.13} parent=0 // pred_check_branch
    %11 = sbr.rel (0) target = $region5
  $region4: #{transformer_forward.13} parent=0 // pred_region
    _
  $region5: #{transformer_forward.13} parent=0 // pred_fallthru
    _
  // Predicated region
  $region6: #{transformer_forward.13} parent=0 // pred_check
    _
  $region7: #{transformer_forward.13} parent=0 // pred_check_branch
    %13 = sbr.rel (0) target = $region9
  $region8: #{transformer_forward.13} parent=0 // pred_region
    _
  $region9: #{transformer_forward.13} parent=0 // pred_fallthru
    _
  // Predicated region
  $region10: #{transformer_forward.13} parent=0 // pred_check
    _
  $region11: #{transformer_forward.13} parent=0 // pred_check_branch
    %15 = sbr.rel (0) target = $region13
  $region12: #{transformer_forward.13} parent=0 // pred_region
    _
  $region13: #{transformer_forward.13} parent=0 // pred_fallthru
    _
  // Predicated region
  $region14: #{transformer_forward.13} parent=0 // pred_check
    _
  $region15: #{transformer_forward.13} parent=0 // pred_check_branch
    %17 = sbr.rel (0) target = $region17
  $region16: #{transformer_forward.13} parent=0 // pred_region
    _
  $region17: #{transformer_forward.13} parent=0 // pred_fallthru
    _
  // Predicated region
  $region18: #{transformer_forward.13} parent=0 // pred_check
    _
  $region19: #{transformer_forward.13} parent=0 // pred_check_branch
    %19 = sbr.rel (0) target = $region21
  $region20: #{transformer_forward.13} parent=0 // pred_region
    _
  $region21: #{transformer_forward.13} parent=0 // pred_fallthru
    _
  %p21 = scmp.eq.s32.totalorder 0, 0
  // Predicated region
  $region22: #{transformer_forward.13} parent=0 // pred_check
    %p22 = pneg %p21
  $region23: #{transformer_forward.13} parent=0 // pred_check_branch
    %24 = sbr.rel (%p22) target = $region25
  $region24: #{transformer_forward.13} parent=0 // pred_region
    %vm25 = vcmask 785408
    %26 = vst.msk [vmem:[#allocation2] sm:$0xff] %vm25, 0.0
    %27 = vst.msk [vmem:[#allocation2 + $0x8] sm:$0xff] %vm25, 0.0
    %28 = vst.msk [vmem:[#allocation2 + $0x10] sm:$0xff] %vm25, 0.0
    %29 = vst.msk [vmem:[#allocation2 + $0x18] sm:$0xff] %vm25, 0.0
  $region25: #{transformer_forward.13} parent=0 // pred_fallthru
    _
  %v30 = vld [vmem:[%s0] sm:$0xf]
  %v31 = vld [vmem:[%s0 + $0x4] sm:$0xf]
  %v32 = vld [vmem:[%s0 + $0x8] sm:$0xf]
  %v33 = vld [vmem:[%s0 + $0xc] sm:$0xf]
  %v34 = vunpack.c.l.bf16 %v30
  %v35 = vunpack.c.l.bf16 %v31
  %v36 = vunpack.c.l.bf16 %v32
  %v37 = vunpack.c.l.bf16 %v33
  %vm38 = vcmask 261120
  %v39 = vsel %vm38, %v34, 0.0
  %40 = vadd.xlane.f32.xlu0 %v39
  %v41 = vpop.xlane.xlu0 %40
  %v42 = vsel %vm38, %v35, 0.0
  %43 = vadd.xlane.f32.xlu0 %v42
  %v44 = vpop.xlane.xlu0 %43
  %v45 = vsel %vm38, %v36, 0.0
  %46 = vadd.xlane.f32.xlu0 %v45
  %v47 = vpop.xlane.xlu0 %46
  %v48 = vsel %vm38, %v37, 0.0
  %49 = vadd.xlane.f32.xlu0 %v48
  %v50 = vpop.xlane.xlu0 %49
  %v51 = vrcp.pop 32.0
  %v52 = vmul.f32 %v41, %v51
  %v53 = vmul.f32 %v44, %v51
  %v54 = vmul.f32 %v47, %v51
  %v55 = vmul.f32 %v50, %v51
  %v56 = vsub.f32 %v34, %v52
  %v57 = vsub.f32 %v35, %v53
  %v58 = vsub.f32 %v36, %v54
  %v59 = vsub.f32 %v37, %v55
  %v60 = vmul.f32 %v56, %v56
  %v61 = vmul.f32 %v57, %v57
  %v62 = vmul.f32 %v58, %v58
  %v63 = vmul.f32 %v59, %v59
  %v64 = vsel %vm38, %v60, 0.0
  %65 = vadd.xlane.f32.xlu0 %v64
  %v66 = vpop.xlane.xlu0 %65
  %v67 = vsel %vm38, %v61, 0.0
  %68 = vadd.xlane.f32.xlu0 %v67
  %v69 = vpop.xlane.xlu0 %68
  %v70 = vsel %vm38, %v62, 0.0
  %71 = vadd.xlane.f32.xlu0 %v70
  %v72 = vpop.xlane.xlu0 %71
  %v73 = vsel %vm38, %v63, 0.0
  %74 = vadd.xlane.f32.xlu0 %v73
  %v75 = vpop.xlane.xlu0 %74
  %v76 = vmul.f32 %v66, %v51
  %v77 = vmul.f32 %v69, %v51
  %v78 = vmul.f32 %v72, %v51
  %v79 = vmul.f32 %v75, %v51
  %v80 = vadd.f32 %v76, 1e-05
  %v81 = vadd.f32 %v77, 1e-05
  %v82 = vadd.f32 %v78, 1e-05
  %v83 = vadd.f32 %v79, 1e-05
  %v84 = vrsqrt.pop %v80
  %v85 = vrsqrt.pop %v81
  %v86 = vrsqrt.pop %v82
  %v87 = vrsqrt.pop %v83
  %v88 = vmul.f32 %v56, %v84
  %v89 = vmul.f32 %v57, %v85
  %v90 = vmul.f32 %v58, %v86
  %v91 = vmul.f32 %v59, %v87
  %v92 = vld [vmem:[%s3] sm:$0x1]
  %v94 = vlaneseq
  %v95 = vshrl.u32 %v94, 7
  %v96 = vsub.s32 0, %v95
  %v97 = vrot.slane %v92, %v96
  %v99 = vmul.f32 %v88, %v97
  %v100 = vmul.f32 %v89, %v97
  %v101 = vmul.f32 %v90, %v97
  %v102 = vmul.f32 %v91, %v97
  %v103 = vld [vmem:[%s4] sm:$0x1]
  %v105 = vlaneseq
  %v106 = vshrl.u32 %v105, 7
  %v107 = vsub.s32 0, %v106
  %v108 = vrot.slane %v103, %v107
  %v110 = vadd.f32 %v99, %v108
  %v111 = vadd.f32 %v100, %v108
  %v112 = vadd.f32 %v101, %v108
  %v113 = vadd.f32 %v102, %v108
  %v114 = vpack.c.bf16 %v111, %v110
  %v115 = vpack.c.bf16 %v113, %v112
  %v116 = vld [vmem:[#allocation2] sm:$0xff]
  %v117 = vld [vmem:[#allocation2 + $0x8] sm:$0xff]
  %v118 = vld [vmem:[#allocation2 + $0x10] sm:$0xff]
  %v119 = vld [vmem:[#allocation2 + $0x18] sm:$0xff]
  %v120 = vld [vmem:[%s1] sm:$0xf]
  %v121 = vld [vmem:[%s1 + $0x4] sm:$0xf]
  %v122 = vld [vmem:[%s1 + $0x8] sm:$0xf]
  %v123 = vld [vmem:[%s1 + $0xc] sm:$0xf]
  %v128 = vunpack.c.l.b16 %v120
  %v129 = vunpack.c.l.b16 %v121
  %v130 = vunpack.c.l.b16 %v122
  %v131 = vunpack.c.l.b16 %v123
  %v132 = vpack.c.b16 %v129, %v128
  %v133 = vpack.c.b16 %v131, %v130
  %v137 = vsel %vm38, %v114, 0
  %v140 = vsel %vm38, %v115, 0
  %142 = vmatprep.subr.bf16.mxu0 0
  %143 = vmatpush1.bf16.msra.mxu0 %v132
  %144 = vmatprep.subr.bf16.mxu0 0
  %145 = vmatpush1.bf16.msra.mxu0 %v133
  %146 = vmatprep.subr.bf16.mxu0 0
  %147 = vmatpush1.bf16.msra.mxu0 0
  %148 = vmatprep.subr.bf16.mxu0 0
  %149 = vmatpush1.bf16.msra.mxu0 0
  %150 = vmatprep.subr.bf16.mxu0 0
  %151 = vmatpush1.bf16.msra.mxu0 0
  %152 = vmatprep.subr.bf16.mxu0 0
  %153 = vmatpush1.bf16.msra.mxu0 0
  %154 = vmatprep.subr.bf16.mxu0 0
  %155 = vmatpush1.bf16.msra.mxu0 0
  %156 = vmatprep.subr.bf16.mxu0 0
  %157 = vmatpush1.bf16.msra.mxu0 0
  %158 = vmatprep.subr.bf16.mxu0 0
  %159 = vmatpush1.bf16.msra.mxu0 0
  %160 = vmatprep.subr.bf16.mxu0 0
  %161 = vmatpush1.bf16.msra.mxu0 0
  %162 = vmatprep.subr.bf16.mxu0 0
  %163 = vmatpush1.bf16.msra.mxu0 0
  %164 = vmatprep.subr.bf16.mxu0 0
  %165 = vmatpush1.bf16.msra.mxu0 0
  %166 = vmatprep.subr.bf16.mxu0 0
  %167 = vmatpush1.bf16.msra.mxu0 0
  %168 = vmatprep.subr.bf16.mxu0 0
  %169 = vmatpush1.bf16.msra.mxu0 0
  %170 = vmatprep.subr.bf16.mxu0 0
  %171 = vmatpush1.bf16.msra.mxu0 0
  %172 = vmatprep.subr.bf16.mxu0 0
  %173 = vmatpush1.bf16.msra.mxu0 0
  %174 = vmatprep.mubr.bf16.mxu0 0
  %175 = vmatmul.mubr.bf16.gmra.mrb[0].mxu0 %v137
  %v176 = vpop.f32.mrb[0].mxu0
  %v177 = vadd.f32 0.0, %v176
  %v178 = vpop.f32.mrb[0].mxu0
  %v179 = vpop.f32.mrb[0].mxu0
  %v180 = vadd.f32 0.0, %v179
  %v181 = vpop.f32.mrb[0].mxu0
  %182 = vmatprep.mubr.bf16.mxu0 0
  %183 = vmatmul.mubr.bf16.gmra.mrb[0].mxu0 %v140
  %v184 = vpop.f32.mrb[0].mxu0
  %v185 = vadd.f32 0.0, %v184
  %v186 = vpop.f32.mrb[0].mxu0
  %v187 = vpop.f32.mrb[0].mxu0
  %v188 = vadd.f32 0.0, %v187
  %v189 = vpop.f32.mrb[0].mxu0
  %190 = vdwg.mxu0
  %v191 = vadd.f32 %v116, %v177
  %v192 = vadd.f32 %v117, %v180
  %v193 = vadd.f32 %v118, %v185
  %v194 = vadd.f32 %v119, %v188
  %vm195 = vcmask 785408
  %196 = vst.msk [vmem:[#allocation2] sm:$0xff] %vm195, %v191
  %197 = vst.msk [vmem:[#allocation2 + $0x8] sm:$0xff] %vm195, %v192
  %198 = vst.msk [vmem:[#allocation2 + $0x10] sm:$0xff] %vm195, %v193
  %199 = vst.msk [vmem:[#allocation2 + $0x18] sm:$0xff] %vm195, %v194
  // Predicated region
  $region26: #{transformer_forward.13} parent=0 // pred_check
    %p200 = pneg %p21
  $region27: #{transformer_forward.13} parent=0 // pred_check_branch
    %202 = sbr.rel (%p200) target = $region29
  $region28: #{transformer_forward.13} parent=0 // pred_region
    %v203 = vld [vmem:[#allocation2] sm:$0xff]
    %v204 = vld [vmem:[#allocation2 + $0x8] sm:$0xff]
    %v205 = vld [vmem:[#allocation2 + $0x10] sm:$0xff]
    %v206 = vld [vmem:[#allocation2 + $0x18] sm:$0xff]
    %v207 = vld [vmem:[%s2] sm:$0x1]
    %v209 = vlaneseq
    %v210 = vshrl.u32 %v209, 7
    %v211 = vsub.s32 0, %v210
    %v212 = vrot.slane %v207, %v211
    %v214 = vadd.f32 %v203, %v212
    %v215 = vadd.f32 %v204, %v212
    %v216 = vadd.f32 %v205, %v212
    %v217 = vadd.f32 %v206, %v212
    %v218 = vpack.c.bf16 %v215, %v214
    %v219 = vpack.c.bf16 %v217, %v216
    %v222 = vunpack.c.l.b16 %v218
    %v223 = vunpack.c.h.b16 %v218
    %v224 = vunpack.c.l.b16 %v219
    %v225 = vunpack.c.h.b16 %v219
    %v226 = vpack.c.b16 %v222, %v222
    %v227 = vpack.c.b16 %v223, %v223
    %v228 = vpack.c.b16 %v224, %v224
    %v229 = vpack.c.b16 %v225, %v225
    %vm234 = vcmask 781312
    %235 = vst.msk [vmem:[%s5] sm:$0xf] %vm234, %v226
    %236 = vst.msk [vmem:[%s5 + $0x4] sm:$0xf] %vm234, %v227
    %237 = vst.msk [vmem:[%s5 + $0x8] sm:$0xf] %vm234, %v228
    %238 = vst.msk [vmem:[%s5 + $0xc] sm:$0xf] %vm234, %v229
  $region29: #{transformer_forward.13} parent=0 // pred_fallthru
    _
  // Predicated region
  $region30: #{transformer_forward.13} parent=0 // pred_check
    _
  $region31: #{transformer_forward.13} parent=0 // pred_check_branch
    %240 = sbr.rel (0) target = $region33
  $region32: #{transformer_forward.13} parent=0 // pred_region
    _
  $region33: #{transformer_forward.13} parent=0 // pred_fallthru
    _
  // Predicated region
  $region34: #{transformer_forward.13} parent=0 // pred_check
    _
  $region35: #{transformer_forward.13} parent=0 // pred_check_branch
    %242 = sbr.rel (0) target = $region37
  $region36: #{transformer_forward.13} parent=0 // pred_region
    _
  $region37: #{transformer_forward.13} parent=0 // pred_fallthru
    _

// kernel: transformer_forward.14
$region0: #{transformer_forward.14}
  #allocation0 [shape = 'u32[]', space=smem, size = 0x4, offset = 0x4, fixed_abs, tag = 'smem constant byte address 0x4 - core index']
  #allocation1 [shape = 'u32[144,128]{1,0:T(1,128)}', space=vmem, size = 0x12000, scoped, tag = 'internal scratch']
  %s0 = inlined_call_operand.vmem [shape: bf16[2,16,96], index: 0, kind: input, shape index: {}]
  %s1 = inlined_call_operand.vmem [shape: bf16[2,16,32], index: 1, kind: output, shape index: {}]
  %s2 = sld [smem:[#allocation0]]
  $region37: #{transformer_forward.14} parent=0
    _
  %s4 = ssub.s32 1, %s2
  %s5 = scalar_select 0, %s4, %s2
  loop: start=0, step=1, limit=4
  $region2: #{transformer_forward.14} parent=0 // loop_pre_header
    _
  $region3: #{transformer_forward.14} parent=0 // loop_header
    %s7 = sphi 0, %s11
    %p8 = scmp.ge.s32.totalorder %s7, 4
    %s17 = sphi 0, %s19
    %s20 = sphi 0, %s17
    %s21 = sphi 0, %s20
    %s37 = sphi 0, %s21
    %s43 = sphi 0, %s45
    %s46 = sphi 0, %s43
    %s47 = sphi 0, %s46
    %s63 = sphi 0, %s47
  $region4: #{transformer_forward.14} parent=0 // loop_header_branch
    %10 = sbr.rel (%p8) target = $region8
  $region5: #{transformer_forward.14} parent=0 // loop_body
    %s12 = ssub.s32 %s7, 1
    %s13 = ssub.s32 %s7, 2
    %s14 = sadd.s32 %s7, 1
    %s15 = ssub.s32 %s7, %s14
    %p16 = scmp.eq.s32.totalorder %s15, 0
    %s18 = sadd.s32 %s17, 1
    %s19 = scalar_select %p16, %s17, %s18
    %p22 = pneg %p16
    %p23 = scmp.eq.s32.totalorder %s7, 1
    %p24 = por %p22, %p23
    %p25 = scmp.ne.s32.totalorder %s17, %s20
    %p26 = scmp.eq.s32.totalorder %s7, 0
    %p27 = por %p25, %p26
    %p28 = scmp.ne.s32.totalorder %s17, %s20
    %p29 = scmp.eq.s32.totalorder %s12, 1
    %p30 = por %p28, %p29
    %p31 = scmp.ne.s32.totalorder %s20, %s21
    %p32 = scmp.eq.s32.totalorder %s12, 0
    %p33 = por %p31, %p32
    %p34 = scmp.ne.s32.totalorder %s20, %s21
    %p35 = scmp.eq.s32.totalorder %s13, 1
    %p36 = por %p34, %p35
    %p38 = scmp.ne.s32.totalorder %s21, %s37
    %p39 = scmp.eq.s32.totalorder %s13, 0
    %p40 = por %p38, %p39
    %s41 = ssub.s32 %s7, %s14
    %p42 = scmp.eq.s32.totalorder %s41, 0
    %s44 = sadd.s32 %s43, 1
    %s45 = scalar_select %p42, %s43, %s44
    %p48 = pneg %p42
    %p49 = scmp.eq.s32.totalorder %s7, 1
    %p50 = por %p48, %p49
    %p51 = scmp.ne.s32.totalorder %s43, %s46
    %p52 = scmp.eq.s32.totalorder %s7, 0
    %p53 = por %p51, %p52
    %p54 = scmp.ne.s32.totalorder %s43, %s46
    %p55 = scmp.eq.s32.totalorder %s12, 1
    %p56 = por %p54, %p55
    %p57 = scmp.ne.s32.totalorder %s46, %s47
    %p58 = scmp.eq.s32.totalorder %s12, 0
    %p59 = por %p57, %p58
    %p60 = scmp.ne.s32.totalorder %s46, %s47
    %p61 = scmp.eq.s32.totalorder %s13, 1
    %p62 = por %p60, %p61
    %p64 = scmp.ne.s32.totalorder %s47, %s63
    %p65 = scmp.eq.s32.totalorder %s13, 0
    %p66 = por %p64, %p65
    %p67 = scmp.le.s32.totalorder 1, %s7
    %p68 = scmp.lt.s32.totalorder %s7, 3
    %p69 = pnand %p67, %p68
    %p70 = pneg %p69
    // Predicated region
    $region9: #{transformer_forward.14} parent=5 // pred_check
      _
    $region10: #{transformer_forward.14} parent=5 // pred_check_branch
      %72 = sbr.rel (%p69) target = $region12
    $region11: #{transformer_forward.14} parent=5 // pred_region
      %s73 = ssub.s32 %s7, 1
    $region12: #{transformer_forward.14} parent=5 // pred_fallthru
      _
    %p74 = scmp.lt.s32.totalorder %s7, 2
    // Predicated region
    $region13: #{transformer_forward.14} parent=5 // pred_check
      %p75 = pneg %p74
    $region14: #{transformer_forward.14} parent=5 // pred_check_branch
      %77 = sbr.rel (%p75) target = $region16
    $region15: #{transformer_forward.14} parent=5 // pred_region
      // Predicated region
      $region17: #{transformer_forward.14} parent=15 // pred_check
        %p78 = pneg %p27
      $region18: #{transformer_forward.14} parent=15 // pred_check_branch
        %80 = sbr.rel (%p78) target = $region20
      $region19: #{transformer_forward.14} parent=15 // pred_region
        %p81 = scmp.lt.s32.totalorder %s7, 1
        %s82 = scalar_select %p81, %s7, 1
        %s83 = smul.addr %s82, 2
        %s84 = smul.addr %s83, 4
        %s85 = scalar_lea.vmem %s0, %s84
      $region20: #{transformer_forward.14} parent=15 // pred_fallthru
        _
    $region16: #{transformer_forward.14} parent=5 // pred_fallthru
      _
    %p86 = scmp.le.s32.totalorder 1, %s7
    %p87 = scmp.lt.s32.totalorder %s7, 3
    %p88 = pnand %p86, %p87
    %p89 = pneg %p88
    // Predicated region
    $region21: #{transformer_forward.14} parent=5 // pred_check
      _
    $region22: #{transformer_forward.14} parent=5 // pred_check_branch
      %91 = sbr.rel (%p88) target = $region24
    $region23: #{transformer_forward.14} parent=5 // pred_region
      %s92 = ssub.s32 %s7, 1
      %p93 = scmp.lt.s32.totalorder %s12, 1
      %s94 = scalar_select %p93, %s12, 1
      %s95 = smul.addr %s94, 2
      %s96 = smul.addr %s95, 4
      %s97 = scalar_lea.vmem %s0, %s96
      %p98 = pneg %p33
      %p99 = pneg %p30
      %p100 = pneg %p59
      %p101 = pneg %p56
      %p102 = scmp.lt.s32.totalorder %s12, 1
      %s103 = scalar_select %p102, %s12, 1
      %s104 = smul.addr %s103, 2
      %s105 = smul.addr %s104, 4
      %s106 = scalar_lea.vmem %s1, %s105
      %p107 = scmp.lt.s32.totalorder %s12, 1
      %s108 = scalar_select %p107, %s12, 1
      %s109 = smul.addr %s108, 2
      %s110 = smul.addr %s109, 4
      %s111 = scalar_lea.vmem %s0, %s110
      %p112 = scmp.lt.s32.totalorder %s12, 1
      %s113 = scalar_select %p112, %s12, 1
      %s114 = smul.addr %s113, 2
      %s115 = smul.addr %s114, 4
      %s116 = scalar_lea.vmem %s1, %s115
      %v119 = vld [vmem:[%s111] sm:$0xf]
      %v120 = vld [vmem:[%s111 + $0x4] sm:$0xf]
      %v121 = vlaneseq
      %v122 = vshrl.u32 %v121, 7
      %v123 = vadd.s32 %v122, 8
      %v124 = vlaneseq
      %v125 = vand.u32 %v124, 127
      %vm126 = vcmp.le.s32.totalorder %v125, %v122
      %vm127 = vcmp.le.s32.totalorder %v125, %v123
      %v128 = vmul.bf16 %v119, 1052065461
      %v129 = vmul.bf16 %v120, 1052065461
      %v132 = vunpack.c.l.b16 %v128
      %v133 = vunpack.c.l.b16 %v129
      %v134 = vpack.c.b16 %v133, %v132
      %v137 = vunpack.c.l.b16 %v119
      %v138 = vunpack.c.l.b16 %v120
      %v139 = vpack.c.b16 %v138, %v137
      %140 = vrot.lane.b32.xlu0 %v139, 96
      %v141 = vpop.permute.xlu0 %140
      %vm142 = vcmask 64512
      %v144 = vsel %vm142, %v134, 0
      %v147 = vsel %vm142, %v141, 0
      %149 = vmatprep.subr.bf16.mxu0 0
      %150 = vmatpush1.bf16.xpose.msra.mxu0 %v147
      %151 = vmatprep.subr.bf16.mxu0 0
      %152 = vmatpush1.bf16.xpose.msra.mxu0 0
      %153 = vmatprep.subr.bf16.mxu0 0
      %154 = vmatpush1.bf16.xpose.msra.mxu0 0
      %155 = vmatprep.subr.bf16.mxu0 0
      %156 = vmatpush1.bf16.xpose.msra.mxu0 0
      %157 = vmatprep.subr.bf16.mxu0 0
      %158 = vmatpush1.bf16.xpose.msra.mxu0 0
      %159 = vmatprep.subr.bf16.mxu0 0
      %160 = vmatpush1.bf16.xpose.msra.mxu0 0
      %161 = vmatprep.subr.bf16.mxu0 0
      %162 = vmatpush1.bf16.xpose.msra.mxu0 0
      %163 = vmatprep.subr.bf16.mxu0 0
      %164 = vmatpush1.bf16.xpose.msra.mxu0 0
      %165 = vmatprep.subr.bf16.mxu0 0
      %166 = vmatpush1.bf16.xpose.msra.mxu0 0
      %167 = vmatprep.subr.bf16.mxu0 0
      %168 = vmatpush1.bf16.xpose.msra.mxu0 0
      %169 = vmatprep.subr.bf16.mxu0 0
      %170 = vmatpush1.bf16.xpose.msra.mxu0 0
      %171 = vmatprep.subr.bf16.mxu0 0
      %172 = vmatpush1.bf16.xpose.msra.mxu0 0
      %173 = vmatprep.subr.bf16.mxu0 0
      %174 = vmatpush1.bf16.xpose.msra.mxu0 0
      %175 = vmatprep.subr.bf16.mxu0 0
      %176 = vmatpush1.bf16.xpose.msra.mxu0 0
      %177 = vmatprep.subr.bf16.mxu0 0
      %178 = vmatpush1.bf16.xpose.msra.mxu0 0
      %179 = vmatprep.subr.bf16.mxu0 0
      %180 = vmatpush1.bf16.xpose.msra.mxu0 0
      %181 = vmatprep.mubr.bf16.mxu0 0
      %182 = vmatmul.mubr.bf16.gmra.mrb[0].mxu0 %v144
      %v183 = vpop.f32.mrb[0].mxu0
      %v184 = vadd.f32 0.0, %v183
      %v185 = vpop.f32.mrb[0].mxu0
      %v186 = vpop.f32.mrb[0].mxu0
      %v187 = vadd.f32 0.0, %v186
      %v188 = vpop.f32.mrb[0].mxu0
      %189 = vdwg.mxu0
      %v190 = vsel %vm126, %v184, -1e+30
      %v191 = vsel %vm127, %v187, -1e+30
      %vm192 = vcmask 130048
      %v193 = vsel %vm192, %v190, -inf
      %194 = vmax.xlane.f32.xlu0 %v193
      %v195 = vpop.xlane.xlu0 %194
      %v196 = vsel %vm192, %v191, -inf
      %197 = vmax.xlane.f32.xlu0 %v196
      %v198 = vpop.xlane.xlu0 %197
      %v199 = vsub.f32 %v190, %v195
      %v200 = vsub.f32 %v191, %v198
      %v201 = vmul.f32 %v199, 1.442695
      %v202 = vpow.pop %v201
      %v203 = vmul.f32 %v200, 1.442695
      %v204 = vpow.pop %v203
      %v205 = vsel %vm192, %v202, 0.0
      %206 = vadd.xlane.f32.xlu0 %v205
      %v207 = vpop.xlane.xlu0 %206
      %v208 = vsel %vm192, %v204, 0.0
      %209 = vadd.xlane.f32.xlu0 %v208
      %v210 = vpop.xlane.xlu0 %209
      %v211 = vrcp.pop %v207
      %v212 = vrcp.pop %v210
      %v213 = vmul.f32 %v202, %v211
      %v214 = vmul.f32 %v204, %v212
      %v215 = vpack.c.bf16 %v214, %v213
      %216 = vrot.lane.b32.xlu0 %v139, 64
      %v217 = vpop.permute.xlu0 %216
      %v220 = vsel %vm192, %v215, 0
      %222 = vmatprep.subr.bf16.mxu0 0
      %223 = vmatpush1.bf16.msra.mxu0 %v217
      %224 = vmatprep.subr.bf16.mxu0 0
      %225 = vmatpush1.bf16.msra.mxu0 0
      %226 = vmatprep.subr.bf16.mxu0 0
      %227 = vmatpush1.bf16.msra.mxu0 0
      %228 = vmatprep.subr.bf16.mxu0 0
      %229 = vmatpush1.bf16.msra.mxu0 0
      %230 = vmatprep.subr.bf16.mxu0 0
      %231 = vmatpush1.bf16.msra.mxu0 0
      %232 = vmatprep.subr.bf16.mxu0 0
      %233 = vmatpush1.bf16.msra.mxu0 0
      %234 = vmatprep.subr.bf16.mxu0 0
      %235 = vmatpush1.bf16.msra.mxu0 0
      %236 = vmatprep.subr.bf16.mxu0 0
      %237 = vmatpush1.bf16.msra.mxu0 0
      %238 = vmatprep.subr.bf16.mxu0 0
      %239 = vmatpush1.bf16.msra.mxu0 0
      %240 = vmatprep.subr.bf16.mxu0 0
      %241 = vmatpush1.bf16.msra.mxu0 0
      %242 = vmatprep.subr.bf16.mxu0 0
      %243 = vmatpush1.bf16.msra.mxu0 0
      %244 = vmatprep.subr.bf16.mxu0 0
      %245 = vmatpush1.bf16.msra.mxu0 0
      %246 = vmatprep.subr.bf16.mxu0 0
      %247 = vmatpush1.bf16.msra.mxu0 0
      %248 = vmatprep.subr.bf16.mxu0 0
      %249 = vmatpush1.bf16.msra.mxu0 0
      %250 = vmatprep.subr.bf16.mxu0 0
      %251 = vmatpush1.bf16.msra.mxu0 0
      %252 = vmatprep.subr.bf16.mxu0 0
      %253 = vmatpush1.bf16.msra.mxu0 0
      %254 = vmatprep.mubr.bf16.mxu0 0
      %255 = vmatmul.mubr.bf16.gmra.mrb[0].mxu0 %v220
      %v256 = vpop.f32.mrb[0].mxu0
      %v257 = vadd.f32 0.0, %v256
      %v258 = vpop.f32.mrb[0].mxu0
      %v259 = vpop.f32.mrb[0].mxu0
      %v260 = vadd.f32 0.0, %v259
      %v261 = vpop.f32.mrb[0].mxu0
      %262 = vdwg.mxu0
      %263 = vrot.lane.b32.xlu0 %v134, 120
      %v264 = vpop.permute.xlu0 %263
      %265 = vrot.lane.b32.xlu0 %v139, 88
      %v266 = vpop.permute.xlu0 %265
      %v268 = vsel %vm142, %v264, 0
      %v271 = vsel %vm142, %v266, 0
      %273 = vmatprep.subr.bf16.mxu0 0
      %274 = vmatpush1.bf16.xpose.msra.mxu0 %v271
      %275 = vmatprep.subr.bf16.mxu0 0
      %276 = vmatpush1.bf16.xpose.msra.mxu0 0
      %277 = vmatprep.subr.bf16.mxu0 0
      %278 = vmatpush1.bf16.xpose.msra.mxu0 0
      %279 = vmatprep.subr.bf16.mxu0 0
      %280 = vmatpush1.bf16.xpose.msra.mxu0 0
      %281 = vmatprep.subr.bf16.mxu0 0
      %282 = vmatpush1.bf16.xpose.msra.mxu0 0
      %283 = vmatprep.subr.bf16.mxu0 0
      %284 = vmatpush1.bf16.xpose.msra.mxu0 0
      %285 = vmatprep.subr.bf16.mxu0 0
      %286 = vmatpush1.bf16.xpose.msra.mxu0 0
      %287 = vmatprep.subr.bf16.mxu0 0
      %288 = vmatpush1.bf16.xpose.msra.mxu0 0
      %289 = vmatprep.subr.bf16.mxu0 0
      %290 = vmatpush1.bf16.xpose.msra.mxu0 0
      %291 = vmatprep.subr.bf16.mxu0 0
      %292 = vmatpush1.bf16.xpose.msra.mxu0 0
      %293 = vmatprep.subr.bf16.mxu0 0
      %294 = vmatpush1.bf16.xpose.msra.mxu0 0
      %295 = vmatprep.subr.bf16.mxu0 0
      %296 = vmatpush1.bf16.xpose.msra.mxu0 0
      %297 = vmatprep.subr.bf16.mxu0 0
      %298 = vmatpush1.bf16.xpose.msra.mxu0 0
      %299 = vmatprep.subr.bf16.mxu0 0
      %300 = vmatpush1.bf16.xpose.msra.mxu0 0
      %301 = vmatprep.subr.bf16.mxu0 0
      %302 = vmatpush1.bf16.xpose.msra.mxu0 0
      %303 = vmatprep.subr.bf16.mxu0 0
      %304 = vmatpush1.bf16.xpose.msra.mxu0 0
      %305 = vmatprep.mubr.bf16.mxu0 0
      %306 = vmatmul.mubr.bf16.gmra.mrb[0].mxu0 %v268
      %v307 = vpop.f32.mrb[0].mxu0
      %v308 = vadd.f32 0.0, %v307
      %v309 = vpop.f32.mrb[0].mxu0
      %v310 = vpop.f32.mrb[0].mxu0
      %v311 = vadd.f32 0.0, %v310
      %v312 = vpop.f32.mrb[0].mxu0
      %313 = vdwg.mxu0
      %v314 = vsel %vm126, %v308, -1e+30
      %v315 = vsel %vm127, %v311, -1e+30
      %v316 = vsel %vm192, %v314, -inf
      %317 = vmax.xlane.f32.xlu0 %v316
      %v318 = vpop.xlane.xlu0 %317
      %v319 = vsel %vm192, %v315, -inf
      %320 = vmax.xlane.f32.xlu0 %v319
      %v321 = vpop.xlane.xlu0 %320
      %v322 = vsub.f32 %v314, %v318
      %v323 = vsub.f32 %v315, %v321
      %v324 = vmul.f32 %v322, 1.442695
      %v325 = vpow.pop %v324
      %v326 = vmul.f32 %v323, 1.442695
      %v327 = vpow.pop %v326
      %v328 = vsel %vm192, %v325, 0.0
      %329 = vadd.xlane.f32.xlu0 %v328
      %v330 = vpop.xlane.xlu0 %329
      %v331 = vsel %vm192, %v327, 0.0
      %332 = vadd.xlane.f32.xlu0 %v331
      %v333 = vpop.xlane.xlu0 %332
      %v334 = vrcp.pop %v330
      %v335 = vrcp.pop %v333
      %v336 = vmul.f32 %v325, %v334
      %v337 = vmul.f32 %v327, %v335
      %v338 = vpack.c.bf16 %v337, %v336
      %339 = vrot.lane.b32.xlu0 %v139, 56
      %v340 = vpop.permute.xlu0 %339
      %v343 = vsel %vm192, %v338, 0
      %345 = vmatprep.subr.bf16.mxu0 0
      %346 = vmatpush1.bf16.msra.mxu0 %v340
      %347 = vmatprep.subr.bf16.mxu0 0
      %348 = vmatpush1.bf16.msra.mxu0 0
      %349 = vmatprep.subr.bf16.mxu0 0
      %350 = vmatpush1.bf16.msra.mxu0 0
      %351 = vmatprep.subr.bf16.mxu0 0
      %352 = vmatpush1.bf16.msra.mxu0 0
      %353 = vmatprep.subr.bf16.mxu0 0
      %354 = vmatpush1.bf16.msra.mxu0 0
      %355 = vmatprep.subr.bf16.mxu0 0
      %356 = vmatpush1.bf16.msra.mxu0 0
      %357 = vmatprep.subr.bf16.mxu0 0
      %358 = vmatpush1.bf16.msra.mxu0 0
      %359 = vmatprep.subr.bf16.mxu0 0
      %360 = vmatpush1.bf16.msra.mxu0 0
      %361 = vmatprep.subr.bf16.mxu0 0
      %362 = vmatpush1.bf16.msra.mxu0 0
      %363 = vmatprep.subr.bf16.mxu0 0
      %364 = vmatpush1.bf16.msra.mxu0 0
      %365 = vmatprep.subr.bf16.mxu0 0
      %366 = vmatpush1.bf16.msra.mxu0 0
      %367 = vmatprep.subr.bf16.mxu0 0
      %368 = vmatpush1.bf16.msra.mxu0 0
      %369 = vmatprep.subr.bf16.mxu0 0
      %370 = vmatpush1.bf16.msra.mxu0 0
      %371 = vmatprep.subr.bf16.mxu0 0
      %372 = vmatpush1.bf16.msra.mxu0 0
      %373 = vmatprep.subr.bf16.mxu0 0
      %374 = vmatpush1.bf16.msra.mxu0 0
      %375 = vmatprep.subr.bf16.mxu0 0
      %376 = vmatpush1.bf16.msra.mxu0 0
      %377 = vmatprep.mubr.bf16.mxu0 0
      %378 = vmatmul.mubr.bf16.gmra.mrb[0].mxu0 %v343
      %v379 = vpop.f32.mrb[0].mxu0
      %v380 = vadd.f32 0.0, %v379
      %v381 = vpop.f32.mrb[0].mxu0
      %v382 = vpop.f32.mrb[0].mxu0
      %v383 = vadd.f32 0.0, %v382
      %v384 = vpop.f32.mrb[0].mxu0
      %385 = vdwg.mxu0
      %386 = vrot.lane.b32.xlu0 %v134, 112
      %v387 = vpop.permute.xlu0 %386
      %388 = vrot.lane.b32.xlu0 %v139, 80
      %v389 = vpop.permute.xlu0 %388
      %v391 = vsel %vm142, %v387, 0
      %v394 = vsel %vm142, %v389, 0
      %396 = vmatprep.subr.bf16.mxu0 0
      %397 = vmatpush1.bf16.xpose.msra.mxu0 %v394
      %398 = vmatprep.subr.bf16.mxu0 0
      %399 = vmatpush1.bf16.xpose.msra.mxu0 0
      %400 = vmatprep.subr.bf16.mxu0 0
      %401 = vmatpush1.bf16.xpose.msra.mxu0 0
      %402 = vmatprep.subr.bf16.mxu0 0
      %403 = vmatpush1.bf16.xpose.msra.mxu0 0
      %404 = vmatprep.subr.bf16.mxu0 0
      %405 = vmatpush1.bf16.xpose.msra.mxu0 0
      %406 = vmatprep.subr.bf16.mxu0 0
      %407 = vmatpush1.bf16.xpose.msra.mxu0 0
      %408 = vmatprep.subr.bf16.mxu0 0
      %409 = vmatpush1.bf16.xpose.msra.mxu0 0
      %410 = vmatprep.subr.bf16.mxu0 0
      %411 = vmatpush1.bf16.xpose.msra.mxu0 0
      %412 = vmatprep.subr.bf16.mxu0 0
      %413 = vmatpush1.bf16.xpose.msra.mxu0 0
      %414 = vmatprep.subr.bf16.mxu0 0
      %415 = vmatpush1.bf16.xpose.msra.mxu0 0
      %416 = vmatprep.subr.bf16.mxu0 0
      %417 = vmatpush1.bf16.xpose.msra.mxu0 0
      %418 = vmatprep.subr.bf16.mxu0 0
      %419 = vmatpush1.bf16.xpose.msra.mxu0 0
      %420 = vmatprep.subr.bf16.mxu0 0
      %421 = vmatpush1.bf16.xpose.msra.mxu0 0
      %422 = vmatprep.subr.bf16.mxu0 0
      %423 = vmatpush1.bf16.xpose.msra.mxu0 0
      %424 = vmatprep.subr.bf16.mxu0 0
      %425 = vmatpush1.bf16.xpose.msra.mxu0 0
      %426 = vmatprep.subr.bf16.mxu0 0
      %427 = vmatpush1.bf16.xpose.msra.mxu0 0
      %428 = vmatprep.mubr.bf16.mxu0 0
      %429 = vmatmul.mubr.bf16.gmra.mrb[0].mxu0 %v391
      %v430 = vpop.f32.mrb[0].mxu0
      %v431 = vadd.f32 0.0, %v430
      %v432 = vpop.f32.mrb[0].mxu0
      %v433 = vpop.f32.mrb[0].mxu0
      %v434 = vadd.f32 0.0, %v433
      %v435 = vpop.f32.mrb[0].mxu0
      %436 = vdwg.mxu0
      %v437 = vsel %vm126, %v431, -1e+30
      %v438 = vsel %vm127, %v434, -1e+30
      %v439 = vsel %vm192, %v437, -inf
      %440 = vmax.xlane.f32.xlu0 %v439
      %v441 = vpop.xlane.xlu0 %440
      %v442 = vsel %vm192, %v438, -inf
      %443 = vmax.xlane.f32.xlu0 %v442
      %v444 = vpop.xlane.xlu0 %443
      %v445 = vsub.f32 %v437, %v441
      %v446 = vsub.f32 %v438, %v444
      %v447 = vmul.f32 %v445, 1.442695
      %v448 = vpow.pop %v447
      %v449 = vmul.f32 %v446, 1.442695
      %v450 = vpow.pop %v449
      %v451 = vsel %vm192, %v448, 0.0
      %452 = vadd.xlane.f32.xlu0 %v451
      %v453 = vpop.xlane.xlu0 %452
      %v454 = vsel %vm192, %v450, 0.0
      %455 = vadd.xlane.f32.xlu0 %v454
      %v456 = vpop.xlane.xlu0 %455
      %v457 = vrcp.pop %v453
      %v458 = vrcp.pop %v456
      %v459 = vmul.f32 %v448, %v457
      %v460 = vmul.f32 %v450, %v458
      %v461 = vpack.c.bf16 %v460, %v459
      %462 = vrot.lane.b32.xlu0 %v139, 48
      %v463 = vpop.permute.xlu0 %462
      %v466 = vsel %vm192, %v461, 0
      %468 = vmatprep.subr.bf16.mxu0 0
      %469 = vmatpush1.bf16.msra.mxu0 %v463
      %470 = vmatprep.subr.bf16.mxu0 0
      %471 = vmatpush1.bf16.msra.mxu0 0
      %472 = vmatprep.subr.bf16.mxu0 0
      %473 = vmatpush1.bf16.msra.mxu0 0
      %474 = vmatprep.subr.bf16.mxu0 0
      %475 = vmatpush1.bf16.msra.mxu0 0
      %476 = vmatprep.subr.bf16.mxu0 0
      %477 = vmatpush1.bf16.msra.mxu0 0
      %478 = vmatprep.subr.bf16.mxu0 0
      %479 = vmatpush1.bf16.msra.mxu0 0
      %480 = vmatprep.subr.bf16.mxu0 0
      %481 = vmatpush1.bf16.msra.mxu0 0
      %482 = vmatprep.subr.bf16.mxu0 0
      %483 = vmatpush1.bf16.msra.mxu0 0
      %484 = vmatprep.subr.bf16.mxu0 0
      %485 = vmatpush1.bf16.msra.mxu0 0
      %486 = vmatprep.subr.bf16.mxu0 0
      %487 = vmatpush1.bf16.msra.mxu0 0
      %488 = vmatprep.subr.bf16.mxu0 0
      %489 = vmatpush1.bf16.msra.mxu0 0
      %490 = vmatprep.subr.bf16.mxu0 0
      %491 = vmatpush1.bf16.msra.mxu0 0
      %492 = vmatprep.subr.bf16.mxu0 0
      %493 = vmatpush1.bf16.msra.mxu0 0
      %494 = vmatprep.subr.bf16.mxu0 0
      %495 = vmatpush1.bf16.msra.mxu0 0
      %496 = vmatprep.subr.bf16.mxu0 0
      %497 = vmatpush1.bf16.msra.mxu0 0
      %498 = vmatprep.subr.bf16.mxu0 0
      %499 = vmatpush1.bf16.msra.mxu0 0
      %500 = vmatprep.mubr.bf16.mxu0 0
      %501 = vmatmul.mubr.bf16.gmra.mrb[0].mxu0 %v466
      %v502 = vpop.f32.mrb[0].mxu0
      %v503 = vadd.f32 0.0, %v502
      %v504 = vpop.f32.mrb[0].mxu0
      %v505 = vpop.f32.mrb[0].mxu0
      %v506 = vadd.f32 0.0, %v505
      %v507 = vpop.f32.mrb[0].mxu0
      %508 = vdwg.mxu0
      %509 = vrot.lane.b32.xlu0 %v134, 104
      %v510 = vpop.permute.xlu0 %509
      %511 = vrot.lane.b32.xlu0 %v139, 72
      %v512 = vpop.permute.xlu0 %511
      %v514 = vsel %vm142, %v510, 0
      %v517 = vsel %vm142, %v512, 0
      %519 = vmatprep.subr.bf16.mxu0 0
      %520 = vmatpush1.bf16.xpose.msra.mxu0 %v517
      %521 = vmatprep.subr.bf16.mxu0 0
      %522 = vmatpush1.bf16.xpose.msra.mxu0 0
      %523 = vmatprep.subr.bf16.mxu0 0
      %524 = vmatpush1.bf16.xpose.msra.mxu0 0
      %525 = vmatprep.subr.bf16.mxu0 0
      %526 = vmatpush1.bf16.xpose.msra.mxu0 0
      %527 = vmatprep.subr.bf16.mxu0 0
      %528 = vmatpush1.bf16.xpose.msra.mxu0 0
      %529 = vmatprep.subr.bf16.mxu0 0
      %530 = vmatpush1.bf16.xpose.msra.mxu0 0
      %531 = vmatprep.subr.bf16.mxu0 0
      %532 = vmatpush1.bf16.xpose.msra.mxu0 0
      %533 = vmatprep.subr.bf16.mxu0 0
      %534 = vmatpush1.bf16.xpose.msra.mxu0 0
      %535 = vmatprep.subr.bf16.mxu0 0
      %536 = vmatpush1.bf16.xpose.msra.mxu0 0
      %537 = vmatprep.subr.bf16.mxu0 0
      %538 = vmatpush1.bf16.xpose.msra.mxu0 0
      %539 = vmatprep.subr.bf16.mxu0 0
      %540 = vmatpush1.bf16.xpose.msra.mxu0 0
      %541 = vmatprep.subr.bf16.mxu0 0
      %542 = vmatpush1.bf16.xpose.msra.mxu0 0
      %543 = vmatprep.subr.bf16.mxu0 0
      %544 = vmatpush1.bf16.xpose.msra.mxu0 0
      %545 = vmatprep.subr.bf16.mxu0 0
      %546 = vmatpush1.bf16.xpose.msra.mxu0 0
      %547 = vmatprep.subr.bf16.mxu0 0
      %548 = vmatpush1.bf16.xpose.msra.mxu0 0
      %549 = vmatprep.subr.bf16.mxu0 0
      %550 = vmatpush1.bf16.xpose.msra.mxu0 0
      %551 = vmatprep.mubr.bf16.mxu0 0
      %552 = vmatmul.mubr.bf16.gmra.mrb[0].mxu0 %v514
      %v553 = vpop.f32.mrb[0].mxu0
      %v554 = vadd.f32 0.0, %v553
      %v555 = vpop.f32.mrb[0].mxu0
      %v556 = vpop.f32.mrb[0].mxu0
      %v557 = vadd.f32 0.0, %v556
      %v558 = vpop.f32.mrb[0].mxu0
      %559 = vdwg.mxu0
      %v560 = vsel %vm126, %v554, -1e+30
      %v561 = vsel %vm127, %v557, -1e+30
      %v562 = vsel %vm192, %v560, -inf
      %563 = vmax.xlane.f32.xlu0 %v562
      %v564 = vpop.xlane.xlu0 %563
      %v565 = vsel %vm192, %v561, -inf
      %566 = vmax.xlane.f32.xlu0 %v565
      %v567 = vpop.xlane.xlu0 %566
      %v568 = vsub.f32 %v560, %v564
      %v569 = vsub.f32 %v561, %v567
      %v570 = vmul.f32 %v568, 1.442695
      %v571 = vpow.pop %v570
      %v572 = vmul.f32 %v569, 1.442695
      %v573 = vpow.pop %v572
      %v574 = vsel %vm192, %v571, 0.0
      %575 = vadd.xlane.f32.xlu0 %v574
      %v576 = vpop.xlane.xlu0 %575
      %v577 = vsel %vm192, %v573, 0.0
      %578 = vadd.xlane.f32.xlu0 %v577
      %v579 = vpop.xlane.xlu0 %578
      %v580 = vrcp.pop %v576
      %v581 = vrcp.pop %v579
      %v582 = vmul.f32 %v571, %v580
      %v583 = vmul.f32 %v573, %v581
      %v584 = vpack.c.bf16 %v583, %v582
      %585 = vrot.lane.b32.xlu0 %v139, 40
      %v586 = vpop.permute.xlu0 %585
      %v589 = vsel %vm192, %v584, 0
      %591 = vmatprep.subr.bf16.mxu0 0
      %592 = vmatpush1.bf16.msra.mxu0 %v586
      %593 = vmatprep.subr.bf16.mxu0 0
      %594 = vmatpush1.bf16.msra.mxu0 0
      %595 = vmatprep.subr.bf16.mxu0 0
      %596 = vmatpush1.bf16.msra.mxu0 0
      %597 = vmatprep.subr.bf16.mxu0 0
      %598 = vmatpush1.bf16.msra.mxu0 0
      %599 = vmatprep.subr.bf16.mxu0 0
      %600 = vmatpush1.bf16.msra.mxu0 0
      %601 = vmatprep.subr.bf16.mxu0 0
      %602 = vmatpush1.bf16.msra.mxu0 0
      %603 = vmatprep.subr.bf16.mxu0 0
      %604 = vmatpush1.bf16.msra.mxu0 0
      %605 = vmatprep.subr.bf16.mxu0 0
      %606 = vmatpush1.bf16.msra.mxu0 0
      %607 = vmatprep.subr.bf16.mxu0 0
      %608 = vmatpush1.bf16.msra.mxu0 0
      %609 = vmatprep.subr.bf16.mxu0 0
      %610 = vmatpush1.bf16.msra.mxu0 0
      %611 = vmatprep.subr.bf16.mxu0 0
      %612 = vmatpush1.bf16.msra.mxu0 0
      %613 = vmatprep.subr.bf16.mxu0 0
      %614 = vmatpush1.bf16.msra.mxu0 0
      %615 = vmatprep.subr.bf16.mxu0 0
      %616 = vmatpush1.bf16.msra.mxu0 0
      %617 = vmatprep.subr.bf16.mxu0 0
      %618 = vmatpush1.bf16.msra.mxu0 0
      %619 = vmatprep.subr.bf16.mxu0 0
      %620 = vmatpush1.bf16.msra.mxu0 0
      %621 = vmatprep.subr.bf16.mxu0 0
      %622 = vmatpush1.bf16.msra.mxu0 0
      %623 = vmatprep.mubr.bf16.mxu0 0
      %624 = vmatmul.mubr.bf16.gmra.mrb[0].mxu0 %v589
      %v625 = vpop.f32.mrb[0].mxu0
      %v626 = vadd.f32 0.0, %v625
      %v627 = vpop.f32.mrb[0].mxu0
      %v628 = vpop.f32.mrb[0].mxu0
      %v629 = vadd.f32 0.0, %v628
      %v630 = vpop.f32.mrb[0].mxu0
      %631 = vdwg.mxu0
      %634 = vrot.lane.b32.xlu0 %v380, 8
      %v635 = vpop.permute.xlu0 %634
      %636 = vrot.lane.b32.xlu0 %v383, 8
      %v637 = vpop.permute.xlu0 %636
      %642 = vrot.lane.b32.xlu0 %v503, 16
      %v643 = vpop.permute.xlu0 %642
      %644 = vrot.lane.b32.xlu0 %v506, 16
      %v645 = vpop.permute.xlu0 %644
      %650 = vrot.lane.b32.xlu0 %v626, 24
      %v651 = vpop.permute.xlu0 %650
      %652 = vrot.lane.b32.xlu0 %v629, 24
      %v653 = vpop.permute.xlu0 %652
      %v656 = vsel %vm142, %v257, %v635
      %v657 = vsel %vm142, %v260, %v637
      %v658 = vsel %vm192, %v656, %v643
      %v659 = vsel %vm192, %v657, %v645
      %vm660 = vcmask 195584
      %v661 = vsel %vm660, %v658, %v651
      %v662 = vsel %vm660, %v659, %v653
      %v663 = vpack.c.bf16 %v662, %v661
      %v665 = vunpack.c.l.b16 %v663
      %v666 = vunpack.c.h.b16 %v663
      %v667 = vpack.c.b16 %v665, %v665
      %v668 = vpack.c.b16 %v666, %v666
      %vm671 = vcmask 257024
      %672 = vst.msk [vmem:[%s116] sm:$0xf] %vm671, %v667
      %673 = vst.msk [vmem:[%s116 + $0x4] sm:$0xf] %vm671, %v668
      %p674 = scmp.lt.s32.totalorder %s12, 1
      %s675 = scalar_select %p674, %s12, 1
      %s676 = smul.addr %s675, 2
      %s677 = smul.addr %s676, 4
      %s678 = scalar_lea.vmem %s1, %s677
      // Predicated region
      $region25: #{transformer_forward.14} parent=23 // pred_check
        %p679 = pneg %p56
      $region26: #{transformer_forward.14} parent=23 // pred_check_branch
        %681 = sbr.rel (%p679) target = $region28
      $region27: #{transformer_forward.14} parent=23 // pred_region
        _
      $region28: #{transformer_forward.14} parent=23 // pred_fallthru
        _
    $region24: #{transformer_forward.14} parent=5 // pred_fallthru
      _
    %p682 = scmp.le.s32.totalorder 2, %s7
    // Predicated region
    $region29: #{transformer_forward.14} parent=5 // pred_check
      %p683 = pneg %p682
    $region30: #{transformer_forward.14} parent=5 // pred_check_branch
      %685 = sbr.rel (%p683) target = $region32
    $region31: #{transformer_forward.14} parent=5 // pred_region
      %s686 = ssub.s32 %s7, 2
      // Predicated region
      $region33: #{transformer_forward.14} parent=31 // pred_check
        %p687 = pneg %p62
      $region34: #{transformer_forward.14} parent=31 // pred_check_branch
        %689 = sbr.rel (%p687) target = $region36
      $region35: #{transformer_forward.14} parent=31 // pred_region
        %p690 = scmp.lt.s32.totalorder %s13, 1
        %s691 = scalar_select %p690, %s13, 1
        %s692 = smul.addr %s691, 2
        %s693 = smul.addr %s692, 4
        %s694 = scalar_lea.vmem %s1, %s693
      $region36: #{transformer_forward.14} parent=31 // pred_fallthru
        _
    $region32: #{transformer_forward.14} parent=5 // pred_fallthru
      _
  $region6: #{transformer_forward.14} parent=0 // loop_footer
    %s11 = sadd.s32 1, %s7
  $region7: #{transformer_forward.14} parent=0 // loop_footer_branch
    %6 = sbr.rel target = $region3
  $region8: #{transformer_forward.14} parent=0 // loop_exit
    _

// kernel: transformer_forward.16
$region0: #{transformer_forward.16}
  #allocation0 [shape = 'u32[]', space=smem, size = 0x4, offset = 0x4, fixed_abs, tag = 'smem constant byte address 0x4 - core index']
  #allocation1 [shape = 'u32[144,128]{1,0:T(1,128)}', space=vmem, size = 0x12000, scoped, tag = 'internal scratch']
  #allocation2 [shape = 'f32[32,128]{1,0:T(8,128)}', space=vmem, size = 0x4000, scoped, tag = 'scratch operand']
  %s0 = inlined_call_operand.vmem [shape: bf16[32,32], index: 0, kind: input, shape index: {}]
  %s1 = inlined_call_operand.vmem [shape: bf16[32,128], index: 1, kind: input, shape index: {}]
  %s2 = inlined_call_operand.vmem [shape: f32[1,128], index: 2, kind: input, shape index: {}]
  %s3 = inlined_call_operand.vmem [shape: f32[1,32], index: 3, kind: input, shape index: {}]
  %s4 = inlined_call_operand.vmem [shape: f32[1,32], index: 4, kind: input, shape index: {}]
  %s5 = inlined_call_operand.vmem [shape: bf16[32,128], index: 5, kind: output, shape index: {}]
  %s6 = sld [smem:[#allocation0]]
  $region38: #{transformer_forward.16} parent=0
    _
  %s8 = ssub.s32 1, %s6
  %s9 = scalar_select 0, %s8, %s6
  // Predicated region
  $region2: #{transformer_forward.16} parent=0 // pred_check
    _
  $region3: #{transformer_forward.16} parent=0 // pred_check_branch
    %11 = sbr.rel (0) target = $region5
  $region4: #{transformer_forward.16} parent=0 // pred_region
    _
  $region5: #{transformer_forward.16} parent=0 // pred_fallthru
    _
  // Predicated region
  $region6: #{transformer_forward.16} parent=0 // pred_check
    _
  $region7: #{transformer_forward.16} parent=0 // pred_check_branch
    %13 = sbr.rel (0) target = $region9
  $region8: #{transformer_forward.16} parent=0 // pred_region
    _
  $region9: #{transformer_forward.16} parent=0 // pred_fallthru
    _
  // Predicated region
  $region10: #{transformer_forward.16} parent=0 // pred_check
    _
  $region11: #{transformer_forward.16} parent=0 // pred_check_branch
    %15 = sbr.rel (0) target = $region13
  $region12: #{transformer_forward.16} parent=0 // pred_region
    _
  $region13: #{transformer_forward.16} parent=0 // pred_fallthru
    _
  // Predicated region
  $region14: #{transformer_forward.16} parent=0 // pred_check
    _
  $region15: #{transformer_forward.16} parent=0 // pred_check_branch
    %17 = sbr.rel (0) target = $region17
  $region16: #{transformer_forward.16} parent=0 // pred_region
    _
  $region17: #{transformer_forward.16} parent=0 // pred_fallthru
    _
  // Predicated region
  $region18: #{transformer_forward.16} parent=0 // pred_check
    _
  $region19: #{transformer_forward.16} parent=0 // pred_check_branch
    %19 = sbr.rel (0) target = $region21
  $region20: #{transformer_forward.16} parent=0 // pred_region
    _
  $region21: #{transformer_forward.16} parent=0 // pred_fallthru
    _
  %p21 = scmp.eq.s32.totalorder 0, 0
  // Predicated region
  $region22: #{transformer_forward.16} parent=0 // pred_check
    %p22 = pneg %p21
  $region23: #{transformer_forward.16} parent=0 // pred_check_branch
    %24 = sbr.rel (%p22) target = $region25
  $region24: #{transformer_forward.16} parent=0 // pred_region
    %25 = vst [vmem:[#allocation2] sm:$0xff] 0.0
    %26 = vst [vmem:[#allocation2 + $0x8] sm:$0xff] 0.0
    %27 = vst [vmem:[#allocation2 + $0x10] sm:$0xff] 0.0
    %28 = vst [vmem:[#allocation2 + $0x18] sm:$0xff] 0.0
  $region25: #{transformer_forward.16} parent=0 // pred_fallthru
    _
  %v29 = vld [vmem:[%s0] sm:$0xf]
  %v30 = vld [vmem:[%s0 + $0x4] sm:$0xf]
  %v31 = vld [vmem:[%s0 + $0x8] sm:$0xf]
  %v32 = vld [vmem:[%s0 + $0xc] sm:$0xf]
  %v33 = vunpack.c.l.bf16 %v29
  %v34 = vunpack.c.l.bf16 %v30
  %v35 = vunpack.c.l.bf16 %v31
  %v36 = vunpack.c.l.bf16 %v32
  %vm37 = vcmask 261120
  %v38 = vsel %vm37, %v33, 0.0
  %39 = vadd.xlane.f32.xlu0 %v38
  %v40 = vpop.xlane.xlu0 %39
  %v41 = vsel %vm37, %v34, 0.0
  %42 = vadd.xlane.f32.xlu0 %v41
  %v43 = vpop.xlane.xlu0 %42
  %v44 = vsel %vm37, %v35, 0.0
  %45 = vadd.xlane.f32.xlu0 %v44
  %v46 = vpop.xlane.xlu0 %45
  %v47 = vsel %vm37, %v36, 0.0
  %48 = vadd.xlane.f32.xlu0 %v47
  %v49 = vpop.xlane.xlu0 %48
  %v50 = vrcp.pop 32.0
  %v51 = vmul.f32 %v40, %v50
  %v52 = vmul.f32 %v43, %v50
  %v53 = vmul.f32 %v46, %v50
  %v54 = vmul.f32 %v49, %v50
  %v55 = vsub.f32 %v33, %v51
  %v56 = vsub.f32 %v34, %v52
  %v57 = vsub.f32 %v35, %v53
  %v58 = vsub.f32 %v36, %v54
  %v59 = vmul.f32 %v55, %v55
  %v60 = vmul.f32 %v56, %v56
  %v61 = vmul.f32 %v57, %v57
  %v62 = vmul.f32 %v58, %v58
  %v63 = vsel %vm37, %v59, 0.0
  %64 = vadd.xlane.f32.xlu0 %v63
  %v65 = vpop.xlane.xlu0 %64
  %v66 = vsel %vm37, %v60, 0.0
  %67 = vadd.xlane.f32.xlu0 %v66
  %v68 = vpop.xlane.xlu0 %67
  %v69 = vsel %vm37, %v61, 0.0
  %70 = vadd.xlane.f32.xlu0 %v69
  %v71 = vpop.xlane.xlu0 %70
  %v72 = vsel %vm37, %v62, 0.0
  %73 = vadd.xlane.f32.xlu0 %v72
  %v74 = vpop.xlane.xlu0 %73
  %v75 = vmul.f32 %v65, %v50
  %v76 = vmul.f32 %v68, %v50
  %v77 = vmul.f32 %v71, %v50
  %v78 = vmul.f32 %v74, %v50
  %v79 = vadd.f32 %v75, 1e-05
  %v80 = vadd.f32 %v76, 1e-05
  %v81 = vadd.f32 %v77, 1e-05
  %v82 = vadd.f32 %v78, 1e-05
  %v83 = vrsqrt.pop %v79
  %v84 = vrsqrt.pop %v80
  %v85 = vrsqrt.pop %v81
  %v86 = vrsqrt.pop %v82
  %v87 = vmul.f32 %v55, %v83
  %v88 = vmul.f32 %v56, %v84
  %v89 = vmul.f32 %v57, %v85
  %v90 = vmul.f32 %v58, %v86
  %v91 = vld [vmem:[%s3] sm:$0x1]
  %v93 = vlaneseq
  %v94 = vshrl.u32 %v93, 7
  %v95 = vsub.s32 0, %v94
  %v96 = vrot.slane %v91, %v95
  %v98 = vmul.f32 %v87, %v96
  %v99 = vmul.f32 %v88, %v96
  %v100 = vmul.f32 %v89, %v96
  %v101 = vmul.f32 %v90, %v96
  %v102 = vld [vmem:[%s4] sm:$0x1]
  %v104 = vlaneseq
  %v105 = vshrl.u32 %v104, 7
  %v106 = vsub.s32 0, %v105
  %v107 = vrot.slane %v102, %v106
  %v109 = vadd.f32 %v98, %v107
  %v110 = vadd.f32 %v99, %v107
  %v111 = vadd.f32 %v100, %v107
  %v112 = vadd.f32 %v101, %v107
  %v113 = vpack.c.bf16 %v110, %v109
  %v114 = vpack.c.bf16 %v112, %v111
  %v115 = vld [vmem:[#allocation2] sm:$0xff]
  %v116 = vld [vmem:[#allocation2 + $0x8] sm:$0xff]
  %v117 = vld [vmem:[#allocation2 + $0x10] sm:$0xff]
  %v118 = vld [vmem:[#allocation2 + $0x18] sm:$0xff]
  %v119 = vld [vmem:[%s1] sm:$0xf]
  %v120 = vld [vmem:[%s1 + $0x4] sm:$0xf]
  %v121 = vld [vmem:[%s1 + $0x8] sm:$0xf]
  %v122 = vld [vmem:[%s1 + $0xc] sm:$0xf]
  %v127 = vunpack.c.l.b16 %v119
  %v128 = vunpack.c.l.b16 %v120
  %v129 = vunpack.c.l.b16 %v121
  %v130 = vunpack.c.l.b16 %v122
  %v131 = vpack.c.b16 %v128, %v127
  %v132 = vpack.c.b16 %v130, %v129
  %v136 = vsel %vm37, %v113, 0
  %v139 = vsel %vm37, %v114, 0
  %141 = vmatprep.subr.bf16.mxu0 0
  %142 = vmatpush1.bf16.msra.mxu0 %v131
  %143 = vmatprep.subr.bf16.mxu0 0
  %144 = vmatpush1.bf16.msra.mxu0 %v132
  %145 = vmatprep.subr.bf16.mxu0 0
  %146 = vmatpush1.bf16.msra.mxu0 0
  %147 = vmatprep.subr.bf16.mxu0 0
  %148 = vmatpush1.bf16.msra.mxu0 0
  %149 = vmatprep.subr.bf16.mxu0 0
  %150 = vmatpush1.bf16.msra.mxu0 0
  %151 = vmatprep.subr.bf16.mxu0 0
  %152 = vmatpush1.bf16.msra.mxu0 0
  %153 = vmatprep.subr.bf16.mxu0 0
  %154 = vmatpush1.bf16.msra.mxu0 0
  %155 = vmatprep.subr.bf16.mxu0 0
  %156 = vmatpush1.bf16.msra.mxu0 0
  %157 = vmatprep.subr.bf16.mxu0 0
  %158 = vmatpush1.bf16.msra.mxu0 0
  %159 = vmatprep.subr.bf16.mxu0 0
  %160 = vmatpush1.bf16.msra.mxu0 0
  %161 = vmatprep.subr.bf16.mxu0 0
  %162 = vmatpush1.bf16.msra.mxu0 0
  %163 = vmatprep.subr.bf16.mxu0 0
  %164 = vmatpush1.bf16.msra.mxu0 0
  %165 = vmatprep.subr.bf16.mxu0 0
  %166 = vmatpush1.bf16.msra.mxu0 0
  %167 = vmatprep.subr.bf16.mxu0 0
  %168 = vmatpush1.bf16.msra.mxu0 0
  %169 = vmatprep.subr.bf16.mxu0 0
  %170 = vmatpush1.bf16.msra.mxu0 0
  %171 = vmatprep.subr.bf16.mxu0 0
  %172 = vmatpush1.bf16.msra.mxu0 0
  %173 = vmatprep.mubr.bf16.mxu0 0
  %174 = vmatmul.mubr.bf16.gmra.mrb[0].mxu0 %v136
  %v175 = vpop.f32.mrb[0].mxu0
  %v176 = vadd.f32 0.0, %v175
  %v177 = vpop.f32.mrb[0].mxu0
  %v178 = vpop.f32.mrb[0].mxu0
  %v179 = vadd.f32 0.0, %v178
  %v180 = vpop.f32.mrb[0].mxu0
  %181 = vmatprep.mubr.bf16.mxu0 0
  %182 = vmatmul.mubr.bf16.gmra.mrb[0].mxu0 %v139
  %v183 = vpop.f32.mrb[0].mxu0
  %v184 = vadd.f32 0.0, %v183
  %v185 = vpop.f32.mrb[0].mxu0
  %v186 = vpop.f32.mrb[0].mxu0
  %v187 = vadd.f32 0.0, %v186
  %v188 = vpop.f32.mrb[0].mxu0
  %189 = vdwg.mxu0
  %v190 = vadd.f32 %v115, %v176
  %v191 = vadd.f32 %v116, %v179
  %v192 = vadd.f32 %v117, %v184
  %v193 = vadd.f32 %v118, %v187
  %194 = vst [vmem:[#allocation2] sm:$0xff] %v190
  %195 = vst [vmem:[#allocation2 + $0x8] sm:$0xff] %v191
  %196 = vst [vmem:[#allocation2 + $0x10] sm:$0xff] %v192
  %197 = vst [vmem:[#allocation2 + $0x18] sm:$0xff] %v193
  // Predicated region
  $region26: #{transformer_forward.16} parent=0 // pred_check
    %p198 = pneg %p21
  $region27: #{transformer_forward.16} parent=0 // pred_check_branch
    %200 = sbr.rel (%p198) target = $region29
  $region28: #{transformer_forward.16} parent=0 // pred_region
    %v201 = vld [vmem:[#allocation2] sm:$0xff]
    %v202 = vld [vmem:[#allocation2 + $0x8] sm:$0xff]
    %v203 = vld [vmem:[#allocation2 + $0x10] sm:$0xff]
    %v204 = vld [vmem:[#allocation2 + $0x18] sm:$0xff]
    %v205 = vld [vmem:[%s2] sm:$0x1]
    %v207 = vlaneseq
    %v208 = vshrl.u32 %v207, 7
    %v209 = vsub.s32 0, %v208
    %v210 = vrot.slane %v205, %v209
    %v212 = vadd.f32 %v201, %v210
    %v213 = vadd.f32 %v202, %v210
    %v214 = vadd.f32 %v203, %v210
    %v215 = vadd.f32 %v204, %v210
    %v216 = vmul.f32 %v212, 0.5
    %v217 = vmul.f32 %v213, 0.5
    %v218 = vmul.f32 %v214, 0.5
    %v219 = vmul.f32 %v215, 0.5
    %v220 = vmul.f32 %v212, 0.044715
    %v221 = vmul.f32 %v213, 0.044715
    %v222 = vmul.f32 %v214, 0.044715
    %v223 = vmul.f32 %v215, 0.044715
    %v224 = vmul.f32 %v220, %v212
    %v225 = vmul.f32 %v221, %v213
    %v226 = vmul.f32 %v222, %v214
    %v227 = vmul.f32 %v223, %v215
    %v228 = vmul.f32 %v224, %v212
    %v229 = vmul.f32 %v225, %v213
    %v230 = vmul.f32 %v226, %v214
    %v231 = vmul.f32 %v227, %v215
    %v232 = vadd.f32 %v212, %v228
    %v233 = vadd.f32 %v213, %v229
    %v234 = vadd.f32 %v214, %v230
    %v235 = vadd.f32 %v215, %v231
    %v236 = vmul.f32 %v232, 0.7978846
    %v237 = vmul.f32 %v233, 0.7978846
    %v238 = vmul.f32 %v234, 0.7978846
    %v239 = vmul.f32 %v235, 0.7978846
    %v240 = vtanh.pop %v236
    %v241 = vtanh.pop %v237
    %v242 = vtanh.pop %v238
    %v243 = vtanh.pop %v239
    %v244 = vadd.f32 %v240, 1.0
    %v245 = vadd.f32 %v241, 1.0
    %v246 = vadd.f32 %v242, 1.0
    %v247 = vadd.f32 %v243, 1.0
    %v248 = vmul.f32 %v216, %v244
    %v249 = vmul.f32 %v217, %v245
    %v250 = vmul.f32 %v218, %v246
    %v251 = vmul.f32 %v219, %v247
    %v252 = vpack.c.bf16 %v249, %v248
    %v253 = vpack.c.bf16 %v251, %v250
    %v256 = vunpack.c.l.b16 %v252
    %v257 = vunpack.c.h.b16 %v252
    %v258 = vunpack.c.l.b16 %v253
    %v259 = vunpack.c.h.b16 %v253
    %v260 = vpack.c.b16 %v256, %v256
    %v261 = vpack.c.b16 %v257, %v257
    %v262 = vpack.c.b16 %v258, %v258
    %v263 = vpack.c.b16 %v259, %v259
    %268 = vst [vmem:[%s5] sm:$0xf] %v260
    %269 = vst [vmem:[%s5 + $0x4] sm:$0xf] %v261
    %270 = vst [vmem:[%s5 + $0x8] sm:$0xf] %v262
    %271 = vst [vmem:[%s5 + $0xc] sm:$0xf] %v263
  $region29: #{transformer_forward.16} parent=0 // pred_fallthru
    _
  // Predicated region
  $region30: #{transformer_forward.16} parent=0 // pred_check
    _
  $region31: #{transformer_forward.16} parent=0 // pred_check_branch
    %273 = sbr.rel (0) target = $region33
  $region32: #{transformer_forward.16} parent=0 // pred_region
    _
  $region33: #{transformer_forward.16} parent=0 // pred_fallthru
    _
  // Predicated region
  $region34: #{transformer_forward.16} parent=0 // pred_check
    _
  $region35: #{transformer_forward.16} parent=0 // pred_check_branch
    %275 = sbr.rel (0) target = $region37
  $region36: #{transformer_forward.16} parent=0 // pred_region
    _
  $region37: #{transformer_forward.16} parent=0 // pred_fallthru
    _

// kernel: transformer_forward.17
$region0: #{transformer_forward.17}
  #allocation0 [shape = 'u32[]', space=smem, size = 0x4, offset = 0x4, fixed_abs, tag = 'smem constant byte address 0x4 - core index']
  #allocation1 [shape = 'u32[144,128]{1,0:T(1,128)}', space=vmem, size = 0x12000, scoped, tag = 'internal scratch']
  #allocation2 [shape = 'f32[32,32]{1,0:T(8,128)}', space=vmem, size = 0x4000, scoped, tag = 'scratch operand']
  %s0 = inlined_call_operand.vmem [shape: bf16[32,128], index: 0, kind: input, shape index: {}]
  %s1 = inlined_call_operand.vmem [shape: bf16[128,32], index: 1, kind: input, shape index: {}]
  %s2 = inlined_call_operand.vmem [shape: f32[1,32], index: 2, kind: input, shape index: {}]
  %s3 = inlined_call_operand.vmem [shape: bf16[32,32], index: 3, kind: input, shape index: {}]
  %s4 = inlined_call_operand.vmem [shape: bf16[32,32], index: 4, kind: output, shape index: {}]
  %s5 = sld [smem:[#allocation0]]
  $region34: #{transformer_forward.17} parent=0
    _
  %s7 = ssub.s32 1, %s5
  %s8 = scalar_select 0, %s7, %s5
  // Predicated region
  $region2: #{transformer_forward.17} parent=0 // pred_check
    _
  $region3: #{transformer_forward.17} parent=0 // pred_check_branch
    %10 = sbr.rel (0) target = $region5
  $region4: #{transformer_forward.17} parent=0 // pred_region
    _
  $region5: #{transformer_forward.17} parent=0 // pred_fallthru
    _
  // Predicated region
  $region6: #{transformer_forward.17} parent=0 // pred_check
    _
  $region7: #{transformer_forward.17} parent=0 // pred_check_branch
    %12 = sbr.rel (0) target = $region9
  $region8: #{transformer_forward.17} parent=0 // pred_region
    _
  $region9: #{transformer_forward.17} parent=0 // pred_fallthru
    _
  // Predicated region
  $region10: #{transformer_forward.17} parent=0 // pred_check
    _
  $region11: #{transformer_forward.17} parent=0 // pred_check_branch
    %14 = sbr.rel (0) target = $region13
  $region12: #{transformer_forward.17} parent=0 // pred_region
    _
  $region13: #{transformer_forward.17} parent=0 // pred_fallthru
    _
  // Predicated region
  $region14: #{transformer_forward.17} parent=0 // pred_check
    _
  $region15: #{transformer_forward.17} parent=0 // pred_check_branch
    %16 = sbr.rel (0) target = $region17
  $region16: #{transformer_forward.17} parent=0 // pred_region
    _
  $region17: #{transformer_forward.17} parent=0 // pred_fallthru
    _
  %p18 = scmp.eq.s32.totalorder 0, 0
  // Predicated region
  $region18: #{transformer_forward.17} parent=0 // pred_check
    %p19 = pneg %p18
  $region19: #{transformer_forward.17} parent=0 // pred_check_branch
    %21 = sbr.rel (%p19) target = $region21
  $region20: #{transformer_forward.17} parent=0 // pred_region
    %vm22 = vcmask 261120
    %23 = vst.msk [vmem:[#allocation2] sm:$0xff] %vm22, 0.0
    %24 = vst.msk [vmem:[#allocation2 + $0x8] sm:$0xff] %vm22, 0.0
    %25 = vst.msk [vmem:[#allocation2 + $0x10] sm:$0xff] %vm22, 0.0
    %26 = vst.msk [vmem:[#allocation2 + $0x18] sm:$0xff] %vm22, 0.0
  $region21: #{transformer_forward.17} parent=0 // pred_fallthru
    _
  %v27 = vld [vmem:[%s0] sm:$0xf]
  %v28 = vld [vmem:[%s0 + $0x4] sm:$0xf]
  %v29 = vld [vmem:[%s0 + $0x8] sm:$0xf]
  %v30 = vld [vmem:[%s0 + $0xc] sm:$0xf]
  %v31 = vld [vmem:[#allocation2] sm:$0xff]
  %v32 = vld [vmem:[#allocation2 + $0x8] sm:$0xff]
  %v33 = vld [vmem:[#allocation2 + $0x10] sm:$0xff]
  %v34 = vld [vmem:[#allocation2 + $0x18] sm:$0xff]
  %v35 = vld [vmem:[%s1] sm:$0xf]
  %v36 = vld [vmem:[%s1 + $0x4] sm:$0xf]
  %v37 = vld [vmem:[%s1 + $0x8] sm:$0xf]
  %v38 = vld [vmem:[%s1 + $0xc] sm:$0xf]
  %v39 = vld [vmem:[%s1 + $0x10] sm:$0xf]
  %v40 = vld [vmem:[%s1 + $0x14] sm:$0xf]
  %v41 = vld [vmem:[%s1 + $0x18] sm:$0xf]
  %v42 = vld [vmem:[%s1 + $0x1c] sm:$0xf]
  %v43 = vld [vmem:[%s1 + $0x20] sm:$0xf]
  %v44 = vld [vmem:[%s1 + $0x24] sm:$0xf]
  %v45 = vld [vmem:[%s1 + $0x28] sm:$0xf]
  %v46 = vld [vmem:[%s1 + $0x2c] sm:$0xf]
  %v47 = vld [vmem:[%s1 + $0x30] sm:$0xf]
  %v48 = vld [vmem:[%s1 + $0x34] sm:$0xf]
  %v49 = vld [vmem:[%s1 + $0x38] sm:$0xf]
  %v50 = vld [vmem:[%s1 + $0x3c] sm:$0xf]
  %v55 = vunpack.c.l.b16 %v27
  %v56 = vunpack.c.l.b16 %v28
  %v57 = vunpack.c.l.b16 %v29
  %v58 = vunpack.c.l.b16 %v30
  %v59 = vpack.c.b16 %v56, %v55
  %v60 = vpack.c.b16 %v58, %v57
  %v79 = vunpack.c.l.b16 %v35
  %v80 = vunpack.c.l.b16 %v36
  %v81 = vunpack.c.l.b16 %v37
  %v82 = vunpack.c.l.b16 %v38
  %v83 = vunpack.c.l.b16 %v39
  %v84 = vunpack.c.l.b16 %v40
  %v85 = vunpack.c.l.b16 %v41
  %v86 = vunpack.c.l.b16 %v42
  %v87 = vunpack.c.l.b16 %v43
  %v88 = vunpack.c.l.b16 %v44
  %v89 = vunpack.c.l.b16 %v45
  %v90 = vunpack.c.l.b16 %v46
  %v91 = vunpack.c.l.b16 %v47
  %v92 = vunpack.c.l.b16 %v48
  %v93 = vunpack.c.l.b16 %v49
  %v94 = vunpack.c.l.b16 %v50
  %v95 = vpack.c.b16 %v80, %v79
  %v96 = vpack.c.b16 %v82, %v81
  %v97 = vpack.c.b16 %v84, %v83
  %v98 = vpack.c.b16 %v86, %v85
  %v99 = vpack.c.b16 %v88, %v87
  %v100 = vpack.c.b16 %v90, %v89
  %v101 = vpack.c.b16 %v92, %v91
  %v102 = vpack.c.b16 %v94, %v93
  %111 = vmatprep.subr.bf16.mxu0 0
  %112 = vmatpush1.bf16.msra.mxu0 %v95
  %113 = vmatprep.subr.bf16.mxu0 0
  %114 = vmatpush1.bf16.msra.mxu0 %v96
  %115 = vmatprep.subr.bf16.mxu0 0
  %116 = vmatpush1.bf16.msra.mxu0 %v97
  %117 = vmatprep.subr.bf16.mxu0 0
  %118 = vmatpush1.bf16.msra.mxu0 %v98
  %119 = vmatprep.subr.bf16.mxu0 0
  %120 = vmatpush1.bf16.msra.mxu0 %v99
  %121 = vmatprep.subr.bf16.mxu0 0
  %122 = vmatpush1.bf16.msra.mxu0 %v100
  %123 = vmatprep.subr.bf16.mxu0 0
  %124 = vmatpush1.bf16.msra.mxu0 %v101
  %125 = vmatprep.subr.bf16.mxu0 0
  %126 = vmatpush1.bf16.msra.mxu0 %v102
  %127 = vmatprep.subr.bf16.mxu0 0
  %128 = vmatpush1.bf16.msra.mxu0 0
  %129 = vmatprep.subr.bf16.mxu0 0
  %130 = vmatpush1.bf16.msra.mxu0 0
  %131 = vmatprep.subr.bf16.mxu0 0
  %132 = vmatpush1.bf16.msra.mxu0 0
  %133 = vmatprep.subr.bf16.mxu0 0
  %134 = vmatpush1.bf16.msra.mxu0 0
  %135 = vmatprep.subr.bf16.mxu0 0
  %136 = vmatpush1.bf16.msra.mxu0 0
  %137 = vmatprep.subr.bf16.mxu0 0
  %138 = vmatpush1.bf16.msra.mxu0 0
  %139 = vmatprep.subr.bf16.mxu0 0
  %140 = vmatpush1.bf16.msra.mxu0 0
  %141 = vmatprep.subr.bf16.mxu0 0
  %142 = vmatpush1.bf16.msra.mxu0 0
  %143 = vmatprep.mubr.bf16.mxu0 0
  %144 = vmatmul.mubr.bf16.gmra.mrb[0].mxu0 %v59
  %v145 = vpop.f32.mrb[0].mxu0
  %v146 = vadd.f32 0.0, %v145
  %v147 = vpop.f32.mrb[0].mxu0
  %v148 = vpop.f32.mrb[0].mxu0
  %v149 = vadd.f32 0.0, %v148
  %v150 = vpop.f32.mrb[0].mxu0
  %151 = vmatprep.mubr.bf16.mxu0 0
  %152 = vmatmul.mubr.bf16.gmra.mrb[0].mxu0 %v60
  %v153 = vpop.f32.mrb[0].mxu0
  %v154 = vadd.f32 0.0, %v153
  %v155 = vpop.f32.mrb[0].mxu0
  %v156 = vpop.f32.mrb[0].mxu0
  %v157 = vadd.f32 0.0, %v156
  %v158 = vpop.f32.mrb[0].mxu0
  %159 = vdwg.mxu0
  %v160 = vadd.f32 %v31, %v146
  %v161 = vadd.f32 %v32, %v149
  %v162 = vadd.f32 %v33, %v154
  %v163 = vadd.f32 %v34, %v157
  %vm164 = vcmask 261120
  %165 = vst.msk [vmem:[#allocation2] sm:$0xff] %vm164, %v160
  %166 = vst.msk [vmem:[#allocation2 + $0x8] sm:$0xff] %vm164, %v161
  %167 = vst.msk [vmem:[#allocation2 + $0x10] sm:$0xff] %vm164, %v162
  %168 = vst.msk [vmem:[#allocation2 + $0x18] sm:$0xff] %vm164, %v163
  // Predicated region
  $region22: #{transformer_forward.17} parent=0 // pred_check
    %p169 = pneg %p18
  $region23: #{transformer_forward.17} parent=0 // pred_check_branch
    %171 = sbr.rel (%p169) target = $region25
  $region24: #{transformer_forward.17} parent=0 // pred_region
    %v172 = vld [vmem:[#allocation2] sm:$0xff]
    %v173 = vld [vmem:[#allocation2 + $0x8] sm:$0xff]
    %v174 = vld [vmem:[#allocation2 + $0x10] sm:$0xff]
    %v175 = vld [vmem:[#allocation2 + $0x18] sm:$0xff]
    %v176 = vld [vmem:[%s2] sm:$0x1]
    %v178 = vlaneseq
    %v179 = vshrl.u32 %v178, 7
    %v180 = vsub.s32 0, %v179
    %v181 = vrot.slane %v176, %v180
    %v183 = vadd.f32 %v172, %v181
    %v184 = vadd.f32 %v173, %v181
    %v185 = vadd.f32 %v174, %v181
    %v186 = vadd.f32 %v175, %v181
    %v187 = vld [vmem:[%s3] sm:$0xf]
    %v188 = vld [vmem:[%s3 + $0x4] sm:$0xf]
    %v189 = vld [vmem:[%s3 + $0x8] sm:$0xf]
    %v190 = vld [vmem:[%s3 + $0xc] sm:$0xf]
    %v191 = vunpack.c.l.bf16 %v187
    %v192 = vunpack.c.l.bf16 %v188
    %v193 = vunpack.c.l.bf16 %v189
    %v194 = vunpack.c.l.bf16 %v190
    %v195 = vadd.f32 %v183, %v191
    %v196 = vadd.f32 %v184, %v192
    %v197 = vadd.f32 %v185, %v193
    %v198 = vadd.f32 %v186, %v194
    %v199 = vpack.c.bf16 %v196, %v195
    %v200 = vpack.c.bf16 %v198, %v197
    %v203 = vunpack.c.l.b16 %v199
    %v204 = vunpack.c.h.b16 %v199
    %v205 = vunpack.c.l.b16 %v200
    %v206 = vunpack.c.h.b16 %v200
    %v207 = vpack.c.b16 %v203, %v203
    %v208 = vpack.c.b16 %v204, %v204
    %v209 = vpack.c.b16 %v205, %v205
    %v210 = vpack.c.b16 %v206, %v206
    %vm215 = vcmask 257024
    %216 = vst.msk [vmem:[%s4] sm:$0xf] %vm215, %v207
    %217 = vst.msk [vmem:[%s4 + $0x4] sm:$0xf] %vm215, %v208
    %218 = vst.msk [vmem:[%s4 + $0x8] sm:$0xf] %vm215, %v209
    %219 = vst.msk [vmem:[%s4 + $0xc] sm:$0xf] %vm215, %v210
  $region25: #{transformer_forward.17} parent=0 // pred_fallthru
    _
  // Predicated region
  $region26: #{transformer_forward.17} parent=0 // pred_check
    _
  $region27: #{transformer_forward.17} parent=0 // pred_check_branch
    %221 = sbr.rel (0) target = $region29
  $region28: #{transformer_forward.17} parent=0 // pred_region
    _
  $region29: #{transformer_forward.17} parent=0 // pred_fallthru
    _
  // Predicated region
  $region30: #{transformer_forward.17} parent=0 // pred_check
    _
  $region31: #{transformer_forward.17} parent=0 // pred_check_branch
    %223 = sbr.rel (0) target = $region33
  $region32: #{transformer_forward.17} parent=0 // pred_region
    _
  $region33: #{transformer_forward.17} parent=0 // pred_fallthru
    _

// kernel: transformer_forward.23
$region0: #{transformer_forward.23}
  #allocation0 [shape = 'u32[]', space=smem, size = 0x4, offset = 0x4, fixed_abs, tag = 'smem constant byte address 0x4 - core index']
  #allocation1 [shape = 'u32[144,128]{1,0:T(1,128)}', space=vmem, size = 0x12000, scoped, tag = 'internal scratch']
  #allocation2 [shape = 'f32[32,1]{1,0:T(8,128)}', space=vmem, size = 0x4000, scoped, tag = 'scratch operand']
  #allocation3 [shape = 'f32[1,1]{1,0:T(1,128)S(1)}', space=vmem, size = 0x200, scoped, tag = 'scoped memory for transformer_forward.23']
  %s0 = inlined_call_operand.vmem [shape: bf16[32,32], index: 0, kind: input, shape index: {}]
  %s1 = inlined_call_operand.vmem [shape: bf16[32,1], index: 1, kind: input, shape index: {}]
  %s2 = inlined_call_operand.<no memory space> [shape: f32[1,1], index: 2, kind: input, shape index: {}]
  %s3 = inlined_call_operand.vmem [shape: f32[1,32], index: 3, kind: input, shape index: {}]
  %s4 = inlined_call_operand.vmem [shape: f32[1,32], index: 4, kind: input, shape index: {}]
  %s5 = inlined_call_operand.vmem [shape: f32[32,1], index: 5, kind: output, shape index: {}]
  %s6 = sld [smem:[#allocation0]]
  $region38: #{transformer_forward.23} parent=0
    _
  %s8 = ssub.s32 1, %s6
  %s9 = scalar_select 0, %s8, %s6
  %v10 = vstv %s2
  %11 = vst [vmem:[#allocation3] sm:$0x1] %v10
  // Predicated region
  $region2: #{transformer_forward.23} parent=0 // pred_check
    _
  $region3: #{transformer_forward.23} parent=0 // pred_check_branch
    %13 = sbr.rel (0) target = $region5
  $region4: #{transformer_forward.23} parent=0 // pred_region
    _
  $region5: #{transformer_forward.23} parent=0 // pred_fallthru
    _
  // Predicated region
  $region6: #{transformer_forward.23} parent=0 // pred_check
    _
  $region7: #{transformer_forward.23} parent=0 // pred_check_branch
    %15 = sbr.rel (0) target = $region9
  $region8: #{transformer_forward.23} parent=0 // pred_region
    _
  $region9: #{transformer_forward.23} parent=0 // pred_fallthru
    _
  // Predicated region
  $region10: #{transformer_forward.23} parent=0 // pred_check
    _
  $region11: #{transformer_forward.23} parent=0 // pred_check_branch
    %17 = sbr.rel (0) target = $region13
  $region12: #{transformer_forward.23} parent=0 // pred_region
    _
  $region13: #{transformer_forward.23} parent=0 // pred_fallthru
    _
  // Predicated region
  $region14: #{transformer_forward.23} parent=0 // pred_check
    _
  $region15: #{transformer_forward.23} parent=0 // pred_check_branch
    %19 = sbr.rel (0) target = $region17
  $region16: #{transformer_forward.23} parent=0 // pred_region
    _
  $region17: #{transformer_forward.23} parent=0 // pred_fallthru
    _
  // Predicated region
  $region18: #{transformer_forward.23} parent=0 // pred_check
    _
  $region19: #{transformer_forward.23} parent=0 // pred_check_branch
    %21 = sbr.rel (0) target = $region21
  $region20: #{transformer_forward.23} parent=0 // pred_region
    _
  $region21: #{transformer_forward.23} parent=0 // pred_fallthru
    _
  %p23 = scmp.eq.s32.totalorder 0, 0
  // Predicated region
  $region22: #{transformer_forward.23} parent=0 // pred_check
    %p24 = pneg %p23
  $region23: #{transformer_forward.23} parent=0 // pred_check_branch
    %26 = sbr.rel (%p24) target = $region25
  $region24: #{transformer_forward.23} parent=0 // pred_region
    %vm27 = vcmask 7168
    %28 = vst.msk [vmem:[#allocation2] sm:$0xff] %vm27, 0.0
    %29 = vst.msk [vmem:[#allocation2 + $0x8] sm:$0xff] %vm27, 0.0
    %30 = vst.msk [vmem:[#allocation2 + $0x10] sm:$0xff] %vm27, 0.0
    %31 = vst.msk [vmem:[#allocation2 + $0x18] sm:$0xff] %vm27, 0.0
  $region25: #{transformer_forward.23} parent=0 // pred_fallthru
    _
  %v32 = vld [vmem:[%s0] sm:$0xf]
  %v33 = vld [vmem:[%s0 + $0x4] sm:$0xf]
  %v34 = vld [vmem:[%s0 + $0x8] sm:$0xf]
  %v35 = vld [vmem:[%s0 + $0xc] sm:$0xf]
  %v36 = vunpack.c.l.bf16 %v32
  %v37 = vunpack.c.l.bf16 %v33
  %v38 = vunpack.c.l.bf16 %v34
  %v39 = vunpack.c.l.bf16 %v35
  %vm40 = vcmask 261120
  %v41 = vsel %vm40, %v36, 0.0
  %42 = vadd.xlane.f32.xlu0 %v41
  %v43 = vpop.xlane.xlu0 %42
  %v44 = vsel %vm40, %v37, 0.0
  %45 = vadd.xlane.f32.xlu0 %v44
  %v46 = vpop.xlane.xlu0 %45
  %v47 = vsel %vm40, %v38, 0.0
  %48 = vadd.xlane.f32.xlu0 %v47
  %v49 = vpop.xlane.xlu0 %48
  %v50 = vsel %vm40, %v39, 0.0
  %51 = vadd.xlane.f32.xlu0 %v50
  %v52 = vpop.xlane.xlu0 %51
  %v53 = vrcp.pop 32.0
  %v54 = vmul.f32 %v43, %v53
  %v55 = vmul.f32 %v46, %v53
  %v56 = vmul.f32 %v49, %v53
  %v57 = vmul.f32 %v52, %v53
  %v58 = vsub.f32 %v36, %v54
  %v59 = vsub.f32 %v37, %v55
  %v60 = vsub.f32 %v38, %v56
  %v61 = vsub.f32 %v39, %v57
  %v62 = vmul.f32 %v58, %v58
  %v63 = vmul.f32 %v59, %v59
  %v64 = vmul.f32 %v60, %v60
  %v65 = vmul.f32 %v61, %v61
  %v66 = vsel %vm40, %v62, 0.0
  %67 = vadd.xlane.f32.xlu0 %v66
  %v68 = vpop.xlane.xlu0 %67
  %v69 = vsel %vm40, %v63, 0.0
  %70 = vadd.xlane.f32.xlu0 %v69
  %v71 = vpop.xlane.xlu0 %70
  %v72 = vsel %vm40, %v64, 0.0
  %73 = vadd.xlane.f32.xlu0 %v72
  %v74 = vpop.xlane.xlu0 %73
  %v75 = vsel %vm40, %v65, 0.0
  %76 = vadd.xlane.f32.xlu0 %v75
  %v77 = vpop.xlane.xlu0 %76
  %v78 = vmul.f32 %v68, %v53
  %v79 = vmul.f32 %v71, %v53
  %v80 = vmul.f32 %v74, %v53
  %v81 = vmul.f32 %v77, %v53
  %v82 = vadd.f32 %v78, 1e-05
  %v83 = vadd.f32 %v79, 1e-05
  %v84 = vadd.f32 %v80, 1e-05
  %v85 = vadd.f32 %v81, 1e-05
  %v86 = vrsqrt.pop %v82
  %v87 = vrsqrt.pop %v83
  %v88 = vrsqrt.pop %v84
  %v89 = vrsqrt.pop %v85
  %v90 = vmul.f32 %v58, %v86
  %v91 = vmul.f32 %v59, %v87
  %v92 = vmul.f32 %v60, %v88
  %v93 = vmul.f32 %v61, %v89
  %v94 = vld [vmem:[%s3] sm:$0x1]
  %v96 = vlaneseq
  %v97 = vshrl.u32 %v96, 7
  %v98 = vsub.s32 0, %v97
  %v99 = vrot.slane %v94, %v98
  %v101 = vmul.f32 %v90, %v99
  %v102 = vmul.f32 %v91, %v99
  %v103 = vmul.f32 %v92, %v99
  %v104 = vmul.f32 %v93, %v99
  %v105 = vld [vmem:[%s4] sm:$0x1]
  %v107 = vlaneseq
  %v108 = vshrl.u32 %v107, 7
  %v109 = vsub.s32 0, %v108
  %v110 = vrot.slane %v105, %v109
  %v112 = vadd.f32 %v101, %v110
  %v113 = vadd.f32 %v102, %v110
  %v114 = vadd.f32 %v103, %v110
  %v115 = vadd.f32 %v104, %v110
  %v116 = vpack.c.bf16 %v113, %v112
  %v117 = vpack.c.bf16 %v115, %v114
  %v118 = vld [vmem:[#allocation2] sm:$0xff]
  %v119 = vld [vmem:[#allocation2 + $0x8] sm:$0xff]
  %v120 = vld [vmem:[#allocation2 + $0x10] sm:$0xff]
  %v121 = vld [vmem:[#allocation2 + $0x18] sm:$0xff]
  %v122 = vld [vmem:[%s1] sm:$0xf]
  %v123 = vld [vmem:[%s1 + $0x4] sm:$0xf]
  %v124 = vld [vmem:[%s1 + $0x8] sm:$0xf]
  %v125 = vld [vmem:[%s1 + $0xc] sm:$0xf]
  %v130 = vunpack.c.l.b16 %v122
  %v131 = vunpack.c.l.b16 %v123
  %v132 = vunpack.c.l.b16 %v124
  %v133 = vunpack.c.l.b16 %v125
  %v134 = vpack.c.b16 %v131, %v130
  %v135 = vpack.c.b16 %v133, %v132
  %v139 = vsel %vm40, %v116, 0
  %v142 = vsel %vm40, %v117, 0
  %144 = vmatprep.subr.bf16.mxu0 0
  %145 = vmatpush1.bf16.msra.mxu0 %v134
  %146 = vmatprep.subr.bf16.mxu0 0
  %147 = vmatpush1.bf16.msra.mxu0 %v135
  %148 = vmatprep.subr.bf16.mxu0 0
  %149 = vmatpush1.bf16.msra.mxu0 0
  %150 = vmatprep.subr.bf16.mxu0 0
  %151 = vmatpush1.bf16.msra.mxu0 0
  %152 = vmatprep.subr.bf16.mxu0 0
  %153 = vmatpush1.bf16.msra.mxu0 0
  %154 = vmatprep.subr.bf16.mxu0 0
  %155 = vmatpush1.bf16.msra.mxu0 0
  %156 = vmatprep.subr.bf16.mxu0 0
  %157 = vmatpush1.bf16.msra.mxu0 0
  %158 = vmatprep.subr.bf16.mxu0 0
  %159 = vmatpush1.bf16.msra.mxu0 0
  %160 = vmatprep.subr.bf16.mxu0 0
  %161 = vmatpush1.bf16.msra.mxu0 0
  %162 = vmatprep.subr.bf16.mxu0 0
  %163 = vmatpush1.bf16.msra.mxu0 0
  %164 = vmatprep.subr.bf16.mxu0 0
  %165 = vmatpush1.bf16.msra.mxu0 0
  %166 = vmatprep.subr.bf16.mxu0 0
  %167 = vmatpush1.bf16.msra.mxu0 0
  %168 = vmatprep.subr.bf16.mxu0 0
  %169 = vmatpush1.bf16.msra.mxu0 0
  %170 = vmatprep.subr.bf16.mxu0 0
  %171 = vmatpush1.bf16.msra.mxu0 0
  %172 = vmatprep.subr.bf16.mxu0 0
  %173 = vmatpush1.bf16.msra.mxu0 0
  %174 = vmatprep.subr.bf16.mxu0 0
  %175 = vmatpush1.bf16.msra.mxu0 0
  %176 = vmatprep.mubr.bf16.mxu0 0
  %177 = vmatmul.mubr.bf16.gmra.mrb[0].mxu0 %v139
  %v178 = vpop.f32.mrb[0].mxu0
  %v179 = vadd.f32 0.0, %v178
  %v180 = vpop.f32.mrb[0].mxu0
  %v181 = vpop.f32.mrb[0].mxu0
  %v182 = vadd.f32 0.0, %v181
  %v183 = vpop.f32.mrb[0].mxu0
  %184 = vmatprep.mubr.bf16.mxu0 0
  %185 = vmatmul.mubr.bf16.gmra.mrb[0].mxu0 %v142
  %v186 = vpop.f32.mrb[0].mxu0
  %v187 = vadd.f32 0.0, %v186
  %v188 = vpop.f32.mrb[0].mxu0
  %v189 = vpop.f32.mrb[0].mxu0
  %v190 = vadd.f32 0.0, %v189
  %v191 = vpop.f32.mrb[0].mxu0
  %192 = vdwg.mxu0
  %v193 = vadd.f32 %v118, %v179
  %v194 = vadd.f32 %v119, %v182
  %v195 = vadd.f32 %v120, %v187
  %v196 = vadd.f32 %v121, %v190
  %vm197 = vcmask 7168
  %198 = vst.msk [vmem:[#allocation2] sm:$0xff] %vm197, %v193
  %199 = vst.msk [vmem:[#allocation2 + $0x8] sm:$0xff] %vm197, %v194
  %200 = vst.msk [vmem:[#allocation2 + $0x10] sm:$0xff] %vm197, %v195
  %201 = vst.msk [vmem:[#allocation2 + $0x18] sm:$0xff] %vm197, %v196
  // Predicated region
  $region26: #{transformer_forward.23} parent=0 // pred_check
    %p202 = pneg %p23
  $region27: #{transformer_forward.23} parent=0 // pred_check_branch
    %204 = sbr.rel (%p202) target = $region29
  $region28: #{transformer_forward.23} parent=0 // pred_region
    %v205 = vld [vmem:[#allocation2] sm:$0xff]
    %v206 = vld [vmem:[#allocation2 + $0x8] sm:$0xff]
    %v207 = vld [vmem:[#allocation2 + $0x10] sm:$0xff]
    %v208 = vld [vmem:[#allocation2 + $0x18] sm:$0xff]
    %v209 = vld [vmem:[#allocation3] sm:$0x1]
    %v211 = vlaneseq
    %v212 = vshrl.u32 %v211, 7
    %v213 = vsub.s32 0, %v212
    %v214 = vrot.slane %v209, %v213
    %v216 = vadd.f32 %v205, %v214
    %v217 = vadd.f32 %v206, %v214
    %v218 = vadd.f32 %v207, %v214
    %v219 = vadd.f32 %v208, %v214
    %220 = vst.msk [vmem:[%s5] sm:$0xff] %vm197, %v216
    %221 = vst.msk [vmem:[%s5 + $0x8] sm:$0xff] %vm197, %v217
    %222 = vst.msk [vmem:[%s5 + $0x10] sm:$0xff] %vm197, %v218
    %223 = vst.msk [vmem:[%s5 + $0x18] sm:$0xff] %vm197, %v219
  $region29: #{transformer_forward.23} parent=0 // pred_fallthru
    _
  // Predicated region
  $region30: #{transformer_forward.23} parent=0 // pred_check
    _
  $region31: #{transformer_forward.23} parent=0 // pred_check_branch
    %225 = sbr.rel (0) target = $region33
  $region32: #{transformer_forward.23} parent=0 // pred_region
    _
  $region33: #{transformer_forward.23} parent=0 // pred_fallthru
    _
  // Predicated region
  $region34: #{transformer_forward.23} parent=0 // pred_check
    _
  $region35: #{transformer_forward.23} parent=0 // pred_check_branch
    %227 = sbr.rel (0) target = $region37
  $region36: #{transformer_forward.23} parent=0 // pred_region
    _
  $region37: #{transformer_forward.23} parent=0 // pred_fallthru
    _

</llo_original>
